<compile_context>
chip_gen: v6e
topology: v6e:2x2x1
jax: 0.10.0
libtpu: 0.0.40
codegen_flags: <defaults>
</compile_context>

<pallas_src>
import jax
import jax.numpy as jnp
from jax.experimental import pallas as pl
from jax.experimental.pallas import tpu as pltpu


# ------------------------------ fused kernel -------------------------------

def _net_kernel(x_ref, w1_ref, b1_ref, w2_ref, b2_ref, s1_ref, s2_ref,
                w1c_ref, b1c_ref, w2p_ref, b2p_ref, w3p_ref, b3p_ref, o_ref):
    f32 = jnp.float32
    x = x_ref[0]          # (1, 1152)  zero-padded flat 32x32 image
    w1 = w1_ref[...]      # (6, 9)     conv1 taps (tap t = 3*i + j)

    # ---- conv1 (1->6, 3x3) + ReLU : h1[c, oh*32+ow] ------------------------
    acc1 = w1[:, 0:1] * x[:, 0:1024]
    for t in range(1, 9):
        s = (t // 3) * 32 + (t % 3)
        acc1 = acc1 + w1[:, t:t + 1] * x[:, s:s + 1024]
    h1 = jnp.maximum(acc1 + b1_ref[...], 0.0)                       # (6, 1024)

    # ---- max-pool 2x2: max of 4 shifts {0,1,32,33}, stride-2 select dot ----
    m1 = jnp.maximum(jnp.maximum(h1[:, 0:991], h1[:, 1:992]),
                     jnp.maximum(h1[:, 32:1023], h1[:, 33:1024]))
    p1 = jnp.dot(m1, s1_ref[...], preferred_element_type=f32)       # (6, 257)

    # ---- conv2 (6->16, 3x3) + ReLU : nine (16,6)@(6,225) MXU dots ----------
    acc2 = jnp.dot(w2_ref[0], p1[:, 0:225], preferred_element_type=f32)
    for t in range(1, 9):
        s = (t // 3) * 15 + (t % 3)
        acc2 = acc2 + jnp.dot(w2_ref[t], p1[:, s:s + 225],
                              preferred_element_type=f32)
    h2 = jnp.maximum(acc2 + b2_ref[...], 0.0)                       # (16, 225)

    # ---- max-pool 2x2 (floor mode on 13x13 -> 6x6) -------------------------
    m2 = jnp.maximum(jnp.maximum(h2[:, 0:209], h2[:, 1:210]),
                     jnp.maximum(h2[:, 15:224], h2[:, 16:225]))
    p2 = jnp.dot(m2, s2_ref[...], preferred_element_type=f32)       # (16, 36)

    # ---- fc1 (NCHW flatten order folded into weight layout) + ReLU ---------
    z1 = jnp.dot(p2[0:1, :], w1c_ref[0], preferred_element_type=f32)
    for c in range(1, 16):
        z1 = z1 + jnp.dot(p2[c:c + 1, :], w1c_ref[c],
                          preferred_element_type=f32)
    z1 = jnp.maximum(z1 + b1c_ref[...], 0.0)                        # (1, 128)

    # ---- fc2 + ReLU, fc3 (widths zero-padded to 128 lanes) -----------------
    z2 = jnp.maximum(jnp.dot(z1, w2p_ref[...], preferred_element_type=f32)
                     + b2p_ref[...], 0.0)
    z3 = jnp.dot(z2, w3p_ref[...], preferred_element_type=f32) + b3p_ref[...]
    o_ref[0] = z3.astype(o_ref.dtype)                               # (1, 128)


# ------------------------------- wrapper ------------------------------------

def net_forward(x, p):
    """x: (B, 1, 32, 32) f32 -> logits (B, 10); matches the PyTorch Net."""
    B = x.shape[0]
    f32 = jnp.float32

    # --- parameter prep (tiny, one-time): reorder/pad so the kernel stays
    #     lane-dense and the NCHW flatten is absorbed into fc1's layout. ----
    w1 = p["conv1_w"].reshape(6, 9).astype(f32)                        # (6, 9)
    b1 = p["conv1_b"].reshape(6, 1).astype(f32)
    w2 = jnp.transpose(p["conv2_w"], (2, 3, 0, 1)).reshape(9, 16, 6)   # (9,16,6)
    b2 = p["conv2_b"].reshape(16, 1).astype(f32)
    w1c = jnp.pad(p["fc1_w"], ((0, 8), (0, 0))).T.reshape(16, 36, 128)
    b1c = jnp.pad(p["fc1_b"], (0, 8)).reshape(1, 128)
    w2p = jnp.pad(p["fc2_w"], ((0, 44), (0, 8))).T                     # (128,128)
    b2p = jnp.pad(p["fc2_b"], (0, 44)).reshape(1, 128)
    w3p = jnp.pad(p["fc3_w"], ((0, 118), (0, 44))).T                   # (128,128)
    b3p = jnp.pad(p["fc3_b"], (0, 118)).reshape(1, 128)

    # 0/1 selection matrices folding the stride-2 pool downsample into a dot.
    r1 = jnp.arange(257)[None, :]
    q1 = jnp.arange(991)[:, None]
    s1 = ((r1 < 225) & (q1 == 2 * (r1 // 15) * 32 + 2 * (r1 % 15))).astype(f32)
    r2 = jnp.arange(36)[None, :]
    q2 = jnp.arange(209)[:, None]
    s2 = (q2 == 2 * (r2 // 6) * 15 + 2 * (r2 % 6)).astype(f32)

    # Flatten the image once (no im2col materialisation), pad lanes to 1152.
    xf = jnp.pad(x.astype(f32).reshape(B, 1, 1024), ((0, 0), (0, 0), (0, 128)))

    def full(a):
        return pl.BlockSpec(a.shape, lambda b: (0,) * a.ndim)

    out = pl.pallas_call(
        _net_kernel,
        out_shape=jax.ShapeDtypeStruct((B, 1, 128), f32),
        grid_spec=pltpu.PrefetchScalarGridSpec(
            num_scalar_prefetch=0,
            grid=(B,),
            in_specs=[
                pl.BlockSpec((1, 1, 1152), lambda b: (b, 0, 0)),     # x
                full(w1), full(b1), full(w2), full(b2),
                full(s1), full(s2),
                full(w1c), full(b1c), full(w2p), full(b2p),
                full(w3p), full(b3p),
            ],
            out_specs=pl.BlockSpec((1, 1, 128), lambda b: (b, 0, 0)),
        ),
        compiler_params=pltpu.CompilerParams(
            dimension_semantics=("parallel",),
            vmem_limit_bytes=32 * 1024 * 1024,
        ),
    )(xf, w1, b1, w2, b2, s1, s2, w1c, b1c, w2p, b2p, w3p, b3p)
    return out[:, 0, :10]


def init_params(key):
    ks = jax.random.split(key, 10)
    f32 = jnp.float32
    return {
        # same shapes as the PyTorch module's parameters
        "conv1_w": 0.1 * jax.random.normal(ks[0], (6, 1, 3, 3), f32),
        "conv1_b": 0.1 * jax.random.normal(ks[1], (6,), f32),
        "conv2_w": 0.1 * jax.random.normal(ks[2], (16, 6, 3, 3), f32),
        "conv2_b": 0.1 * jax.random.normal(ks[3], (16,), f32),
        "fc1_w": 0.05 * jax.random.normal(ks[4], (120, 16 * 6 * 6), f32),
        "fc1_b": 0.05 * jax.random.normal(ks[5], (120,), f32),
        "fc2_w": 0.05 * jax.random.normal(ks[6], (84, 120), f32),
        "fc2_b": 0.05 * jax.random.normal(ks[7], (84,), f32),
        "fc3_w": 0.05 * jax.random.normal(ks[8], (10, 84), f32),
        "fc3_b": 0.05 * jax.random.normal(ks[9], (10,), f32),
    }


if __name__ == "__main__":
    key = jax.random.PRNGKey(0)
    k_x, k_p = jax.random.split(key)

    # forward() implies 32x32 single-channel input (-> 16*6*6 flat features)
    x = jax.random.normal(k_x, (2, 1, 32, 32), jnp.float32)
    params = init_params(k_p)

    out = jax.jit(net_forward)(x, params)
    out = jax.block_until_ready(out)
    assert out.shape == (2, 10), out.shape
    assert out.dtype == jnp.float32
    print("KERNEL_OK")
</pallas_src>

<mosaic_0001>
module attributes {stable_mosaic.version = 11 : i64} {
  func.func @_net_kernel(%arg0: i32, %arg1: memref<1x1x1152xf32, #tpu.memory_space<vmem>>, %arg2: memref<6x9xf32, #tpu.memory_space<vmem>>, %arg3: memref<6x1xf32, #tpu.memory_space<vmem>>, %arg4: memref<9x16x6xf32, #tpu.memory_space<vmem>>, %arg5: memref<16x1xf32, #tpu.memory_space<vmem>>, %arg6: memref<991x257xf32, #tpu.memory_space<vmem>>, %arg7: memref<209x36xf32, #tpu.memory_space<vmem>>, %arg8: memref<16x36x128xf32, #tpu.memory_space<vmem>>, %arg9: memref<1x128xf32, #tpu.memory_space<vmem>>, %arg10: memref<128x128xf32, #tpu.memory_space<vmem>>, %arg11: memref<1x128xf32, #tpu.memory_space<vmem>>, %arg12: memref<128x128xf32, #tpu.memory_space<vmem>>, %arg13: memref<1x128xf32, #tpu.memory_space<vmem>>, %arg14: memref<1x1x128xf32, #tpu.memory_space<vmem>>) attributes {dimension_semantics = [#tpu.dimension_semantics<parallel>], iteration_bounds = array<i64: 2>, scalar_prefetch = 0 : i64, scratch_operands = 0 : i64, tpu.core_type = #tpu.core_type<tc>, window_params = [{transform_indices = @transform_0, window_bounds = array<i64: 1, 1, 1152>}, {pipeline_mode = #tpu.pipeline_mode<synchronous>, transform_indices = @transform_1, window_bounds = array<i64: 6, 9>}, {pipeline_mode = #tpu.pipeline_mode<synchronous>, transform_indices = @transform_2, window_bounds = array<i64: 6, 1>}, {pipeline_mode = #tpu.pipeline_mode<synchronous>, transform_indices = @transform_3, window_bounds = array<i64: 9, 16, 6>}, {pipeline_mode = #tpu.pipeline_mode<synchronous>, transform_indices = @transform_4, window_bounds = array<i64: 16, 1>}, {pipeline_mode = #tpu.pipeline_mode<synchronous>, transform_indices = @transform_5, window_bounds = array<i64: 991, 257>}, {pipeline_mode = #tpu.pipeline_mode<synchronous>, transform_indices = @transform_6, window_bounds = array<i64: 209, 36>}, {pipeline_mode = #tpu.pipeline_mode<synchronous>, transform_indices = @transform_7, window_bounds = array<i64: 16, 36, 128>}, {pipeline_mode = #tpu.pipeline_mode<synchronous>, transform_indices = @transform_8, window_bounds = array<i64: 1, 128>}, {pipeline_mode = #tpu.pipeline_mode<synchronous>, transform_indices = @transform_9, window_bounds = array<i64: 128, 128>}, {pipeline_mode = #tpu.pipeline_mode<synchronous>, transform_indices = @transform_10, window_bounds = array<i64: 1, 128>}, {pipeline_mode = #tpu.pipeline_mode<synchronous>, transform_indices = @transform_11, window_bounds = array<i64: 128, 128>}, {pipeline_mode = #tpu.pipeline_mode<synchronous>, transform_indices = @transform_12, window_bounds = array<i64: 1, 128>}, {transform_indices = @transform_13, window_bounds = array<i64: 1, 1, 128>}]} {
    %c0 = arith.constant 0 : index
    %c0_0 = arith.constant 0 : index
    %c0_1 = arith.constant 0 : index
    %0 = vector.load %arg1[%c0, %c0_0, %c0_1] : memref<1x1x1152xf32, #tpu.memory_space<vmem>>, vector<1x1x1152xf32>
    %1 = vector.shape_cast %0 : vector<1x1x1152xf32> to vector<1x1152xf32>
    %c0_2 = arith.constant 0 : index
    %c0_3 = arith.constant 0 : index
    %2 = vector.load %arg2[%c0_2, %c0_3] : memref<6x9xf32, #tpu.memory_space<vmem>>, vector<6x9xf32>
    %3 = vector.extract_strided_slice %2 {offsets = [0, 0], sizes = [6, 1], strides = [1, 1]} : vector<6x9xf32> to vector<6x1xf32>
    %4 = vector.extract_strided_slice %1 {offsets = [0, 0], sizes = [1, 1024], strides = [1, 1]} : vector<1x1152xf32> to vector<1x1024xf32>
    %5 = vector.broadcast %3 : vector<6x1xf32> to vector<6x1024xf32>
    %6 = vector.broadcast %4 : vector<1x1024xf32> to vector<6x1024xf32>
    %7 = arith.mulf %5, %6 : vector<6x1024xf32>
    %8 = vector.extract_strided_slice %2 {offsets = [0, 1], sizes = [6, 1], strides = [1, 1]} : vector<6x9xf32> to vector<6x1xf32>
    %9 = vector.extract_strided_slice %1 {offsets = [0, 1], sizes = [1, 1024], strides = [1, 1]} : vector<1x1152xf32> to vector<1x1024xf32>
    %10 = vector.broadcast %8 : vector<6x1xf32> to vector<6x1024xf32>
    %11 = vector.broadcast %9 : vector<1x1024xf32> to vector<6x1024xf32>
    %12 = arith.mulf %10, %11 : vector<6x1024xf32>
    %13 = arith.addf %7, %12 : vector<6x1024xf32>
    %14 = vector.extract_strided_slice %2 {offsets = [0, 2], sizes = [6, 1], strides = [1, 1]} : vector<6x9xf32> to vector<6x1xf32>
    %15 = vector.extract_strided_slice %1 {offsets = [0, 2], sizes = [1, 1024], strides = [1, 1]} : vector<1x1152xf32> to vector<1x1024xf32>
    %16 = vector.broadcast %14 : vector<6x1xf32> to vector<6x1024xf32>
    %17 = vector.broadcast %15 : vector<1x1024xf32> to vector<6x1024xf32>
    %18 = arith.mulf %16, %17 : vector<6x1024xf32>
    %19 = arith.addf %13, %18 : vector<6x1024xf32>
    %20 = vector.extract_strided_slice %2 {offsets = [0, 3], sizes = [6, 1], strides = [1, 1]} : vector<6x9xf32> to vector<6x1xf32>
    %21 = vector.extract_strided_slice %1 {offsets = [0, 32], sizes = [1, 1024], strides = [1, 1]} : vector<1x1152xf32> to vector<1x1024xf32>
    %22 = vector.broadcast %20 : vector<6x1xf32> to vector<6x1024xf32>
    %23 = vector.broadcast %21 : vector<1x1024xf32> to vector<6x1024xf32>
    %24 = arith.mulf %22, %23 : vector<6x1024xf32>
    %25 = arith.addf %19, %24 : vector<6x1024xf32>
    %26 = vector.extract_strided_slice %2 {offsets = [0, 4], sizes = [6, 1], strides = [1, 1]} : vector<6x9xf32> to vector<6x1xf32>
    %27 = vector.extract_strided_slice %1 {offsets = [0, 33], sizes = [1, 1024], strides = [1, 1]} : vector<1x1152xf32> to vector<1x1024xf32>
    %28 = vector.broadcast %26 : vector<6x1xf32> to vector<6x1024xf32>
    %29 = vector.broadcast %27 : vector<1x1024xf32> to vector<6x1024xf32>
    %30 = arith.mulf %28, %29 : vector<6x1024xf32>
    %31 = arith.addf %25, %30 : vector<6x1024xf32>
    %32 = vector.extract_strided_slice %2 {offsets = [0, 5], sizes = [6, 1], strides = [1, 1]} : vector<6x9xf32> to vector<6x1xf32>
    %33 = vector.extract_strided_slice %1 {offsets = [0, 34], sizes = [1, 1024], strides = [1, 1]} : vector<1x1152xf32> to vector<1x1024xf32>
    %34 = vector.broadcast %32 : vector<6x1xf32> to vector<6x1024xf32>
    %35 = vector.broadcast %33 : vector<1x1024xf32> to vector<6x1024xf32>
    %36 = arith.mulf %34, %35 : vector<6x1024xf32>
    %37 = arith.addf %31, %36 : vector<6x1024xf32>
    %38 = vector.extract_strided_slice %2 {offsets = [0, 6], sizes = [6, 1], strides = [1, 1]} : vector<6x9xf32> to vector<6x1xf32>
    %39 = vector.extract_strided_slice %1 {offsets = [0, 64], sizes = [1, 1024], strides = [1, 1]} : vector<1x1152xf32> to vector<1x1024xf32>
    %40 = vector.broadcast %38 : vector<6x1xf32> to vector<6x1024xf32>
    %41 = vector.broadcast %39 : vector<1x1024xf32> to vector<6x1024xf32>
    %42 = arith.mulf %40, %41 : vector<6x1024xf32>
    %43 = arith.addf %37, %42 : vector<6x1024xf32>
    %44 = vector.extract_strided_slice %2 {offsets = [0, 7], sizes = [6, 1], strides = [1, 1]} : vector<6x9xf32> to vector<6x1xf32>
    %45 = vector.extract_strided_slice %1 {offsets = [0, 65], sizes = [1, 1024], strides = [1, 1]} : vector<1x1152xf32> to vector<1x1024xf32>
    %46 = vector.broadcast %44 : vector<6x1xf32> to vector<6x1024xf32>
    %47 = vector.broadcast %45 : vector<1x1024xf32> to vector<6x1024xf32>
    %48 = arith.mulf %46, %47 : vector<6x1024xf32>
    %49 = arith.addf %43, %48 : vector<6x1024xf32>
    %50 = vector.extract_strided_slice %2 {offsets = [0, 8], sizes = [6, 1], strides = [1, 1]} : vector<6x9xf32> to vector<6x1xf32>
    %51 = vector.extract_strided_slice %1 {offsets = [0, 66], sizes = [1, 1024], strides = [1, 1]} : vector<1x1152xf32> to vector<1x1024xf32>
    %52 = vector.broadcast %50 : vector<6x1xf32> to vector<6x1024xf32>
    %53 = vector.broadcast %51 : vector<1x1024xf32> to vector<6x1024xf32>
    %54 = arith.mulf %52, %53 : vector<6x1024xf32>
    %55 = arith.addf %49, %54 : vector<6x1024xf32>
    %c0_4 = arith.constant 0 : index
    %c0_5 = arith.constant 0 : index
    %56 = vector.load %arg3[%c0_4, %c0_5] : memref<6x1xf32, #tpu.memory_space<vmem>>, vector<6x1xf32>
    %57 = vector.broadcast %56 : vector<6x1xf32> to vector<6x1024xf32>
    %58 = arith.addf %55, %57 : vector<6x1024xf32>
    %cst = arith.constant 0.000000e+00 : f32
    %59 = vector.broadcast %cst : f32 to vector<6x1024xf32>
    %60 = arith.maximumf %58, %59 : vector<6x1024xf32>
    %61 = vector.extract_strided_slice %60 {offsets = [0, 0], sizes = [6, 991], strides = [1, 1]} : vector<6x1024xf32> to vector<6x991xf32>
    %62 = vector.extract_strided_slice %60 {offsets = [0, 1], sizes = [6, 991], strides = [1, 1]} : vector<6x1024xf32> to vector<6x991xf32>
    %63 = arith.maximumf %61, %62 : vector<6x991xf32>
    %64 = vector.extract_strided_slice %60 {offsets = [0, 32], sizes = [6, 991], strides = [1, 1]} : vector<6x1024xf32> to vector<6x991xf32>
    %65 = vector.extract_strided_slice %60 {offsets = [0, 33], sizes = [6, 991], strides = [1, 1]} : vector<6x1024xf32> to vector<6x991xf32>
    %66 = arith.maximumf %64, %65 : vector<6x991xf32>
    %67 = arith.maximumf %63, %66 : vector<6x991xf32>
    %c0_6 = arith.constant 0 : index
    %c0_7 = arith.constant 0 : index
    %68 = vector.load %arg6[%c0_6, %c0_7] : memref<991x257xf32, #tpu.memory_space<vmem>>, vector<991x257xf32>
    %cst_8 = arith.constant dense<0.000000e+00> : vector<6x257xf32>
    %69 = tpu.matmul %67, %68, %cst_8 {dimension_numbers = #tpu.dot_dimension_numbers<[1], [0], [0], [1], [0, 0, 1, 1], [], []>} : vector<6x991xf32>, vector<991x257xf32>, vector<6x257xf32> -> vector<6x257xf32>
    %c0_9 = arith.constant 0 : index
    %c0_10 = arith.constant 0 : index
    %c0_11 = arith.constant 0 : index
    %70 = vector.load %arg4[%c0_9, %c0_10, %c0_11] : memref<9x16x6xf32, #tpu.memory_space<vmem>>, vector<1x16x6xf32>
    %71 = vector.shape_cast %70 : vector<1x16x6xf32> to vector<16x6xf32>
    %72 = vector.extract_strided_slice %69 {offsets = [0, 0], sizes = [6, 225], strides = [1, 1]} : vector<6x257xf32> to vector<6x225xf32>
    %cst_12 = arith.constant dense<0.000000e+00> : vector<16x225xf32>
    %73 = tpu.matmul %71, %72, %cst_12 {dimension_numbers = #tpu.dot_dimension_numbers<[1], [0], [0], [1], [0, 0, 1, 1], [], []>} : vector<16x6xf32>, vector<6x225xf32>, vector<16x225xf32> -> vector<16x225xf32>
    %c1 = arith.constant 1 : index
    %c0_13 = arith.constant 0 : index
    %c0_14 = arith.constant 0 : index
    %74 = vector.load %arg4[%c1, %c0_13, %c0_14] : memref<9x16x6xf32, #tpu.memory_space<vmem>>, vector<1x16x6xf32>
    %75 = vector.shape_cast %74 : vector<1x16x6xf32> to vector<16x6xf32>
    %76 = vector.extract_strided_slice %69 {offsets = [0, 1], sizes = [6, 225], strides = [1, 1]} : vector<6x257xf32> to vector<6x225xf32>
    %cst_15 = arith.constant dense<0.000000e+00> : vector<16x225xf32>
    %77 = tpu.matmul %75, %76, %cst_15 {dimension_numbers = #tpu.dot_dimension_numbers<[1], [0], [0], [1], [0, 0, 1, 1], [], []>} : vector<16x6xf32>, vector<6x225xf32>, vector<16x225xf32> -> vector<16x225xf32>
    %78 = arith.addf %73, %77 : vector<16x225xf32>
    %c2 = arith.constant 2 : index
    %c0_16 = arith.constant 0 : index
    %c0_17 = arith.constant 0 : index
    %79 = vector.load %arg4[%c2, %c0_16, %c0_17] : memref<9x16x6xf32, #tpu.memory_space<vmem>>, vector<1x16x6xf32>
    %80 = vector.shape_cast %79 : vector<1x16x6xf32> to vector<16x6xf32>
    %81 = vector.extract_strided_slice %69 {offsets = [0, 2], sizes = [6, 225], strides = [1, 1]} : vector<6x257xf32> to vector<6x225xf32>
    %cst_18 = arith.constant dense<0.000000e+00> : vector<16x225xf32>
    %82 = tpu.matmul %80, %81, %cst_18 {dimension_numbers = #tpu.dot_dimension_numbers<[1], [0], [0], [1], [0, 0, 1, 1], [], []>} : vector<16x6xf32>, vector<6x225xf32>, vector<16x225xf32> -> vector<16x225xf32>
    %83 = arith.addf %78, %82 : vector<16x225xf32>
    %c3 = arith.constant 3 : index
    %c0_19 = arith.constant 0 : index
    %c0_20 = arith.constant 0 : index
    %84 = vector.load %arg4[%c3, %c0_19, %c0_20] : memref<9x16x6xf32, #tpu.memory_space<vmem>>, vector<1x16x6xf32>
    %85 = vector.shape_cast %84 : vector<1x16x6xf32> to vector<16x6xf32>
    %86 = vector.extract_strided_slice %69 {offsets = [0, 15], sizes = [6, 225], strides = [1, 1]} : vector<6x257xf32> to vector<6x225xf32>
    %cst_21 = arith.constant dense<0.000000e+00> : vector<16x225xf32>
    %87 = tpu.matmul %85, %86, %cst_21 {dimension_numbers = #tpu.dot_dimension_numbers<[1], [0], [0], [1], [0, 0, 1, 1], [], []>} : vector<16x6xf32>, vector<6x225xf32>, vector<16x225xf32> -> vector<16x225xf32>
    %88 = arith.addf %83, %87 : vector<16x225xf32>
    %c4 = arith.constant 4 : index
    %c0_22 = arith.constant 0 : index
    %c0_23 = arith.constant 0 : index
    %89 = vector.load %arg4[%c4, %c0_22, %c0_23] : memref<9x16x6xf32, #tpu.memory_space<vmem>>, vector<1x16x6xf32>
    %90 = vector.shape_cast %89 : vector<1x16x6xf32> to vector<16x6xf32>
    %91 = vector.extract_strided_slice %69 {offsets = [0, 16], sizes = [6, 225], strides = [1, 1]} : vector<6x257xf32> to vector<6x225xf32>
    %cst_24 = arith.constant dense<0.000000e+00> : vector<16x225xf32>
    %92 = tpu.matmul %90, %91, %cst_24 {dimension_numbers = #tpu.dot_dimension_numbers<[1], [0], [0], [1], [0, 0, 1, 1], [], []>} : vector<16x6xf32>, vector<6x225xf32>, vector<16x225xf32> -> vector<16x225xf32>
    %93 = arith.addf %88, %92 : vector<16x225xf32>
    %c5 = arith.constant 5 : index
    %c0_25 = arith.constant 0 : index
    %c0_26 = arith.constant 0 : index
    %94 = vector.load %arg4[%c5, %c0_25, %c0_26] : memref<9x16x6xf32, #tpu.memory_space<vmem>>, vector<1x16x6xf32>
    %95 = vector.shape_cast %94 : vector<1x16x6xf32> to vector<16x6xf32>
    %96 = vector.extract_strided_slice %69 {offsets = [0, 17], sizes = [6, 225], strides = [1, 1]} : vector<6x257xf32> to vector<6x225xf32>
    %cst_27 = arith.constant dense<0.000000e+00> : vector<16x225xf32>
    %97 = tpu.matmul %95, %96, %cst_27 {dimension_numbers = #tpu.dot_dimension_numbers<[1], [0], [0], [1], [0, 0, 1, 1], [], []>} : vector<16x6xf32>, vector<6x225xf32>, vector<16x225xf32> -> vector<16x225xf32>
    %98 = arith.addf %93, %97 : vector<16x225xf32>
    %c6 = arith.constant 6 : index
    %c0_28 = arith.constant 0 : index
    %c0_29 = arith.constant 0 : index
    %99 = vector.load %arg4[%c6, %c0_28, %c0_29] : memref<9x16x6xf32, #tpu.memory_space<vmem>>, vector<1x16x6xf32>
    %100 = vector.shape_cast %99 : vector<1x16x6xf32> to vector<16x6xf32>
    %101 = vector.extract_strided_slice %69 {offsets = [0, 30], sizes = [6, 225], strides = [1, 1]} : vector<6x257xf32> to vector<6x225xf32>
    %cst_30 = arith.constant dense<0.000000e+00> : vector<16x225xf32>
    %102 = tpu.matmul %100, %101, %cst_30 {dimension_numbers = #tpu.dot_dimension_numbers<[1], [0], [0], [1], [0, 0, 1, 1], [], []>} : vector<16x6xf32>, vector<6x225xf32>, vector<16x225xf32> -> vector<16x225xf32>
    %103 = arith.addf %98, %102 : vector<16x225xf32>
    %c7 = arith.constant 7 : index
    %c0_31 = arith.constant 0 : index
    %c0_32 = arith.constant 0 : index
    %104 = vector.load %arg4[%c7, %c0_31, %c0_32] : memref<9x16x6xf32, #tpu.memory_space<vmem>>, vector<1x16x6xf32>
    %105 = vector.shape_cast %104 : vector<1x16x6xf32> to vector<16x6xf32>
    %106 = vector.extract_strided_slice %69 {offsets = [0, 31], sizes = [6, 225], strides = [1, 1]} : vector<6x257xf32> to vector<6x225xf32>
    %cst_33 = arith.constant dense<0.000000e+00> : vector<16x225xf32>
    %107 = tpu.matmul %105, %106, %cst_33 {dimension_numbers = #tpu.dot_dimension_numbers<[1], [0], [0], [1], [0, 0, 1, 1], [], []>} : vector<16x6xf32>, vector<6x225xf32>, vector<16x225xf32> -> vector<16x225xf32>
    %108 = arith.addf %103, %107 : vector<16x225xf32>
    %c8 = arith.constant 8 : index
    %c0_34 = arith.constant 0 : index
    %c0_35 = arith.constant 0 : index
    %109 = vector.load %arg4[%c8, %c0_34, %c0_35] : memref<9x16x6xf32, #tpu.memory_space<vmem>>, vector<1x16x6xf32>
    %110 = vector.shape_cast %109 : vector<1x16x6xf32> to vector<16x6xf32>
    %111 = vector.extract_strided_slice %69 {offsets = [0, 32], sizes = [6, 225], strides = [1, 1]} : vector<6x257xf32> to vector<6x225xf32>
    %cst_36 = arith.constant dense<0.000000e+00> : vector<16x225xf32>
    %112 = tpu.matmul %110, %111, %cst_36 {dimension_numbers = #tpu.dot_dimension_numbers<[1], [0], [0], [1], [0, 0, 1, 1], [], []>} : vector<16x6xf32>, vector<6x225xf32>, vector<16x225xf32> -> vector<16x225xf32>
    %113 = arith.addf %108, %112 : vector<16x225xf32>
    %c0_37 = arith.constant 0 : index
    %c0_38 = arith.constant 0 : index
    %114 = vector.load %arg5[%c0_37, %c0_38] : memref<16x1xf32, #tpu.memory_space<vmem>>, vector<16x1xf32>
    %115 = vector.broadcast %114 : vector<16x1xf32> to vector<16x225xf32>
    %116 = arith.addf %113, %115 : vector<16x225xf32>
    %cst_39 = arith.constant 0.000000e+00 : f32
    %117 = vector.broadcast %cst_39 : f32 to vector<16x225xf32>
    %118 = arith.maximumf %116, %117 : vector<16x225xf32>
    %119 = vector.extract_strided_slice %118 {offsets = [0, 0], sizes = [16, 209], strides = [1, 1]} : vector<16x225xf32> to vector<16x209xf32>
    %120 = vector.extract_strided_slice %118 {offsets = [0, 1], sizes = [16, 209], strides = [1, 1]} : vector<16x225xf32> to vector<16x209xf32>
    %121 = arith.maximumf %119, %120 : vector<16x209xf32>
    %122 = vector.extract_strided_slice %118 {offsets = [0, 15], sizes = [16, 209], strides = [1, 1]} : vector<16x225xf32> to vector<16x209xf32>
    %123 = vector.extract_strided_slice %118 {offsets = [0, 16], sizes = [16, 209], strides = [1, 1]} : vector<16x225xf32> to vector<16x209xf32>
    %124 = arith.maximumf %122, %123 : vector<16x209xf32>
    %125 = arith.maximumf %121, %124 : vector<16x209xf32>
    %c0_40 = arith.constant 0 : index
    %c0_41 = arith.constant 0 : index
    %126 = vector.load %arg7[%c0_40, %c0_41] : memref<209x36xf32, #tpu.memory_space<vmem>>, vector<209x36xf32>
    %cst_42 = arith.constant dense<0.000000e+00> : vector<16x36xf32>
    %127 = tpu.matmul %125, %126, %cst_42 {dimension_numbers = #tpu.dot_dimension_numbers<[1], [0], [0], [1], [0, 0, 1, 1], [], []>} : vector<16x209xf32>, vector<209x36xf32>, vector<16x36xf32> -> vector<16x36xf32>
    %128 = vector.extract_strided_slice %127 {offsets = [0, 0], sizes = [1, 36], strides = [1, 1]} : vector<16x36xf32> to vector<1x36xf32>
    %c0_43 = arith.constant 0 : index
    %c0_44 = arith.constant 0 : index
    %c0_45 = arith.constant 0 : index
    %129 = vector.load %arg8[%c0_43, %c0_44, %c0_45] : memref<16x36x128xf32, #tpu.memory_space<vmem>>, vector<1x36x128xf32>
    %130 = vector.shape_cast %129 : vector<1x36x128xf32> to vector<36x128xf32>
    %cst_46 = arith.constant dense<0.000000e+00> : vector<1x128xf32>
    %131 = tpu.matmul %128, %130, %cst_46 {dimension_numbers = #tpu.dot_dimension_numbers<[1], [0], [0], [1], [0, 0, 1, 1], [], []>} : vector<1x36xf32>, vector<36x128xf32>, vector<1x128xf32> -> vector<1x128xf32>
    %132 = vector.extract_strided_slice %127 {offsets = [1, 0], sizes = [1, 36], strides = [1, 1]} : vector<16x36xf32> to vector<1x36xf32>
    %c1_47 = arith.constant 1 : index
    %c0_48 = arith.constant 0 : index
    %c0_49 = arith.constant 0 : index
    %133 = vector.load %arg8[%c1_47, %c0_48, %c0_49] : memref<16x36x128xf32, #tpu.memory_space<vmem>>, vector<1x36x128xf32>
    %134 = vector.shape_cast %133 : vector<1x36x128xf32> to vector<36x128xf32>
    %cst_50 = arith.constant dense<0.000000e+00> : vector<1x128xf32>
    %135 = tpu.matmul %132, %134, %cst_50 {dimension_numbers = #tpu.dot_dimension_numbers<[1], [0], [0], [1], [0, 0, 1, 1], [], []>} : vector<1x36xf32>, vector<36x128xf32>, vector<1x128xf32> -> vector<1x128xf32>
    %136 = arith.addf %131, %135 : vector<1x128xf32>
    %137 = vector.extract_strided_slice %127 {offsets = [2, 0], sizes = [1, 36], strides = [1, 1]} : vector<16x36xf32> to vector<1x36xf32>
    %c2_51 = arith.constant 2 : index
    %c0_52 = arith.constant 0 : index
    %c0_53 = arith.constant 0 : index
    %138 = vector.load %arg8[%c2_51, %c0_52, %c0_53] : memref<16x36x128xf32, #tpu.memory_space<vmem>>, vector<1x36x128xf32>
    %139 = vector.shape_cast %138 : vector<1x36x128xf32> to vector<36x128xf32>
    %cst_54 = arith.constant dense<0.000000e+00> : vector<1x128xf32>
    %140 = tpu.matmul %137, %139, %cst_54 {dimension_numbers = #tpu.dot_dimension_numbers<[1], [0], [0], [1], [0, 0, 1, 1], [], []>} : vector<1x36xf32>, vector<36x128xf32>, vector<1x128xf32> -> vector<1x128xf32>
    %141 = arith.addf %136, %140 : vector<1x128xf32>
    %142 = vector.extract_strided_slice %127 {offsets = [3, 0], sizes = [1, 36], strides = [1, 1]} : vector<16x36xf32> to vector<1x36xf32>
    %c3_55 = arith.constant 3 : index
    %c0_56 = arith.constant 0 : index
    %c0_57 = arith.constant 0 : index
    %143 = vector.load %arg8[%c3_55, %c0_56, %c0_57] : memref<16x36x128xf32, #tpu.memory_space<vmem>>, vector<1x36x128xf32>
    %144 = vector.shape_cast %143 : vector<1x36x128xf32> to vector<36x128xf32>
    %cst_58 = arith.constant dense<0.000000e+00> : vector<1x128xf32>
    %145 = tpu.matmul %142, %144, %cst_58 {dimension_numbers = #tpu.dot_dimension_numbers<[1], [0], [0], [1], [0, 0, 1, 1], [], []>} : vector<1x36xf32>, vector<36x128xf32>, vector<1x128xf32> -> vector<1x128xf32>
    %146 = arith.addf %141, %145 : vector<1x128xf32>
    %147 = vector.extract_strided_slice %127 {offsets = [4, 0], sizes = [1, 36], strides = [1, 1]} : vector<16x36xf32> to vector<1x36xf32>
    %c4_59 = arith.constant 4 : index
    %c0_60 = arith.constant 0 : index
    %c0_61 = arith.constant 0 : index
    %148 = vector.load %arg8[%c4_59, %c0_60, %c0_61] : memref<16x36x128xf32, #tpu.memory_space<vmem>>, vector<1x36x128xf32>
    %149 = vector.shape_cast %148 : vector<1x36x128xf32> to vector<36x128xf32>
    %cst_62 = arith.constant dense<0.000000e+00> : vector<1x128xf32>
    %150 = tpu.matmul %147, %149, %cst_62 {dimension_numbers = #tpu.dot_dimension_numbers<[1], [0], [0], [1], [0, 0, 1, 1], [], []>} : vector<1x36xf32>, vector<36x128xf32>, vector<1x128xf32> -> vector<1x128xf32>
    %151 = arith.addf %146, %150 : vector<1x128xf32>
    %152 = vector.extract_strided_slice %127 {offsets = [5, 0], sizes = [1, 36], strides = [1, 1]} : vector<16x36xf32> to vector<1x36xf32>
    %c5_63 = arith.constant 5 : index
    %c0_64 = arith.constant 0 : index
    %c0_65 = arith.constant 0 : index
    %153 = vector.load %arg8[%c5_63, %c0_64, %c0_65] : memref<16x36x128xf32, #tpu.memory_space<vmem>>, vector<1x36x128xf32>
    %154 = vector.shape_cast %153 : vector<1x36x128xf32> to vector<36x128xf32>
    %cst_66 = arith.constant dense<0.000000e+00> : vector<1x128xf32>
    %155 = tpu.matmul %152, %154, %cst_66 {dimension_numbers = #tpu.dot_dimension_numbers<[1], [0], [0], [1], [0, 0, 1, 1], [], []>} : vector<1x36xf32>, vector<36x128xf32>, vector<1x128xf32> -> vector<1x128xf32>
    %156 = arith.addf %151, %155 : vector<1x128xf32>
    %157 = vector.extract_strided_slice %127 {offsets = [6, 0], sizes = [1, 36], strides = [1, 1]} : vector<16x36xf32> to vector<1x36xf32>
    %c6_67 = arith.constant 6 : index
    %c0_68 = arith.constant 0 : index
    %c0_69 = arith.constant 0 : index
    %158 = vector.load %arg8[%c6_67, %c0_68, %c0_69] : memref<16x36x128xf32, #tpu.memory_space<vmem>>, vector<1x36x128xf32>
    %159 = vector.shape_cast %158 : vector<1x36x128xf32> to vector<36x128xf32>
    %cst_70 = arith.constant dense<0.000000e+00> : vector<1x128xf32>
    %160 = tpu.matmul %157, %159, %cst_70 {dimension_numbers = #tpu.dot_dimension_numbers<[1], [0], [0], [1], [0, 0, 1, 1], [], []>} : vector<1x36xf32>, vector<36x128xf32>, vector<1x128xf32> -> vector<1x128xf32>
    %161 = arith.addf %156, %160 : vector<1x128xf32>
    %162 = vector.extract_strided_slice %127 {offsets = [7, 0], sizes = [1, 36], strides = [1, 1]} : vector<16x36xf32> to vector<1x36xf32>
    %c7_71 = arith.constant 7 : index
    %c0_72 = arith.constant 0 : index
    %c0_73 = arith.constant 0 : index
    %163 = vector.load %arg8[%c7_71, %c0_72, %c0_73] : memref<16x36x128xf32, #tpu.memory_space<vmem>>, vector<1x36x128xf32>
    %164 = vector.shape_cast %163 : vector<1x36x128xf32> to vector<36x128xf32>
    %cst_74 = arith.constant dense<0.000000e+00> : vector<1x128xf32>
    %165 = tpu.matmul %162, %164, %cst_74 {dimension_numbers = #tpu.dot_dimension_numbers<[1], [0], [0], [1], [0, 0, 1, 1], [], []>} : vector<1x36xf32>, vector<36x128xf32>, vector<1x128xf32> -> vector<1x128xf32>
    %166 = arith.addf %161, %165 : vector<1x128xf32>
    %167 = vector.extract_strided_slice %127 {offsets = [8, 0], sizes = [1, 36], strides = [1, 1]} : vector<16x36xf32> to vector<1x36xf32>
    %c8_75 = arith.constant 8 : index
    %c0_76 = arith.constant 0 : index
    %c0_77 = arith.constant 0 : index
    %168 = vector.load %arg8[%c8_75, %c0_76, %c0_77] : memref<16x36x128xf32, #tpu.memory_space<vmem>>, vector<1x36x128xf32>
    %169 = vector.shape_cast %168 : vector<1x36x128xf32> to vector<36x128xf32>
    %cst_78 = arith.constant dense<0.000000e+00> : vector<1x128xf32>
    %170 = tpu.matmul %167, %169, %cst_78 {dimension_numbers = #tpu.dot_dimension_numbers<[1], [0], [0], [1], [0, 0, 1, 1], [], []>} : vector<1x36xf32>, vector<36x128xf32>, vector<1x128xf32> -> vector<1x128xf32>
    %171 = arith.addf %166, %170 : vector<1x128xf32>
    %172 = vector.extract_strided_slice %127 {offsets = [9, 0], sizes = [1, 36], strides = [1, 1]} : vector<16x36xf32> to vector<1x36xf32>
    %c9 = arith.constant 9 : index
    %c0_79 = arith.constant 0 : index
    %c0_80 = arith.constant 0 : index
    %173 = vector.load %arg8[%c9, %c0_79, %c0_80] : memref<16x36x128xf32, #tpu.memory_space<vmem>>, vector<1x36x128xf32>
    %174 = vector.shape_cast %173 : vector<1x36x128xf32> to vector<36x128xf32>
    %cst_81 = arith.constant dense<0.000000e+00> : vector<1x128xf32>
    %175 = tpu.matmul %172, %174, %cst_81 {dimension_numbers = #tpu.dot_dimension_numbers<[1], [0], [0], [1], [0, 0, 1, 1], [], []>} : vector<1x36xf32>, vector<36x128xf32>, vector<1x128xf32> -> vector<1x128xf32>
    %176 = arith.addf %171, %175 : vector<1x128xf32>
    %177 = vector.extract_strided_slice %127 {offsets = [10, 0], sizes = [1, 36], strides = [1, 1]} : vector<16x36xf32> to vector<1x36xf32>
    %c10 = arith.constant 10 : index
    %c0_82 = arith.constant 0 : index
    %c0_83 = arith.constant 0 : index
    %178 = vector.load %arg8[%c10, %c0_82, %c0_83] : memref<16x36x128xf32, #tpu.memory_space<vmem>>, vector<1x36x128xf32>
    %179 = vector.shape_cast %178 : vector<1x36x128xf32> to vector<36x128xf32>
    %cst_84 = arith.constant dense<0.000000e+00> : vector<1x128xf32>
    %180 = tpu.matmul %177, %179, %cst_84 {dimension_numbers = #tpu.dot_dimension_numbers<[1], [0], [0], [1], [0, 0, 1, 1], [], []>} : vector<1x36xf32>, vector<36x128xf32>, vector<1x128xf32> -> vector<1x128xf32>
    %181 = arith.addf %176, %180 : vector<1x128xf32>
    %182 = vector.extract_strided_slice %127 {offsets = [11, 0], sizes = [1, 36], strides = [1, 1]} : vector<16x36xf32> to vector<1x36xf32>
    %c11 = arith.constant 11 : index
    %c0_85 = arith.constant 0 : index
    %c0_86 = arith.constant 0 : index
    %183 = vector.load %arg8[%c11, %c0_85, %c0_86] : memref<16x36x128xf32, #tpu.memory_space<vmem>>, vector<1x36x128xf32>
    %184 = vector.shape_cast %183 : vector<1x36x128xf32> to vector<36x128xf32>
    %cst_87 = arith.constant dense<0.000000e+00> : vector<1x128xf32>
    %185 = tpu.matmul %182, %184, %cst_87 {dimension_numbers = #tpu.dot_dimension_numbers<[1], [0], [0], [1], [0, 0, 1, 1], [], []>} : vector<1x36xf32>, vector<36x128xf32>, vector<1x128xf32> -> vector<1x128xf32>
    %186 = arith.addf %181, %185 : vector<1x128xf32>
    %187 = vector.extract_strided_slice %127 {offsets = [12, 0], sizes = [1, 36], strides = [1, 1]} : vector<16x36xf32> to vector<1x36xf32>
    %c12 = arith.constant 12 : index
    %c0_88 = arith.constant 0 : index
    %c0_89 = arith.constant 0 : index
    %188 = vector.load %arg8[%c12, %c0_88, %c0_89] : memref<16x36x128xf32, #tpu.memory_space<vmem>>, vector<1x36x128xf32>
    %189 = vector.shape_cast %188 : vector<1x36x128xf32> to vector<36x128xf32>
    %cst_90 = arith.constant dense<0.000000e+00> : vector<1x128xf32>
    %190 = tpu.matmul %187, %189, %cst_90 {dimension_numbers = #tpu.dot_dimension_numbers<[1], [0], [0], [1], [0, 0, 1, 1], [], []>} : vector<1x36xf32>, vector<36x128xf32>, vector<1x128xf32> -> vector<1x128xf32>
    %191 = arith.addf %186, %190 : vector<1x128xf32>
    %192 = vector.extract_strided_slice %127 {offsets = [13, 0], sizes = [1, 36], strides = [1, 1]} : vector<16x36xf32> to vector<1x36xf32>
    %c13 = arith.constant 13 : index
    %c0_91 = arith.constant 0 : index
    %c0_92 = arith.constant 0 : index
    %193 = vector.load %arg8[%c13, %c0_91, %c0_92] : memref<16x36x128xf32, #tpu.memory_space<vmem>>, vector<1x36x128xf32>
    %194 = vector.shape_cast %193 : vector<1x36x128xf32> to vector<36x128xf32>
    %cst_93 = arith.constant dense<0.000000e+00> : vector<1x128xf32>
    %195 = tpu.matmul %192, %194, %cst_93 {dimension_numbers = #tpu.dot_dimension_numbers<[1], [0], [0], [1], [0, 0, 1, 1], [], []>} : vector<1x36xf32>, vector<36x128xf32>, vector<1x128xf32> -> vector<1x128xf32>
    %196 = arith.addf %191, %195 : vector<1x128xf32>
    %197 = vector.extract_strided_slice %127 {offsets = [14, 0], sizes = [1, 36], strides = [1, 1]} : vector<16x36xf32> to vector<1x36xf32>
    %c14 = arith.constant 14 : index
    %c0_94 = arith.constant 0 : index
    %c0_95 = arith.constant 0 : index
    %198 = vector.load %arg8[%c14, %c0_94, %c0_95] : memref<16x36x128xf32, #tpu.memory_space<vmem>>, vector<1x36x128xf32>
    %199 = vector.shape_cast %198 : vector<1x36x128xf32> to vector<36x128xf32>
    %cst_96 = arith.constant dense<0.000000e+00> : vector<1x128xf32>
    %200 = tpu.matmul %197, %199, %cst_96 {dimension_numbers = #tpu.dot_dimension_numbers<[1], [0], [0], [1], [0, 0, 1, 1], [], []>} : vector<1x36xf32>, vector<36x128xf32>, vector<1x128xf32> -> vector<1x128xf32>
    %201 = arith.addf %196, %200 : vector<1x128xf32>
    %202 = vector.extract_strided_slice %127 {offsets = [15, 0], sizes = [1, 36], strides = [1, 1]} : vector<16x36xf32> to vector<1x36xf32>
    %c15 = arith.constant 15 : index
    %c0_97 = arith.constant 0 : index
    %c0_98 = arith.constant 0 : index
    %203 = vector.load %arg8[%c15, %c0_97, %c0_98] : memref<16x36x128xf32, #tpu.memory_space<vmem>>, vector<1x36x128xf32>
    %204 = vector.shape_cast %203 : vector<1x36x128xf32> to vector<36x128xf32>
    %cst_99 = arith.constant dense<0.000000e+00> : vector<1x128xf32>
    %205 = tpu.matmul %202, %204, %cst_99 {dimension_numbers = #tpu.dot_dimension_numbers<[1], [0], [0], [1], [0, 0, 1, 1], [], []>} : vector<1x36xf32>, vector<36x128xf32>, vector<1x128xf32> -> vector<1x128xf32>
    %206 = arith.addf %201, %205 : vector<1x128xf32>
    %c0_100 = arith.constant 0 : index
    %c0_101 = arith.constant 0 : index
    %207 = vector.load %arg9[%c0_100, %c0_101] : memref<1x128xf32, #tpu.memory_space<vmem>>, vector<1x128xf32>
    %208 = arith.addf %206, %207 : vector<1x128xf32>
    %cst_102 = arith.constant 0.000000e+00 : f32
    %209 = vector.broadcast %cst_102 : f32 to vector<1x128xf32>
    %210 = arith.maximumf %208, %209 : vector<1x128xf32>
    %c0_103 = arith.constant 0 : index
    %c0_104 = arith.constant 0 : index
    %211 = vector.load %arg10[%c0_103, %c0_104] : memref<128x128xf32, #tpu.memory_space<vmem>>, vector<128x128xf32>
    %cst_105 = arith.constant dense<0.000000e+00> : vector<1x128xf32>
    %212 = tpu.matmul %210, %211, %cst_105 {dimension_numbers = #tpu.dot_dimension_numbers<[1], [0], [0], [1], [0, 0, 1, 1], [], []>} : vector<1x128xf32>, vector<128x128xf32>, vector<1x128xf32> -> vector<1x128xf32>
    %c0_106 = arith.constant 0 : index
    %c0_107 = arith.constant 0 : index
    %213 = vector.load %arg11[%c0_106, %c0_107] : memref<1x128xf32, #tpu.memory_space<vmem>>, vector<1x128xf32>
    %214 = arith.addf %212, %213 : vector<1x128xf32>
    %cst_108 = arith.constant 0.000000e+00 : f32
    %215 = vector.broadcast %cst_108 : f32 to vector<1x128xf32>
    %216 = arith.maximumf %214, %215 : vector<1x128xf32>
    %c0_109 = arith.constant 0 : index
    %c0_110 = arith.constant 0 : index
    %217 = vector.load %arg12[%c0_109, %c0_110] : memref<128x128xf32, #tpu.memory_space<vmem>>, vector<128x128xf32>
    %cst_111 = arith.constant dense<0.000000e+00> : vector<1x128xf32>
    %218 = tpu.matmul %216, %217, %cst_111 {dimension_numbers = #tpu.dot_dimension_numbers<[1], [0], [0], [1], [0, 0, 1, 1], [], []>} : vector<1x128xf32>, vector<128x128xf32>, vector<1x128xf32> -> vector<1x128xf32>
    %c0_112 = arith.constant 0 : index
    %c0_113 = arith.constant 0 : index
    %219 = vector.load %arg13[%c0_112, %c0_113] : memref<1x128xf32, #tpu.memory_space<vmem>>, vector<1x128xf32>
    %220 = arith.addf %218, %219 : vector<1x128xf32>
    %c0_114 = arith.constant 0 : index
    %c0_115 = arith.constant 0 : index
    %c0_116 = arith.constant 0 : index
    %221 = vector.load %arg14[%c0_114, %c0_115, %c0_116] : memref<1x1x128xf32, #tpu.memory_space<vmem>>, vector<1x1x128xf32>
    %222 = vector.shape_cast %221 : vector<1x1x128xf32> to vector<1x128xf32>
    %223 = vector.shape_cast %220 : vector<1x128xf32> to vector<1x1x128xf32>
    tpu.vector_store %arg14[%c0_114, %c0_115, %c0_116], %223 {strides = array<i32>} : memref<1x1x128xf32, #tpu.memory_space<vmem>>, vector<1x1x128xf32>,
    return
  }
  func.func @transform_0(%arg0: i32) -> (i32, i32, i32) {
    %c0_i32 = arith.constant 0 : i32
    %c0_i32_0 = arith.constant 0 : i32
    %c0_i32_1 = arith.constant 0 : i32
    return %arg0, %c0_i32, %c0_i32_0 : i32, i32, i32
  }
  func.func @transform_1(%arg0: i32) -> (i32, i32) {
    %c0_i32 = arith.constant 0 : i32
    %c0_i32_0 = arith.constant 0 : i32
    %c0_i32_1 = arith.constant 0 : i32
    return %c0_i32, %c0_i32_0 : i32, i32
  }
  func.func @transform_2(%arg0: i32) -> (i32, i32) {
    %c0_i32 = arith.constant 0 : i32
    %c0_i32_0 = arith.constant 0 : i32
    %c0_i32_1 = arith.constant 0 : i32
    return %c0_i32, %c0_i32_0 : i32, i32
  }
  func.func @transform_3(%arg0: i32) -> (i32, i32, i32) {
    %c0_i32 = arith.constant 0 : i32
    %c0_i32_0 = arith.constant 0 : i32
    %c0_i32_1 = arith.constant 0 : i32
    %c0_i32_2 = arith.constant 0 : i32
    return %c0_i32, %c0_i32_0, %c0_i32_1 : i32, i32, i32
  }
  func.func @transform_4(%arg0: i32) -> (i32, i32) {
    %c0_i32 = arith.constant 0 : i32
    %c0_i32_0 = arith.constant 0 : i32
    %c0_i32_1 = arith.constant 0 : i32
    return %c0_i32, %c0_i32_0 : i32, i32
  }
  func.func @transform_5(%arg0: i32) -> (i32, i32) {
    %c0_i32 = arith.constant 0 : i32
    %c0_i32_0 = arith.constant 0 : i32
    %c0_i32_1 = arith.constant 0 : i32
    return %c0_i32, %c0_i32_0 : i32, i32
  }
  func.func @transform_6(%arg0: i32) -> (i32, i32) {
    %c0_i32 = arith.constant 0 : i32
    %c0_i32_0 = arith.constant 0 : i32
    %c0_i32_1 = arith.constant 0 : i32
    return %c0_i32, %c0_i32_0 : i32, i32
  }
  func.func @transform_7(%arg0: i32) -> (i32, i32, i32) {
    %c0_i32 = arith.constant 0 : i32
    %c0_i32_0 = arith.constant 0 : i32
    %c0_i32_1 = arith.constant 0 : i32
    %c0_i32_2 = arith.constant 0 : i32
    return %c0_i32, %c0_i32_0, %c0_i32_1 : i32, i32, i32
  }
  func.func @transform_8(%arg0: i32) -> (i32, i32) {
    %c0_i32 = arith.constant 0 : i32
    %c0_i32_0 = arith.constant 0 : i32
    %c0_i32_1 = arith.constant 0 : i32
    return %c0_i32, %c0_i32_0 : i32, i32
  }
  func.func @transform_9(%arg0: i32) -> (i32, i32) {
    %c0_i32 = arith.constant 0 : i32
    %c0_i32_0 = arith.constant 0 : i32
    %c0_i32_1 = arith.constant 0 : i32
    return %c0_i32, %c0_i32_0 : i32, i32
  }
  func.func @transform_10(%arg0: i32) -> (i32, i32) {
    %c0_i32 = arith.constant 0 : i32
    %c0_i32_0 = arith.constant 0 : i32
    %c0_i32_1 = arith.constant 0 : i32
    return %c0_i32, %c0_i32_0 : i32, i32
  }
  func.func @transform_11(%arg0: i32) -> (i32, i32) {
    %c0_i32 = arith.constant 0 : i32
    %c0_i32_0 = arith.constant 0 : i32
    %c0_i32_1 = arith.constant 0 : i32
    return %c0_i32, %c0_i32_0 : i32, i32
  }
  func.func @transform_12(%arg0: i32) -> (i32, i32) {
    %c0_i32 = arith.constant 0 : i32
    %c0_i32_0 = arith.constant 0 : i32
    %c0_i32_1 = arith.constant 0 : i32
    return %c0_i32, %c0_i32_0 : i32, i32
  }
  func.func @transform_13(%arg0: i32) -> (i32, i32, i32) {
    %c0_i32 = arith.constant 0 : i32
    %c0_i32_0 = arith.constant 0 : i32
    %c0_i32_1 = arith.constant 0 : i32
    return %arg0, %c0_i32, %c0_i32_0 : i32, i32, i32
  }
}

</mosaic_0001>

<llo_original>
// kernel: net_forward.1
$region0: #{net_forward.1}
  #allocation0 [shape = 'u32[]', space=smem, size = 0x4, offset = 0x4, fixed_abs, tag = 'smem constant byte address 0x4 - core index']
  #allocation1 [shape = 'u32[144,128]{1,0:T(1,128)}', space=vmem, size = 0x12000, scoped, tag = 'internal scratch']
  %s0 = inlined_call_operand.vmem [shape: f32[2,1,1152], index: 0, kind: input, shape index: {}]
  %s1 = inlined_call_operand.vmem [shape: f32[6,9], index: 1, kind: input, shape index: {}]
  %s2 = inlined_call_operand.vmem [shape: f32[6,1], index: 2, kind: input, shape index: {}]
  %s3 = inlined_call_operand.vmem [shape: f32[9,16,6], index: 3, kind: input, shape index: {}]
  %s4 = inlined_call_operand.vmem [shape: f32[16,1], index: 4, kind: input, shape index: {}]
  %s5 = inlined_call_operand.vmem [shape: f32[991,257], index: 5, kind: input, shape index: {}]
  %s6 = inlined_call_operand.vmem [shape: f32[209,36], index: 6, kind: input, shape index: {}]
  %s7 = inlined_call_operand.vmem [shape: f32[16,36,128], index: 7, kind: input, shape index: {}]
  %s8 = inlined_call_operand.vmem [shape: f32[1,128], index: 8, kind: input, shape index: {}]
  %s9 = inlined_call_operand.vmem [shape: f32[128,128], index: 9, kind: input, shape index: {}]
  %s10 = inlined_call_operand.vmem [shape: f32[1,128], index: 10, kind: input, shape index: {}]
  %s11 = inlined_call_operand.vmem [shape: f32[128,128], index: 11, kind: input, shape index: {}]
  %s12 = inlined_call_operand.vmem [shape: f32[1,128], index: 12, kind: input, shape index: {}]
  %s13 = inlined_call_operand.hbm [shape: f32[2,1,128], index: 13, kind: output, shape index: {}]
  %s14 = sld [smem:[#allocation0]]
  $region85: #{net_forward.1} parent=0
    _
  %s16 = ssub.s32 1, %s14
  %s17 = scalar_select 0, %s16, %s14
  $region1: #{net_forward.1} parent=0
    #allocation2 [shape = 'u8[1024]{0}', space=vmem, size = 0x400, scoped, tag = 'output window, operand 0']
    #allocation3 [shape = 's32[2]{0}', space=sflag, size = 0x8, scoped, tag = 'scoped memory for net_forward.1']
    %18 = vsyncpa [#allocation3], 0
    %s19 = scalar_lea.sflag [#allocation3], 1
    %20 = vsyncpa %s19, 0
    loop: start=0, step=1, limit=4
    $region2: #{net_forward.1} parent=1 // loop_pre_header
      _
    $region3: #{net_forward.1} parent=1 // loop_header
      %s22 = sphi 0, %s26
      %p23 = scmp.ge.s32.totalorder %s22, 4
      %s32 = sphi 0, %s34
      %s35 = sphi 0, %s32
      %s36 = sphi 0, %s35
      %s52 = sphi 0, %s36
      %s56 = sphi 0, %s56
      %s58 = sphi 0, %s56
      %s59 = sphi 0, %s58
      %s73 = sphi 0, %s59
      %s77 = sphi 0, %s77
      %s79 = sphi 0, %s77
      %s80 = sphi 0, %s79
      %s94 = sphi 0, %s80
      %s98 = sphi 0, %s98
      %s100 = sphi 0, %s98
      %s101 = sphi 0, %s100
      %s115 = sphi 0, %s101
      %s119 = sphi 0, %s119
      %s121 = sphi 0, %s119
      %s122 = sphi 0, %s121
      %s136 = sphi 0, %s122
      %s140 = sphi 0, %s140
      %s142 = sphi 0, %s140
      %s143 = sphi 0, %s142
      %s157 = sphi 0, %s143
      %s161 = sphi 0, %s161
      %s163 = sphi 0, %s161
      %s164 = sphi 0, %s163
      %s178 = sphi 0, %s164
      %s182 = sphi 0, %s182
      %s184 = sphi 0, %s182
      %s185 = sphi 0, %s184
      %s199 = sphi 0, %s185
      %s203 = sphi 0, %s203
      %s205 = sphi 0, %s203
      %s206 = sphi 0, %s205
      %s220 = sphi 0, %s206
      %s224 = sphi 0, %s224
      %s226 = sphi 0, %s224
      %s227 = sphi 0, %s226
      %s241 = sphi 0, %s227
      %s245 = sphi 0, %s245
      %s247 = sphi 0, %s245
      %s248 = sphi 0, %s247
      %s262 = sphi 0, %s248
      %s266 = sphi 0, %s266
      %s268 = sphi 0, %s266
      %s269 = sphi 0, %s268
      %s283 = sphi 0, %s269
      %s287 = sphi 0, %s287
      %s289 = sphi 0, %s287
      %s290 = sphi 0, %s289
      %s304 = sphi 0, %s290
      %s310 = sphi 0, %s312
      %s313 = sphi 0, %s310
      %s314 = sphi 0, %s313
      %s330 = sphi 0, %s314
    $region4: #{net_forward.1} parent=1 // loop_header_branch
      %25 = sbr.rel (%p23) target = $region8
    $region5: #{net_forward.1} parent=1 // loop_body
      %s27 = ssub.s32 %s22, 1
      %s28 = ssub.s32 %s22, 2
      %s29 = sadd.s32 %s22, 1
      %s30 = ssub.s32 %s22, %s29
      %p31 = scmp.eq.s32.totalorder %s30, 0
      %s33 = sadd.s32 %s32, 1
      %s34 = scalar_select %p31, %s32, %s33
      %p37 = pneg %p31
      %p38 = scmp.eq.s32.totalorder %s22, 1
      %p39 = por %p37, %p38
      %p40 = scmp.ne.s32.totalorder %s32, %s35
      %p41 = scmp.eq.s32.totalorder %s22, 0
      %p42 = por %p40, %p41
      %p43 = scmp.ne.s32.totalorder %s32, %s35
      %p44 = scmp.eq.s32.totalorder %s27, 1
      %p45 = por %p43, %p44
      %p46 = scmp.ne.s32.totalorder %s35, %s36
      %p47 = scmp.eq.s32.totalorder %s27, 0
      %p48 = por %p46, %p47
      %p49 = scmp.ne.s32.totalorder %s35, %s36
      %p50 = scmp.eq.s32.totalorder %s28, 1
      %p51 = por %p49, %p50
      %p53 = scmp.ne.s32.totalorder %s36, %s52
      %p54 = scmp.eq.s32.totalorder %s28, 0
      %p55 = por %p53, %p54
      %s57 = sadd.s32 %s56, 1
      %p60 = scmp.eq.s32.totalorder %s22, 1
      %p61 = scmp.ne.s32.totalorder %s56, %s58
      %p62 = scmp.eq.s32.totalorder %s22, 0
      %p63 = por %p61, %p62
      %p64 = scmp.ne.s32.totalorder %s56, %s58
      %p65 = scmp.eq.s32.totalorder %s27, 1
      %p66 = por %p64, %p65
      %p67 = scmp.ne.s32.totalorder %s58, %s59
      %p68 = scmp.eq.s32.totalorder %s27, 0
      %p69 = por %p67, %p68
      %p70 = scmp.ne.s32.totalorder %s58, %s59
      %p71 = scmp.eq.s32.totalorder %s28, 1
      %p72 = por %p70, %p71
      %p74 = scmp.ne.s32.totalorder %s59, %s73
      %p75 = scmp.eq.s32.totalorder %s28, 0
      %p76 = por %p74, %p75
      %s78 = sadd.s32 %s77, 1
      %p81 = scmp.eq.s32.totalorder %s22, 1
      %p82 = scmp.ne.s32.totalorder %s77, %s79
      %p83 = scmp.eq.s32.totalorder %s22, 0
      %p84 = por %p82, %p83
      %p85 = scmp.ne.s32.totalorder %s77, %s79
      %p86 = scmp.eq.s32.totalorder %s27, 1
      %p87 = por %p85, %p86
      %p88 = scmp.ne.s32.totalorder %s79, %s80
      %p89 = scmp.eq.s32.totalorder %s27, 0
      %p90 = por %p88, %p89
      %p91 = scmp.ne.s32.totalorder %s79, %s80
      %p92 = scmp.eq.s32.totalorder %s28, 1
      %p93 = por %p91, %p92
      %p95 = scmp.ne.s32.totalorder %s80, %s94
      %p96 = scmp.eq.s32.totalorder %s28, 0
      %p97 = por %p95, %p96
      %s99 = sadd.s32 %s98, 1
      %p102 = scmp.eq.s32.totalorder %s22, 1
      %p103 = scmp.ne.s32.totalorder %s98, %s100
      %p104 = scmp.eq.s32.totalorder %s22, 0
      %p105 = por %p103, %p104
      %p106 = scmp.ne.s32.totalorder %s98, %s100
      %p107 = scmp.eq.s32.totalorder %s27, 1
      %p108 = por %p106, %p107
      %p109 = scmp.ne.s32.totalorder %s100, %s101
      %p110 = scmp.eq.s32.totalorder %s27, 0
      %p111 = por %p109, %p110
      %p112 = scmp.ne.s32.totalorder %s100, %s101
      %p113 = scmp.eq.s32.totalorder %s28, 1
      %p114 = por %p112, %p113
      %p116 = scmp.ne.s32.totalorder %s101, %s115
      %p117 = scmp.eq.s32.totalorder %s28, 0
      %p118 = por %p116, %p117
      %s120 = sadd.s32 %s119, 1
      %p123 = scmp.eq.s32.totalorder %s22, 1
      %p124 = scmp.ne.s32.totalorder %s119, %s121
      %p125 = scmp.eq.s32.totalorder %s22, 0
      %p126 = por %p124, %p125
      %p127 = scmp.ne.s32.totalorder %s119, %s121
      %p128 = scmp.eq.s32.totalorder %s27, 1
      %p129 = por %p127, %p128
      %p130 = scmp.ne.s32.totalorder %s121, %s122
      %p131 = scmp.eq.s32.totalorder %s27, 0
      %p132 = por %p130, %p131
      %p133 = scmp.ne.s32.totalorder %s121, %s122
      %p134 = scmp.eq.s32.totalorder %s28, 1
      %p135 = por %p133, %p134
      %p137 = scmp.ne.s32.totalorder %s122, %s136
      %p138 = scmp.eq.s32.totalorder %s28, 0
      %p139 = por %p137, %p138
      %s141 = sadd.s32 %s140, 1
      %p144 = scmp.eq.s32.totalorder %s22, 1
      %p145 = scmp.ne.s32.totalorder %s140, %s142
      %p146 = scmp.eq.s32.totalorder %s22, 0
      %p147 = por %p145, %p146
      %p148 = scmp.ne.s32.totalorder %s140, %s142
      %p149 = scmp.eq.s32.totalorder %s27, 1
      %p150 = por %p148, %p149
      %p151 = scmp.ne.s32.totalorder %s142, %s143
      %p152 = scmp.eq.s32.totalorder %s27, 0
      %p153 = por %p151, %p152
      %p154 = scmp.ne.s32.totalorder %s142, %s143
      %p155 = scmp.eq.s32.totalorder %s28, 1
      %p156 = por %p154, %p155
      %p158 = scmp.ne.s32.totalorder %s143, %s157
      %p159 = scmp.eq.s32.totalorder %s28, 0
      %p160 = por %p158, %p159
      %s162 = sadd.s32 %s161, 1
      %p165 = scmp.eq.s32.totalorder %s22, 1
      %p166 = scmp.ne.s32.totalorder %s161, %s163
      %p167 = scmp.eq.s32.totalorder %s22, 0
      %p168 = por %p166, %p167
      %p169 = scmp.ne.s32.totalorder %s161, %s163
      %p170 = scmp.eq.s32.totalorder %s27, 1
      %p171 = por %p169, %p170
      %p172 = scmp.ne.s32.totalorder %s163, %s164
      %p173 = scmp.eq.s32.totalorder %s27, 0
      %p174 = por %p172, %p173
      %p175 = scmp.ne.s32.totalorder %s163, %s164
      %p176 = scmp.eq.s32.totalorder %s28, 1
      %p177 = por %p175, %p176
      %p179 = scmp.ne.s32.totalorder %s164, %s178
      %p180 = scmp.eq.s32.totalorder %s28, 0
      %p181 = por %p179, %p180
      %s183 = sadd.s32 %s182, 1
      %p186 = scmp.eq.s32.totalorder %s22, 1
      %p187 = scmp.ne.s32.totalorder %s182, %s184
      %p188 = scmp.eq.s32.totalorder %s22, 0
      %p189 = por %p187, %p188
      %p190 = scmp.ne.s32.totalorder %s182, %s184
      %p191 = scmp.eq.s32.totalorder %s27, 1
      %p192 = por %p190, %p191
      %p193 = scmp.ne.s32.totalorder %s184, %s185
      %p194 = scmp.eq.s32.totalorder %s27, 0
      %p195 = por %p193, %p194
      %p196 = scmp.ne.s32.totalorder %s184, %s185
      %p197 = scmp.eq.s32.totalorder %s28, 1
      %p198 = por %p196, %p197
      %p200 = scmp.ne.s32.totalorder %s185, %s199
      %p201 = scmp.eq.s32.totalorder %s28, 0
      %p202 = por %p200, %p201
      %s204 = sadd.s32 %s203, 1
      %p207 = scmp.eq.s32.totalorder %s22, 1
      %p208 = scmp.ne.s32.totalorder %s203, %s205
      %p209 = scmp.eq.s32.totalorder %s22, 0
      %p210 = por %p208, %p209
      %p211 = scmp.ne.s32.totalorder %s203, %s205
      %p212 = scmp.eq.s32.totalorder %s27, 1
      %p213 = por %p211, %p212
      %p214 = scmp.ne.s32.totalorder %s205, %s206
      %p215 = scmp.eq.s32.totalorder %s27, 0
      %p216 = por %p214, %p215
      %p217 = scmp.ne.s32.totalorder %s205, %s206
      %p218 = scmp.eq.s32.totalorder %s28, 1
      %p219 = por %p217, %p218
      %p221 = scmp.ne.s32.totalorder %s206, %s220
      %p222 = scmp.eq.s32.totalorder %s28, 0
      %p223 = por %p221, %p222
      %s225 = sadd.s32 %s224, 1
      %p228 = scmp.eq.s32.totalorder %s22, 1
      %p229 = scmp.ne.s32.totalorder %s224, %s226
      %p230 = scmp.eq.s32.totalorder %s22, 0
      %p231 = por %p229, %p230
      %p232 = scmp.ne.s32.totalorder %s224, %s226
      %p233 = scmp.eq.s32.totalorder %s27, 1
      %p234 = por %p232, %p233
      %p235 = scmp.ne.s32.totalorder %s226, %s227
      %p236 = scmp.eq.s32.totalorder %s27, 0
      %p237 = por %p235, %p236
      %p238 = scmp.ne.s32.totalorder %s226, %s227
      %p239 = scmp.eq.s32.totalorder %s28, 1
      %p240 = por %p238, %p239
      %p242 = scmp.ne.s32.totalorder %s227, %s241
      %p243 = scmp.eq.s32.totalorder %s28, 0
      %p244 = por %p242, %p243
      %s246 = sadd.s32 %s245, 1
      %p249 = scmp.eq.s32.totalorder %s22, 1
      %p250 = scmp.ne.s32.totalorder %s245, %s247
      %p251 = scmp.eq.s32.totalorder %s22, 0
      %p252 = por %p250, %p251
      %p253 = scmp.ne.s32.totalorder %s245, %s247
      %p254 = scmp.eq.s32.totalorder %s27, 1
      %p255 = por %p253, %p254
      %p256 = scmp.ne.s32.totalorder %s247, %s248
      %p257 = scmp.eq.s32.totalorder %s27, 0
      %p258 = por %p256, %p257
      %p259 = scmp.ne.s32.totalorder %s247, %s248
      %p260 = scmp.eq.s32.totalorder %s28, 1
      %p261 = por %p259, %p260
      %p263 = scmp.ne.s32.totalorder %s248, %s262
      %p264 = scmp.eq.s32.totalorder %s28, 0
      %p265 = por %p263, %p264
      %s267 = sadd.s32 %s266, 1
      %p270 = scmp.eq.s32.totalorder %s22, 1
      %p271 = scmp.ne.s32.totalorder %s266, %s268
      %p272 = scmp.eq.s32.totalorder %s22, 0
      %p273 = por %p271, %p272
      %p274 = scmp.ne.s32.totalorder %s266, %s268
      %p275 = scmp.eq.s32.totalorder %s27, 1
      %p276 = por %p274, %p275
      %p277 = scmp.ne.s32.totalorder %s268, %s269
      %p278 = scmp.eq.s32.totalorder %s27, 0
      %p279 = por %p277, %p278
      %p280 = scmp.ne.s32.totalorder %s268, %s269
      %p281 = scmp.eq.s32.totalorder %s28, 1
      %p282 = por %p280, %p281
      %p284 = scmp.ne.s32.totalorder %s269, %s283
      %p285 = scmp.eq.s32.totalorder %s28, 0
      %p286 = por %p284, %p285
      %s288 = sadd.s32 %s287, 1
      %p291 = scmp.eq.s32.totalorder %s22, 1
      %p292 = scmp.ne.s32.totalorder %s287, %s289
      %p293 = scmp.eq.s32.totalorder %s22, 0
      %p294 = por %p292, %p293
      %p295 = scmp.ne.s32.totalorder %s287, %s289
      %p296 = scmp.eq.s32.totalorder %s27, 1
      %p297 = por %p295, %p296
      %p298 = scmp.ne.s32.totalorder %s289, %s290
      %p299 = scmp.eq.s32.totalorder %s27, 0
      %p300 = por %p298, %p299
      %p301 = scmp.ne.s32.totalorder %s289, %s290
      %p302 = scmp.eq.s32.totalorder %s28, 1
      %p303 = por %p301, %p302
      %p305 = scmp.ne.s32.totalorder %s290, %s304
      %p306 = scmp.eq.s32.totalorder %s28, 0
      %p307 = por %p305, %p306
      %s308 = ssub.s32 %s22, %s29
      %p309 = scmp.eq.s32.totalorder %s308, 0
      %s311 = sadd.s32 %s310, 1
      %s312 = scalar_select %p309, %s310, %s311
      %p315 = pneg %p309
      %p316 = scmp.eq.s32.totalorder %s22, 1
      %p317 = por %p315, %p316
      %p318 = scmp.ne.s32.totalorder %s310, %s313
      %p319 = scmp.eq.s32.totalorder %s22, 0
      %p320 = por %p318, %p319
      %p321 = scmp.ne.s32.totalorder %s310, %s313
      %p322 = scmp.eq.s32.totalorder %s27, 1
      %p323 = por %p321, %p322
      %p324 = scmp.ne.s32.totalorder %s313, %s314
      %p325 = scmp.eq.s32.totalorder %s27, 0
      %p326 = por %p324, %p325
      %p327 = scmp.ne.s32.totalorder %s313, %s314
      %p328 = scmp.eq.s32.totalorder %s28, 1
      %p329 = por %p327, %p328
      %p331 = scmp.ne.s32.totalorder %s314, %s330
      %p332 = scmp.eq.s32.totalorder %s28, 0
      %p333 = por %p331, %p332
      %p334 = scmp.le.s32.totalorder 1, %s22
      %p335 = scmp.lt.s32.totalorder %s22, 3
      %p336 = pnand %p334, %p335
      %p337 = pneg %p336
      // Predicated region
      $region9: #{net_forward.1} parent=5 // pred_check
        _
      $region10: #{net_forward.1} parent=5 // pred_check_branch
        %339 = sbr.rel (%p336) target = $region12
      $region11: #{net_forward.1} parent=5 // pred_region
        %s340 = ssub.s32 %s22, 1
        // Predicated region
        $region13: #{net_forward.1} parent=11 // pred_check
          %p341 = pneg %p69
        $region14: #{net_forward.1} parent=11 // pred_check_branch
          %343 = sbr.rel (%p341) target = $region16
        $region15: #{net_forward.1} parent=11 // pred_region
          _
        $region16: #{net_forward.1} parent=11 // pred_fallthru
          _
        // Predicated region
        $region17: #{net_forward.1} parent=11 // pred_check
          %p344 = pneg %p90
        $region18: #{net_forward.1} parent=11 // pred_check_branch
          %346 = sbr.rel (%p344) target = $region20
        $region19: #{net_forward.1} parent=11 // pred_region
          _
        $region20: #{net_forward.1} parent=11 // pred_fallthru
          _
        // Predicated region
        $region21: #{net_forward.1} parent=11 // pred_check
          %p347 = pneg %p111
        $region22: #{net_forward.1} parent=11 // pred_check_branch
          %349 = sbr.rel (%p347) target = $region24
        $region23: #{net_forward.1} parent=11 // pred_region
          _
        $region24: #{net_forward.1} parent=11 // pred_fallthru
          _
        // Predicated region
        $region25: #{net_forward.1} parent=11 // pred_check
          %p350 = pneg %p132
        $region26: #{net_forward.1} parent=11 // pred_check_branch
          %352 = sbr.rel (%p350) target = $region28
        $region27: #{net_forward.1} parent=11 // pred_region
          _
        $region28: #{net_forward.1} parent=11 // pred_fallthru
          _
        // Predicated region
        $region29: #{net_forward.1} parent=11 // pred_check
          %p353 = pneg %p153
        $region30: #{net_forward.1} parent=11 // pred_check_branch
          %355 = sbr.rel (%p353) target = $region32
        $region31: #{net_forward.1} parent=11 // pred_region
          _
        $region32: #{net_forward.1} parent=11 // pred_fallthru
          _
        // Predicated region
        $region33: #{net_forward.1} parent=11 // pred_check
          %p356 = pneg %p174
        $region34: #{net_forward.1} parent=11 // pred_check_branch
          %358 = sbr.rel (%p356) target = $region36
        $region35: #{net_forward.1} parent=11 // pred_region
          _
        $region36: #{net_forward.1} parent=11 // pred_fallthru
          _
        // Predicated region
        $region37: #{net_forward.1} parent=11 // pred_check
          %p359 = pneg %p195
        $region38: #{net_forward.1} parent=11 // pred_check_branch
          %361 = sbr.rel (%p359) target = $region40
        $region39: #{net_forward.1} parent=11 // pred_region
          _
        $region40: #{net_forward.1} parent=11 // pred_fallthru
          _
        // Predicated region
        $region41: #{net_forward.1} parent=11 // pred_check
          %p362 = pneg %p216
        $region42: #{net_forward.1} parent=11 // pred_check_branch
          %364 = sbr.rel (%p362) target = $region44
        $region43: #{net_forward.1} parent=11 // pred_region
          _
        $region44: #{net_forward.1} parent=11 // pred_fallthru
          _
        // Predicated region
        $region45: #{net_forward.1} parent=11 // pred_check
          %p365 = pneg %p237
        $region46: #{net_forward.1} parent=11 // pred_check_branch
          %367 = sbr.rel (%p365) target = $region48
        $region47: #{net_forward.1} parent=11 // pred_region
          _
        $region48: #{net_forward.1} parent=11 // pred_fallthru
          _
        // Predicated region
        $region49: #{net_forward.1} parent=11 // pred_check
          %p368 = pneg %p258
        $region50: #{net_forward.1} parent=11 // pred_check_branch
          %370 = sbr.rel (%p368) target = $region52
        $region51: #{net_forward.1} parent=11 // pred_region
          _
        $region52: #{net_forward.1} parent=11 // pred_fallthru
          _
        // Predicated region
        $region53: #{net_forward.1} parent=11 // pred_check
          %p371 = pneg %p279
        $region54: #{net_forward.1} parent=11 // pred_check_branch
          %373 = sbr.rel (%p371) target = $region56
        $region55: #{net_forward.1} parent=11 // pred_region
          _
        $region56: #{net_forward.1} parent=11 // pred_fallthru
          _
        // Predicated region
        $region57: #{net_forward.1} parent=11 // pred_check
          %p374 = pneg %p300
        $region58: #{net_forward.1} parent=11 // pred_check_branch
          %376 = sbr.rel (%p374) target = $region60
        $region59: #{net_forward.1} parent=11 // pred_region
          _
        $region60: #{net_forward.1} parent=11 // pred_fallthru
          _
      $region12: #{net_forward.1} parent=5 // pred_fallthru
        _
      %p377 = scmp.lt.s32.totalorder %s22, 2
      // Predicated region
      $region61: #{net_forward.1} parent=5 // pred_check
        %p378 = pneg %p377
      $region62: #{net_forward.1} parent=5 // pred_check_branch
        %380 = sbr.rel (%p378) target = $region64
      $region63: #{net_forward.1} parent=5 // pred_region
        // Predicated region
        $region65: #{net_forward.1} parent=63 // pred_check
          %p381 = pneg %p42
        $region66: #{net_forward.1} parent=63 // pred_check_branch
          %383 = sbr.rel (%p381) target = $region68
        $region67: #{net_forward.1} parent=63 // pred_region
          %p384 = scmp.lt.s32.totalorder %s22, 1
          %s385 = scalar_select %p384, %s22, 1
          %s386 = smul.addr %s385, 9
          %s387 = scalar_lea.vmem %s0, %s386
        $region68: #{net_forward.1} parent=63 // pred_fallthru
          _
      $region64: #{net_forward.1} parent=5 // pred_fallthru
        _
      %p388 = scmp.le.s32.totalorder 1, %s22
      %p389 = scmp.lt.s32.totalorder %s22, 3
      %p390 = pnand %p388, %p389
      %p391 = pneg %p390
      // Predicated region
      $region69: #{net_forward.1} parent=5 // pred_check
        _
      $region70: #{net_forward.1} parent=5 // pred_check_branch
        %393 = sbr.rel (%p390) target = $region72
      $region71: #{net_forward.1} parent=5 // pred_region
        %s394 = ssub.s32 %s22, 1
        %p395 = scmp.lt.s32.totalorder %s27, 1
        %s396 = scalar_select %p395, %s27, 1
        %s397 = smul.addr %s396, 9
        %s398 = scalar_lea.vmem %s0, %s397
        %p399 = pneg %p48
        %p400 = pneg %p45
        %p401 = pneg %p69
        %p402 = pneg %p66
        %p403 = pneg %p90
        %p404 = pneg %p87
        %p405 = pneg %p111
        %p406 = pneg %p108
        %p407 = pneg %p132
        %p408 = pneg %p129
        %p409 = pneg %p153
        %p410 = pneg %p150
        %p411 = pneg %p174
        %p412 = pneg %p171
        %p413 = pneg %p195
        %p414 = pneg %p192
        %p415 = pneg %p216
        %p416 = pneg %p213
        %p417 = pneg %p237
        %p418 = pneg %p234
        %p419 = pneg %p258
        %p420 = pneg %p255
        %p421 = pneg %p279
        %p422 = pneg %p276
        %p423 = pneg %p300
        %p424 = pneg %p297
        %p425 = pneg %p326
        %p426 = pneg %p323
        %s427 = sand.u32 %s313, 1
        %s428 = scalar_lea.sflag [#allocation3], %s427
        %s429 = sand.u32 %s313, 1
        %s430 = scalar_lea.vmem [#allocation2], %s429
        %p431 = scmp.lt.s32.totalorder %s27, 1
        %s432 = scalar_select %p431, %s27, 1
        %s433 = smul.addr %s432, 9
        %s434 = scalar_lea.vmem %s0, %s433
        %v435 = vld [vmem:[%s434] sm:$0xff]
        %v436 = vld [vmem:[%s434 + $0x8] sm:$0x1]
        %v437 = vld [vmem:[%s1] sm:$0x3f]
        %439 = vset.pattern.permute.xlu0 0
        %440 = vperm.xlu0 %439, %v437
        %v441 = vpop.permute.xlu0 %440
        %v444 = vlaneseq
        %v445 = vshrl.u32 %v444, 7
        %v446 = vsub.s32 0, %v445
        %v447 = vrot.slane %v435, %v446
        %v448 = vlaneseq
        %v449 = vshrl.u32 %v448, 7
        %v450 = vsub.s32 1, %v449
        %v451 = vrot.slane %v435, %v450
        %v452 = vlaneseq
        %v453 = vshrl.u32 %v452, 7
        %v454 = vsub.s32 2, %v453
        %v455 = vrot.slane %v435, %v454
        %v456 = vlaneseq
        %v457 = vshrl.u32 %v456, 7
        %v458 = vsub.s32 3, %v457
        %v459 = vrot.slane %v435, %v458
        %v460 = vlaneseq
        %v461 = vshrl.u32 %v460, 7
        %v462 = vsub.s32 4, %v461
        %v463 = vrot.slane %v435, %v462
        %v464 = vlaneseq
        %v465 = vshrl.u32 %v464, 7
        %v466 = vsub.s32 5, %v465
        %v467 = vrot.slane %v435, %v466
        %v468 = vlaneseq
        %v469 = vshrl.u32 %v468, 7
        %v470 = vsub.s32 6, %v469
        %v471 = vrot.slane %v435, %v470
        %v472 = vlaneseq
        %v473 = vshrl.u32 %v472, 7
        %v474 = vsub.s32 7, %v473
        %v475 = vrot.slane %v435, %v474
        %v484 = vmul.f32 %v441, %v447
        %v485 = vmul.f32 %v441, %v451
        %v486 = vmul.f32 %v441, %v455
        %v487 = vmul.f32 %v441, %v459
        %v488 = vmul.f32 %v441, %v463
        %v489 = vmul.f32 %v441, %v467
        %v490 = vmul.f32 %v441, %v471
        %v491 = vmul.f32 %v441, %v475
        %492 = vset.pattern.permute.xlu0 1
        %493 = vperm.xlu0 %492, %v437
        %v494 = vpop.permute.xlu0 %493
        %v497 = vlaneseq
        %v498 = vshrl.u32 %v497, 7
        %v499 = vsub.s32 0, %v498
        %v500 = vrot.slane %v436, %v499
        %v502 = vmul.f32 %v494, %v447
        %v503 = vmul.f32 %v494, %v451
        %v504 = vmul.f32 %v494, %v455
        %v505 = vmul.f32 %v494, %v459
        %v506 = vmul.f32 %v494, %v463
        %v507 = vmul.f32 %v494, %v467
        %v508 = vmul.f32 %v494, %v471
        %v509 = vmul.f32 %v494, %v475
        %v510 = vmul.f32 %v494, %v500
        %520 = vrot.lane.b32.xlu0 %v502, 127
        %v521 = vpop.permute.xlu0 %520
        %522 = vrot.lane.b32.xlu0 %v503, 127
        %v523 = vpop.permute.xlu0 %522
        %524 = vrot.lane.b32.xlu0 %v504, 127
        %v525 = vpop.permute.xlu0 %524
        %526 = vrot.lane.b32.xlu0 %v505, 127
        %v527 = vpop.permute.xlu0 %526
        %528 = vrot.lane.b32.xlu0 %v506, 127
        %v529 = vpop.permute.xlu0 %528
        %530 = vrot.lane.b32.xlu0 %v507, 127
        %v531 = vpop.permute.xlu0 %530
        %532 = vrot.lane.b32.xlu0 %v508, 127
        %v533 = vpop.permute.xlu0 %532
        %534 = vrot.lane.b32.xlu0 %v509, 127
        %v535 = vpop.permute.xlu0 %534
        %536 = vrot.lane.b32.xlu0 %v510, 127
        %v537 = vpop.permute.xlu0 %536
        %vm538 = vcmask 1039360
        %v539 = vsel %vm538, %v521, %v523
        %v540 = vsel %vm538, %v523, %v525
        %v541 = vsel %vm538, %v525, %v527
        %v542 = vsel %vm538, %v527, %v529
        %v543 = vsel %vm538, %v529, %v531
        %v544 = vsel %vm538, %v531, %v533
        %v545 = vsel %vm538, %v533, %v535
        %v546 = vsel %vm538, %v535, %v537
        %v555 = vadd.f32 %v484, %v539
        %v556 = vadd.f32 %v485, %v540
        %v557 = vadd.f32 %v486, %v541
        %v558 = vadd.f32 %v487, %v542
        %v559 = vadd.f32 %v488, %v543
        %v560 = vadd.f32 %v489, %v544
        %v561 = vadd.f32 %v490, %v545
        %v562 = vadd.f32 %v491, %v546
        %563 = vset.pattern.permute.xlu0 2
        %564 = vperm.xlu0 %563, %v437
        %v565 = vpop.permute.xlu0 %564
        %v567 = vmul.f32 %v565, %v447
        %v568 = vmul.f32 %v565, %v451
        %v569 = vmul.f32 %v565, %v455
        %v570 = vmul.f32 %v565, %v459
        %v571 = vmul.f32 %v565, %v463
        %v572 = vmul.f32 %v565, %v467
        %v573 = vmul.f32 %v565, %v471
        %v574 = vmul.f32 %v565, %v475
        %v575 = vmul.f32 %v565, %v500
        %585 = vrot.lane.b32.xlu0 %v567, 126
        %v586 = vpop.permute.xlu0 %585
        %587 = vrot.lane.b32.xlu0 %v568, 126
        %v588 = vpop.permute.xlu0 %587
        %589 = vrot.lane.b32.xlu0 %v569, 126
        %v590 = vpop.permute.xlu0 %589
        %591 = vrot.lane.b32.xlu0 %v570, 126
        %v592 = vpop.permute.xlu0 %591
        %593 = vrot.lane.b32.xlu0 %v571, 126
        %v594 = vpop.permute.xlu0 %593
        %595 = vrot.lane.b32.xlu0 %v572, 126
        %v596 = vpop.permute.xlu0 %595
        %597 = vrot.lane.b32.xlu0 %v573, 126
        %v598 = vpop.permute.xlu0 %597
        %599 = vrot.lane.b32.xlu0 %v574, 126
        %v600 = vpop.permute.xlu0 %599
        %601 = vrot.lane.b32.xlu0 %v575, 126
        %v602 = vpop.permute.xlu0 %601
        %vm603 = vcmask 1031168
        %v604 = vsel %vm603, %v586, %v588
        %v605 = vsel %vm603, %v588, %v590
        %v606 = vsel %vm603, %v590, %v592
        %v607 = vsel %vm603, %v592, %v594
        %v608 = vsel %vm603, %v594, %v596
        %v609 = vsel %vm603, %v596, %v598
        %v610 = vsel %vm603, %v598, %v600
        %v611 = vsel %vm603, %v600, %v602
        %v620 = vadd.f32 %v555, %v604
        %v621 = vadd.f32 %v556, %v605
        %v622 = vadd.f32 %v557, %v606
        %v623 = vadd.f32 %v558, %v607
        %v624 = vadd.f32 %v559, %v608
        %v625 = vadd.f32 %v560, %v609
        %v626 = vadd.f32 %v561, %v610
        %v627 = vadd.f32 %v562, %v611
        %628 = vset.pattern.permute.xlu0 3
        %629 = vperm.xlu0 %628, %v437
        %v630 = vpop.permute.xlu0 %629
        %v632 = vmul.f32 %v630, %v447
        %v633 = vmul.f32 %v630, %v451
        %v634 = vmul.f32 %v630, %v455
        %v635 = vmul.f32 %v630, %v459
        %v636 = vmul.f32 %v630, %v463
        %v637 = vmul.f32 %v630, %v467
        %v638 = vmul.f32 %v630, %v471
        %v639 = vmul.f32 %v630, %v475
        %v640 = vmul.f32 %v630, %v500
        %650 = vrot.lane.b32.xlu0 %v632, 96
        %v651 = vpop.permute.xlu0 %650
        %652 = vrot.lane.b32.xlu0 %v633, 96
        %v653 = vpop.permute.xlu0 %652
        %654 = vrot.lane.b32.xlu0 %v634, 96
        %v655 = vpop.permute.xlu0 %654
        %656 = vrot.lane.b32.xlu0 %v635, 96
        %v657 = vpop.permute.xlu0 %656
        %658 = vrot.lane.b32.xlu0 %v636, 96
        %v659 = vpop.permute.xlu0 %658
        %660 = vrot.lane.b32.xlu0 %v637, 96
        %v661 = vpop.permute.xlu0 %660
        %662 = vrot.lane.b32.xlu0 %v638, 96
        %v663 = vpop.permute.xlu0 %662
        %664 = vrot.lane.b32.xlu0 %v639, 96
        %v665 = vpop.permute.xlu0 %664
        %666 = vrot.lane.b32.xlu0 %v640, 96
        %v667 = vpop.permute.xlu0 %666
        %vm668 = vcmask 785408
        %v669 = vsel %vm668, %v651, %v653
        %v670 = vsel %vm668, %v653, %v655
        %v671 = vsel %vm668, %v655, %v657
        %v672 = vsel %vm668, %v657, %v659
        %v673 = vsel %vm668, %v659, %v661
        %v674 = vsel %vm668, %v661, %v663
        %v675 = vsel %vm668, %v663, %v665
        %v676 = vsel %vm668, %v665, %v667
        %v685 = vadd.f32 %v620, %v669
        %v686 = vadd.f32 %v621, %v670
        %v687 = vadd.f32 %v622, %v671
        %v688 = vadd.f32 %v623, %v672
        %v689 = vadd.f32 %v624, %v673
        %v690 = vadd.f32 %v625, %v674
        %v691 = vadd.f32 %v626, %v675
        %v692 = vadd.f32 %v627, %v676
        %693 = vset.pattern.permute.xlu0 4
        %694 = vperm.xlu0 %693, %v437
        %v695 = vpop.permute.xlu0 %694
        %v697 = vmul.f32 %v695, %v447
        %v698 = vmul.f32 %v695, %v451
        %v699 = vmul.f32 %v695, %v455
        %v700 = vmul.f32 %v695, %v459
        %v701 = vmul.f32 %v695, %v463
        %v702 = vmul.f32 %v695, %v467
        %v703 = vmul.f32 %v695, %v471
        %v704 = vmul.f32 %v695, %v475
        %v705 = vmul.f32 %v695, %v500
        %715 = vrot.lane.b32.xlu0 %v697, 95
        %v716 = vpop.permute.xlu0 %715
        %717 = vrot.lane.b32.xlu0 %v698, 95
        %v718 = vpop.permute.xlu0 %717
        %719 = vrot.lane.b32.xlu0 %v699, 95
        %v720 = vpop.permute.xlu0 %719
        %721 = vrot.lane.b32.xlu0 %v700, 95
        %v722 = vpop.permute.xlu0 %721
        %723 = vrot.lane.b32.xlu0 %v701, 95
        %v724 = vpop.permute.xlu0 %723
        %725 = vrot.lane.b32.xlu0 %v702, 95
        %v726 = vpop.permute.xlu0 %725
        %727 = vrot.lane.b32.xlu0 %v703, 95
        %v728 = vpop.permute.xlu0 %727
        %729 = vrot.lane.b32.xlu0 %v704, 95
        %v730 = vpop.permute.xlu0 %729
        %731 = vrot.lane.b32.xlu0 %v705, 95
        %v732 = vpop.permute.xlu0 %731
        %vm733 = vcmask 777216
        %v734 = vsel %vm733, %v716, %v718
        %v735 = vsel %vm733, %v718, %v720
        %v736 = vsel %vm733, %v720, %v722
        %v737 = vsel %vm733, %v722, %v724
        %v738 = vsel %vm733, %v724, %v726
        %v739 = vsel %vm733, %v726, %v728
        %v740 = vsel %vm733, %v728, %v730
        %v741 = vsel %vm733, %v730, %v732
        %v750 = vadd.f32 %v685, %v734
        %v751 = vadd.f32 %v686, %v735
        %v752 = vadd.f32 %v687, %v736
        %v753 = vadd.f32 %v688, %v737
        %v754 = vadd.f32 %v689, %v738
        %v755 = vadd.f32 %v690, %v739
        %v756 = vadd.f32 %v691, %v740
        %v757 = vadd.f32 %v692, %v741
        %758 = vset.pattern.permute.xlu0 5
        %759 = vperm.xlu0 %758, %v437
        %v760 = vpop.permute.xlu0 %759
        %v762 = vmul.f32 %v760, %v447
        %v763 = vmul.f32 %v760, %v451
        %v764 = vmul.f32 %v760, %v455
        %v765 = vmul.f32 %v760, %v459
        %v766 = vmul.f32 %v760, %v463
        %v767 = vmul.f32 %v760, %v467
        %v768 = vmul.f32 %v760, %v471
        %v769 = vmul.f32 %v760, %v475
        %v770 = vmul.f32 %v760, %v500
        %780 = vrot.lane.b32.xlu0 %v762, 94
        %v781 = vpop.permute.xlu0 %780
        %782 = vrot.lane.b32.xlu0 %v763, 94
        %v783 = vpop.permute.xlu0 %782
        %784 = vrot.lane.b32.xlu0 %v764, 94
        %v785 = vpop.permute.xlu0 %784
        %786 = vrot.lane.b32.xlu0 %v765, 94
        %v787 = vpop.permute.xlu0 %786
        %788 = vrot.lane.b32.xlu0 %v766, 94
        %v789 = vpop.permute.xlu0 %788
        %790 = vrot.lane.b32.xlu0 %v767, 94
        %v791 = vpop.permute.xlu0 %790
        %792 = vrot.lane.b32.xlu0 %v768, 94
        %v793 = vpop.permute.xlu0 %792
        %794 = vrot.lane.b32.xlu0 %v769, 94
        %v795 = vpop.permute.xlu0 %794
        %796 = vrot.lane.b32.xlu0 %v770, 94
        %v797 = vpop.permute.xlu0 %796
        %vm798 = vcmask 769024
        %v799 = vsel %vm798, %v781, %v783
        %v800 = vsel %vm798, %v783, %v785
        %v801 = vsel %vm798, %v785, %v787
        %v802 = vsel %vm798, %v787, %v789
        %v803 = vsel %vm798, %v789, %v791
        %v804 = vsel %vm798, %v791, %v793
        %v805 = vsel %vm798, %v793, %v795
        %v806 = vsel %vm798, %v795, %v797
        %v815 = vadd.f32 %v750, %v799
        %v816 = vadd.f32 %v751, %v800
        %v817 = vadd.f32 %v752, %v801
        %v818 = vadd.f32 %v753, %v802
        %v819 = vadd.f32 %v754, %v803
        %v820 = vadd.f32 %v755, %v804
        %v821 = vadd.f32 %v756, %v805
        %v822 = vadd.f32 %v757, %v806
        %823 = vset.pattern.permute.xlu0 6
        %824 = vperm.xlu0 %823, %v437
        %v825 = vpop.permute.xlu0 %824
        %v827 = vmul.f32 %v825, %v447
        %v828 = vmul.f32 %v825, %v451
        %v829 = vmul.f32 %v825, %v455
        %v830 = vmul.f32 %v825, %v459
        %v831 = vmul.f32 %v825, %v463
        %v832 = vmul.f32 %v825, %v467
        %v833 = vmul.f32 %v825, %v471
        %v834 = vmul.f32 %v825, %v475
        %v835 = vmul.f32 %v825, %v500
        %845 = vrot.lane.b32.xlu0 %v827, 64
        %v846 = vpop.permute.xlu0 %845
        %847 = vrot.lane.b32.xlu0 %v828, 64
        %v848 = vpop.permute.xlu0 %847
        %849 = vrot.lane.b32.xlu0 %v829, 64
        %v850 = vpop.permute.xlu0 %849
        %851 = vrot.lane.b32.xlu0 %v830, 64
        %v852 = vpop.permute.xlu0 %851
        %853 = vrot.lane.b32.xlu0 %v831, 64
        %v854 = vpop.permute.xlu0 %853
        %855 = vrot.lane.b32.xlu0 %v832, 64
        %v856 = vpop.permute.xlu0 %855
        %857 = vrot.lane.b32.xlu0 %v833, 64
        %v858 = vpop.permute.xlu0 %857
        %859 = vrot.lane.b32.xlu0 %v834, 64
        %v860 = vpop.permute.xlu0 %859
        %861 = vrot.lane.b32.xlu0 %v835, 64
        %v862 = vpop.permute.xlu0 %861
        %vm863 = vcmask 523264
        %v864 = vsel %vm863, %v846, %v848
        %v865 = vsel %vm863, %v848, %v850
        %v866 = vsel %vm863, %v850, %v852
        %v867 = vsel %vm863, %v852, %v854
        %v868 = vsel %vm863, %v854, %v856
        %v869 = vsel %vm863, %v856, %v858
        %v870 = vsel %vm863, %v858, %v860
        %v871 = vsel %vm863, %v860, %v862
        %v880 = vadd.f32 %v815, %v864
        %v881 = vadd.f32 %v816, %v865
        %v882 = vadd.f32 %v817, %v866
        %v883 = vadd.f32 %v818, %v867
        %v884 = vadd.f32 %v819, %v868
        %v885 = vadd.f32 %v820, %v869
        %v886 = vadd.f32 %v821, %v870
        %v887 = vadd.f32 %v822, %v871
        %888 = vset.pattern.permute.xlu0 7
        %889 = vperm.xlu0 %888, %v437
        %v890 = vpop.permute.xlu0 %889
        %v892 = vmul.f32 %v890, %v447
        %v893 = vmul.f32 %v890, %v451
        %v894 = vmul.f32 %v890, %v455
        %v895 = vmul.f32 %v890, %v459
        %v896 = vmul.f32 %v890, %v463
        %v897 = vmul.f32 %v890, %v467
        %v898 = vmul.f32 %v890, %v471
        %v899 = vmul.f32 %v890, %v475
        %v900 = vmul.f32 %v890, %v500
        %910 = vrot.lane.b32.xlu0 %v892, 63
        %v911 = vpop.permute.xlu0 %910
        %912 = vrot.lane.b32.xlu0 %v893, 63
        %v913 = vpop.permute.xlu0 %912
        %914 = vrot.lane.b32.xlu0 %v894, 63
        %v915 = vpop.permute.xlu0 %914
        %916 = vrot.lane.b32.xlu0 %v895, 63
        %v917 = vpop.permute.xlu0 %916
        %918 = vrot.lane.b32.xlu0 %v896, 63
        %v919 = vpop.permute.xlu0 %918
        %920 = vrot.lane.b32.xlu0 %v897, 63
        %v921 = vpop.permute.xlu0 %920
        %922 = vrot.lane.b32.xlu0 %v898, 63
        %v923 = vpop.permute.xlu0 %922
        %924 = vrot.lane.b32.xlu0 %v899, 63
        %v925 = vpop.permute.xlu0 %924
        %926 = vrot.lane.b32.xlu0 %v900, 63
        %v927 = vpop.permute.xlu0 %926
        %vm928 = vcmask 515072
        %v929 = vsel %vm928, %v911, %v913
        %v930 = vsel %vm928, %v913, %v915
        %v931 = vsel %vm928, %v915, %v917
        %v932 = vsel %vm928, %v917, %v919
        %v933 = vsel %vm928, %v919, %v921
        %v934 = vsel %vm928, %v921, %v923
        %v935 = vsel %vm928, %v923, %v925
        %v936 = vsel %vm928, %v925, %v927
        %v945 = vadd.f32 %v880, %v929
        %v946 = vadd.f32 %v881, %v930
        %v947 = vadd.f32 %v882, %v931
        %v948 = vadd.f32 %v883, %v932
        %v949 = vadd.f32 %v884, %v933
        %v950 = vadd.f32 %v885, %v934
        %v951 = vadd.f32 %v886, %v935
        %v952 = vadd.f32 %v887, %v936
        %953 = vset.pattern.permute.xlu0 8
        %954 = vperm.xlu0 %953, %v437
        %v955 = vpop.permute.xlu0 %954
        %v957 = vmul.f32 %v955, %v447
        %v958 = vmul.f32 %v955, %v451
        %v959 = vmul.f32 %v955, %v455
        %v960 = vmul.f32 %v955, %v459
        %v961 = vmul.f32 %v955, %v463
        %v962 = vmul.f32 %v955, %v467
        %v963 = vmul.f32 %v955, %v471
        %v964 = vmul.f32 %v955, %v475
        %v965 = vmul.f32 %v955, %v500
        %975 = vrot.lane.b32.xlu0 %v957, 62
        %v976 = vpop.permute.xlu0 %975
        %977 = vrot.lane.b32.xlu0 %v958, 62
        %v978 = vpop.permute.xlu0 %977
        %979 = vrot.lane.b32.xlu0 %v959, 62
        %v980 = vpop.permute.xlu0 %979
        %981 = vrot.lane.b32.xlu0 %v960, 62
        %v982 = vpop.permute.xlu0 %981
        %983 = vrot.lane.b32.xlu0 %v961, 62
        %v984 = vpop.permute.xlu0 %983
        %985 = vrot.lane.b32.xlu0 %v962, 62
        %v986 = vpop.permute.xlu0 %985
        %987 = vrot.lane.b32.xlu0 %v963, 62
        %v988 = vpop.permute.xlu0 %987
        %989 = vrot.lane.b32.xlu0 %v964, 62
        %v990 = vpop.permute.xlu0 %989
        %991 = vrot.lane.b32.xlu0 %v965, 62
        %v992 = vpop.permute.xlu0 %991
        %vm993 = vcmask 506880
        %v994 = vsel %vm993, %v976, %v978
        %v995 = vsel %vm993, %v978, %v980
        %v996 = vsel %vm993, %v980, %v982
        %v997 = vsel %vm993, %v982, %v984
        %v998 = vsel %vm993, %v984, %v986
        %v999 = vsel %vm993, %v986, %v988
        %v1000 = vsel %vm993, %v988, %v990
        %v1001 = vsel %vm993, %v990, %v992
        %v1010 = vadd.f32 %v945, %v994
        %v1011 = vadd.f32 %v946, %v995
        %v1012 = vadd.f32 %v947, %v996
        %v1013 = vadd.f32 %v948, %v997
        %v1014 = vadd.f32 %v949, %v998
        %v1015 = vadd.f32 %v950, %v999
        %v1016 = vadd.f32 %v951, %v1000
        %v1017 = vadd.f32 %v952, %v1001
        %v1018 = vld [vmem:[%s2] sm:$0x3f]
        %1020 = vset.pattern.permute.xlu0 0
        %1021 = vperm.xlu0 %1020, %v1018
        %v1022 = vpop.permute.xlu0 %1021
        %v1024 = vadd.f32 %v1010, %v1022
        %v1025 = vadd.f32 %v1011, %v1022
        %v1026 = vadd.f32 %v1012, %v1022
        %v1027 = vadd.f32 %v1013, %v1022
        %v1028 = vadd.f32 %v1014, %v1022
        %v1029 = vadd.f32 %v1015, %v1022
        %v1030 = vadd.f32 %v1016, %v1022
        %v1031 = vadd.f32 %v1017, %v1022
        %v1032 = vmax.f32 %v1024, 0.0
        %v1033 = vmax.f32 %v1025, 0.0
        %v1034 = vmax.f32 %v1026, 0.0
        %v1035 = vmax.f32 %v1027, 0.0
        %v1036 = vmax.f32 %v1028, 0.0
        %v1037 = vmax.f32 %v1029, 0.0
        %v1038 = vmax.f32 %v1030, 0.0
        %v1039 = vmax.f32 %v1031, 0.0
        %1048 = vrot.lane.b32.xlu0 %v1032, 127
        %v1049 = vpop.permute.xlu0 %1048
        %1050 = vrot.lane.b32.xlu0 %v1033, 127
        %v1051 = vpop.permute.xlu0 %1050
        %1052 = vrot.lane.b32.xlu0 %v1034, 127
        %v1053 = vpop.permute.xlu0 %1052
        %1054 = vrot.lane.b32.xlu0 %v1035, 127
        %v1055 = vpop.permute.xlu0 %1054
        %1056 = vrot.lane.b32.xlu0 %v1036, 127
        %v1057 = vpop.permute.xlu0 %1056
        %1058 = vrot.lane.b32.xlu0 %v1037, 127
        %v1059 = vpop.permute.xlu0 %1058
        %1060 = vrot.lane.b32.xlu0 %v1038, 127
        %v1061 = vpop.permute.xlu0 %1060
        %1062 = vrot.lane.b32.xlu0 %v1039, 127
        %v1063 = vpop.permute.xlu0 %1062
        %v1064 = vsel %vm538, %v1049, %v1051
        %v1065 = vsel %vm538, %v1051, %v1053
        %v1066 = vsel %vm538, %v1053, %v1055
        %v1067 = vsel %vm538, %v1055, %v1057
        %v1068 = vsel %vm538, %v1057, %v1059
        %v1069 = vsel %vm538, %v1059, %v1061
        %v1070 = vsel %vm538, %v1061, %v1063
        %v1079 = vmax.f32 %v1032, %v1064
        %v1080 = vmax.f32 %v1033, %v1065
        %v1081 = vmax.f32 %v1034, %v1066
        %v1082 = vmax.f32 %v1035, %v1067
        %v1083 = vmax.f32 %v1036, %v1068
        %v1084 = vmax.f32 %v1037, %v1069
        %v1085 = vmax.f32 %v1038, %v1070
        %v1086 = vmax.f32 %v1039, %v1063
        %1095 = vrot.lane.b32.xlu0 %v1079, 96
        %v1096 = vpop.permute.xlu0 %1095
        %1097 = vrot.lane.b32.xlu0 %v1080, 96
        %v1098 = vpop.permute.xlu0 %1097
        %1099 = vrot.lane.b32.xlu0 %v1081, 96
        %v1100 = vpop.permute.xlu0 %1099
        %1101 = vrot.lane.b32.xlu0 %v1082, 96
        %v1102 = vpop.permute.xlu0 %1101
        %1103 = vrot.lane.b32.xlu0 %v1083, 96
        %v1104 = vpop.permute.xlu0 %1103
        %1105 = vrot.lane.b32.xlu0 %v1084, 96
        %v1106 = vpop.permute.xlu0 %1105
        %1107 = vrot.lane.b32.xlu0 %v1085, 96
        %v1108 = vpop.permute.xlu0 %1107
        %1109 = vrot.lane.b32.xlu0 %v1086, 96
        %v1110 = vpop.permute.xlu0 %1109
        %v1111 = vsel %vm668, %v1096, %v1098
        %v1112 = vsel %vm668, %v1098, %v1100
        %v1113 = vsel %vm668, %v1100, %v1102
        %v1114 = vsel %vm668, %v1102, %v1104
        %v1115 = vsel %vm668, %v1104, %v1106
        %v1116 = vsel %vm668, %v1106, %v1108
        %v1117 = vsel %vm668, %v1108, %v1110
        %v1126 = vmax.f32 %v1079, %v1111
        %v1127 = vmax.f32 %v1080, %v1112
        %v1128 = vmax.f32 %v1081, %v1113
        %v1129 = vmax.f32 %v1082, %v1114
        %v1130 = vmax.f32 %v1083, %v1115
        %v1131 = vmax.f32 %v1084, %v1116
        %v1132 = vmax.f32 %v1085, %v1117
        %v1133 = vmax.f32 %v1086, %v1110
        %v1134 = vld [vmem:[%s5] sm:$0xff]
        %v1135 = vld [vmem:[%s5 + $0x8] sm:$0xff]
        %v1136 = vld [vmem:[%s5 + $0x10] sm:$0xff]
        %v1137 = vld [vmem:[%s5 + $0x18] sm:$0xff]
        %v1138 = vld [vmem:[%s5 + $0x20] sm:$0xff]
        %v1139 = vld [vmem:[%s5 + $0x28] sm:$0xff]
        %v1140 = vld [vmem:[%s5 + $0x30] sm:$0xff]
        %v1141 = vld [vmem:[%s5 + $0x38] sm:$0xff]
        %v1142 = vld [vmem:[%s5 + $0x40] sm:$0xff]
        %v1143 = vld [vmem:[%s5 + $0x48] sm:$0xff]
        %v1144 = vld [vmem:[%s5 + $0x50] sm:$0xff]
        %v1145 = vld [vmem:[%s5 + $0x58] sm:$0xff]
        %v1146 = vld [vmem:[%s5 + $0x60] sm:$0xff]
        %v1147 = vld [vmem:[%s5 + $0x68] sm:$0xff]
        %v1148 = vld [vmem:[%s5 + $0x70] sm:$0xff]
        %v1149 = vld [vmem:[%s5 + $0x78] sm:$0xff]
        %v1150 = vld [vmem:[%s5 + $0x80] sm:$0xff]
        %v1151 = vld [vmem:[%s5 + $0x88] sm:$0xff]
        %v1152 = vld [vmem:[%s5 + $0x90] sm:$0xff]
        %v1153 = vld [vmem:[%s5 + $0x98] sm:$0xff]
        %v1154 = vld [vmem:[%s5 + $0xa0] sm:$0xff]
        %v1155 = vld [vmem:[%s5 + $0xa8] sm:$0xff]
        %v1156 = vld [vmem:[%s5 + $0xb0] sm:$0xff]
        %v1157 = vld [vmem:[%s5 + $0xb8] sm:$0xff]
        %v1158 = vld [vmem:[%s5 + $0xc0] sm:$0xff]
        %v1159 = vld [vmem:[%s5 + $0xc8] sm:$0xff]
        %v1160 = vld [vmem:[%s5 + $0xd0] sm:$0xff]
        %v1161 = vld [vmem:[%s5 + $0xd8] sm:$0xff]
        %v1162 = vld [vmem:[%s5 + $0xe0] sm:$0xff]
        %v1163 = vld [vmem:[%s5 + $0xe8] sm:$0xff]
        %v1164 = vld [vmem:[%s5 + $0xf0] sm:$0xff]
        %v1165 = vld [vmem:[%s5 + $0xf8] sm:$0xff]
        %v1166 = vld [vmem:[%s5 + $0x100] sm:$0xff]
        %v1167 = vld [vmem:[%s5 + $0x108] sm:$0xff]
        %v1168 = vld [vmem:[%s5 + $0x110] sm:$0xff]
        %v1169 = vld [vmem:[%s5 + $0x118] sm:$0xff]
        %v1170 = vld [vmem:[%s5 + $0x120] sm:$0xff]
        %v1171 = vld [vmem:[%s5 + $0x128] sm:$0xff]
        %v1172 = vld [vmem:[%s5 + $0x130] sm:$0xff]
        %v1173 = vld [vmem:[%s5 + $0x138] sm:$0xff]
        %v1174 = vld [vmem:[%s5 + $0x140] sm:$0xff]
        %v1175 = vld [vmem:[%s5 + $0x148] sm:$0xff]
        %v1176 = vld [vmem:[%s5 + $0x150] sm:$0xff]
        %v1177 = vld [vmem:[%s5 + $0x158] sm:$0xff]
        %v1178 = vld [vmem:[%s5 + $0x160] sm:$0xff]
        %v1179 = vld [vmem:[%s5 + $0x168] sm:$0xff]
        %v1180 = vld [vmem:[%s5 + $0x170] sm:$0xff]
        %v1181 = vld [vmem:[%s5 + $0x178] sm:$0xff]
        %v1182 = vld [vmem:[%s5 + $0x180] sm:$0xff]
        %v1183 = vld [vmem:[%s5 + $0x188] sm:$0xff]
        %v1184 = vld [vmem:[%s5 + $0x190] sm:$0xff]
        %v1185 = vld [vmem:[%s5 + $0x198] sm:$0xff]
        %v1186 = vld [vmem:[%s5 + $0x1a0] sm:$0xff]
        %v1187 = vld [vmem:[%s5 + $0x1a8] sm:$0xff]
        %v1188 = vld [vmem:[%s5 + $0x1b0] sm:$0xff]
        %v1189 = vld [vmem:[%s5 + $0x1b8] sm:$0xff]
        %v1190 = vld [vmem:[%s5 + $0x1c0] sm:$0xff]
        %v1191 = vld [vmem:[%s5 + $0x1c8] sm:$0xff]
        %v1192 = vld [vmem:[%s5 + $0x1d0] sm:$0xff]
        %v1193 = vld [vmem:[%s5 + $0x1d8] sm:$0xff]
        %v1194 = vld [vmem:[%s5 + $0x1e0] sm:$0xff]
        %v1195 = vld [vmem:[%s5 + $0x1e8] sm:$0xff]
        %v1196 = vld [vmem:[%s5 + $0x1f0] sm:$0xff]
        %v1197 = vld [vmem:[%s5 + $0x1f8] sm:$0xff]
        %v1198 = vld [vmem:[%s5 + $0x200] sm:$0xff]
        %v1199 = vld [vmem:[%s5 + $0x208] sm:$0xff]
        %v1200 = vld [vmem:[%s5 + $0x210] sm:$0xff]
        %v1201 = vld [vmem:[%s5 + $0x218] sm:$0xff]
        %v1202 = vld [vmem:[%s5 + $0x220] sm:$0xff]
        %v1203 = vld [vmem:[%s5 + $0x228] sm:$0xff]
        %v1204 = vld [vmem:[%s5 + $0x230] sm:$0xff]
        %v1205 = vld [vmem:[%s5 + $0x238] sm:$0xff]
        %v1206 = vld [vmem:[%s5 + $0x240] sm:$0xff]
        %v1207 = vld [vmem:[%s5 + $0x248] sm:$0xff]
        %v1208 = vld [vmem:[%s5 + $0x250] sm:$0xff]
        %v1209 = vld [vmem:[%s5 + $0x258] sm:$0xff]
        %v1210 = vld [vmem:[%s5 + $0x260] sm:$0xff]
        %v1211 = vld [vmem:[%s5 + $0x268] sm:$0xff]
        %v1212 = vld [vmem:[%s5 + $0x270] sm:$0xff]
        %v1213 = vld [vmem:[%s5 + $0x278] sm:$0xff]
        %v1214 = vld [vmem:[%s5 + $0x280] sm:$0xff]
        %v1215 = vld [vmem:[%s5 + $0x288] sm:$0xff]
        %v1216 = vld [vmem:[%s5 + $0x290] sm:$0xff]
        %v1217 = vld [vmem:[%s5 + $0x298] sm:$0xff]
        %v1218 = vld [vmem:[%s5 + $0x2a0] sm:$0xff]
        %v1219 = vld [vmem:[%s5 + $0x2a8] sm:$0xff]
        %v1220 = vld [vmem:[%s5 + $0x2b0] sm:$0xff]
        %v1221 = vld [vmem:[%s5 + $0x2b8] sm:$0xff]
        %v1222 = vld [vmem:[%s5 + $0x2c0] sm:$0xff]
        %v1223 = vld [vmem:[%s5 + $0x2c8] sm:$0xff]
        %v1224 = vld [vmem:[%s5 + $0x2d0] sm:$0xff]
        %v1225 = vld [vmem:[%s5 + $0x2d8] sm:$0xff]
        %v1226 = vld [vmem:[%s5 + $0x2e0] sm:$0xff]
        %v1227 = vld [vmem:[%s5 + $0x2e8] sm:$0xff]
        %v1228 = vld [vmem:[%s5 + $0x2f0] sm:$0xff]
        %v1229 = vld [vmem:[%s5 + $0x2f8] sm:$0xff]
        %v1230 = vld [vmem:[%s5 + $0x300] sm:$0xff]
        %v1231 = vld [vmem:[%s5 + $0x308] sm:$0xff]
        %v1232 = vld [vmem:[%s5 + $0x310] sm:$0xff]
        %v1233 = vld [vmem:[%s5 + $0x318] sm:$0xff]
        %v1234 = vld [vmem:[%s5 + $0x320] sm:$0xff]
        %v1235 = vld [vmem:[%s5 + $0x328] sm:$0xff]
        %v1236 = vld [vmem:[%s5 + $0x330] sm:$0xff]
        %v1237 = vld [vmem:[%s5 + $0x338] sm:$0xff]
        %v1238 = vld [vmem:[%s5 + $0x340] sm:$0xff]
        %v1239 = vld [vmem:[%s5 + $0x348] sm:$0xff]
        %v1240 = vld [vmem:[%s5 + $0x350] sm:$0xff]
        %v1241 = vld [vmem:[%s5 + $0x358] sm:$0xff]
        %v1242 = vld [vmem:[%s5 + $0x360] sm:$0xff]
        %v1243 = vld [vmem:[%s5 + $0x368] sm:$0xff]
        %v1244 = vld [vmem:[%s5 + $0x370] sm:$0xff]
        %v1245 = vld [vmem:[%s5 + $0x378] sm:$0xff]
        %v1246 = vld [vmem:[%s5 + $0x380] sm:$0xff]
        %v1247 = vld [vmem:[%s5 + $0x388] sm:$0xff]
        %v1248 = vld [vmem:[%s5 + $0x390] sm:$0xff]
        %v1249 = vld [vmem:[%s5 + $0x398] sm:$0xff]
        %v1250 = vld [vmem:[%s5 + $0x3a0] sm:$0xff]
        %v1251 = vld [vmem:[%s5 + $0x3a8] sm:$0xff]
        %v1252 = vld [vmem:[%s5 + $0x3b0] sm:$0xff]
        %v1253 = vld [vmem:[%s5 + $0x3b8] sm:$0xff]
        %v1254 = vld [vmem:[%s5 + $0x3c0] sm:$0xff]
        %v1255 = vld [vmem:[%s5 + $0x3c8] sm:$0xff]
        %v1256 = vld [vmem:[%s5 + $0x3d0] sm:$0xff]
        %v1257 = vld [vmem:[%s5 + $0x3d8] sm:$0xff]
        %v1258 = vld [vmem:[%s5 + $0x3e0] sm:$0xff]
        %v1259 = vld [vmem:[%s5 + $0x3e8] sm:$0xff]
        %v1260 = vld [vmem:[%s5 + $0x3f0] sm:$0xff]
        %v1261 = vld [vmem:[%s5 + $0x3f8] sm:$0xff]
        %v1262 = vld [vmem:[%s5 + $0x400] sm:$0xff]
        %v1263 = vld [vmem:[%s5 + $0x408] sm:$0xff]
        %v1264 = vld [vmem:[%s5 + $0x410] sm:$0xff]
        %v1265 = vld [vmem:[%s5 + $0x418] sm:$0xff]
        %v1266 = vld [vmem:[%s5 + $0x420] sm:$0xff]
        %v1267 = vld [vmem:[%s5 + $0x428] sm:$0xff]
        %v1268 = vld [vmem:[%s5 + $0x430] sm:$0xff]
        %v1269 = vld [vmem:[%s5 + $0x438] sm:$0xff]
        %v1270 = vld [vmem:[%s5 + $0x440] sm:$0xff]
        %v1271 = vld [vmem:[%s5 + $0x448] sm:$0xff]
        %v1272 = vld [vmem:[%s5 + $0x450] sm:$0xff]
        %v1273 = vld [vmem:[%s5 + $0x458] sm:$0xff]
        %v1274 = vld [vmem:[%s5 + $0x460] sm:$0xff]
        %v1275 = vld [vmem:[%s5 + $0x468] sm:$0xff]
        %v1276 = vld [vmem:[%s5 + $0x470] sm:$0xff]
        %v1277 = vld [vmem:[%s5 + $0x478] sm:$0xff]
        %v1278 = vld [vmem:[%s5 + $0x480] sm:$0xff]
        %v1279 = vld [vmem:[%s5 + $0x488] sm:$0xff]
        %v1280 = vld [vmem:[%s5 + $0x490] sm:$0xff]
        %v1281 = vld [vmem:[%s5 + $0x498] sm:$0xff]
        %v1282 = vld [vmem:[%s5 + $0x4a0] sm:$0xff]
        %v1283 = vld [vmem:[%s5 + $0x4a8] sm:$0xff]
        %v1284 = vld [vmem:[%s5 + $0x4b0] sm:$0xff]
        %v1285 = vld [vmem:[%s5 + $0x4b8] sm:$0xff]
        %v1286 = vld [vmem:[%s5 + $0x4c0] sm:$0xff]
        %v1287 = vld [vmem:[%s5 + $0x4c8] sm:$0xff]
        %v1288 = vld [vmem:[%s5 + $0x4d0] sm:$0xff]
        %v1289 = vld [vmem:[%s5 + $0x4d8] sm:$0xff]
        %v1290 = vld [vmem:[%s5 + $0x4e0] sm:$0xff]
        %v1291 = vld [vmem:[%s5 + $0x4e8] sm:$0xff]
        %v1292 = vld [vmem:[%s5 + $0x4f0] sm:$0xff]
        %v1293 = vld [vmem:[%s5 + $0x4f8] sm:$0xff]
        %v1294 = vld [vmem:[%s5 + $0x500] sm:$0xff]
        %v1295 = vld [vmem:[%s5 + $0x508] sm:$0xff]
        %v1296 = vld [vmem:[%s5 + $0x510] sm:$0xff]
        %v1297 = vld [vmem:[%s5 + $0x518] sm:$0xff]
        %v1298 = vld [vmem:[%s5 + $0x520] sm:$0xff]
        %v1299 = vld [vmem:[%s5 + $0x528] sm:$0xff]
        %v1300 = vld [vmem:[%s5 + $0x530] sm:$0xff]
        %v1301 = vld [vmem:[%s5 + $0x538] sm:$0xff]
        %v1302 = vld [vmem:[%s5 + $0x540] sm:$0xff]
        %v1303 = vld [vmem:[%s5 + $0x548] sm:$0xff]
        %v1304 = vld [vmem:[%s5 + $0x550] sm:$0xff]
        %v1305 = vld [vmem:[%s5 + $0x558] sm:$0xff]
        %v1306 = vld [vmem:[%s5 + $0x560] sm:$0xff]
        %v1307 = vld [vmem:[%s5 + $0x568] sm:$0xff]
        %v1308 = vld [vmem:[%s5 + $0x570] sm:$0xff]
        %v1309 = vld [vmem:[%s5 + $0x578] sm:$0xff]
        %v1310 = vld [vmem:[%s5 + $0x580] sm:$0xff]
        %v1311 = vld [vmem:[%s5 + $0x588] sm:$0xff]
        %v1312 = vld [vmem:[%s5 + $0x590] sm:$0xff]
        %v1313 = vld [vmem:[%s5 + $0x598] sm:$0xff]
        %v1314 = vld [vmem:[%s5 + $0x5a0] sm:$0xff]
        %v1315 = vld [vmem:[%s5 + $0x5a8] sm:$0xff]
        %v1316 = vld [vmem:[%s5 + $0x5b0] sm:$0xff]
        %v1317 = vld [vmem:[%s5 + $0x5b8] sm:$0xff]
        %v1318 = vld [vmem:[%s5 + $0x5c0] sm:$0xff]
        %v1319 = vld [vmem:[%s5 + $0x5c8] sm:$0xff]
        %v1320 = vld [vmem:[%s5 + $0x5d0] sm:$0xff]
        %v1321 = vld [vmem:[%s5 + $0x5d8] sm:$0xff]
        %v1322 = vld [vmem:[%s5 + $0x5e0] sm:$0xff]
        %v1323 = vld [vmem:[%s5 + $0x5e8] sm:$0xff]
        %v1324 = vld [vmem:[%s5 + $0x5f0] sm:$0xff]
        %v1325 = vld [vmem:[%s5 + $0x5f8] sm:$0xff]
        %v1326 = vld [vmem:[%s5 + $0x600] sm:$0xff]
        %v1327 = vld [vmem:[%s5 + $0x608] sm:$0xff]
        %v1328 = vld [vmem:[%s5 + $0x610] sm:$0xff]
        %v1329 = vld [vmem:[%s5 + $0x618] sm:$0xff]
        %v1330 = vld [vmem:[%s5 + $0x620] sm:$0xff]
        %v1331 = vld [vmem:[%s5 + $0x628] sm:$0xff]
        %v1332 = vld [vmem:[%s5 + $0x630] sm:$0xff]
        %v1333 = vld [vmem:[%s5 + $0x638] sm:$0xff]
        %v1334 = vld [vmem:[%s5 + $0x640] sm:$0xff]
        %v1335 = vld [vmem:[%s5 + $0x648] sm:$0xff]
        %v1336 = vld [vmem:[%s5 + $0x650] sm:$0xff]
        %v1337 = vld [vmem:[%s5 + $0x658] sm:$0xff]
        %v1338 = vld [vmem:[%s5 + $0x660] sm:$0xff]
        %v1339 = vld [vmem:[%s5 + $0x668] sm:$0xff]
        %v1340 = vld [vmem:[%s5 + $0x670] sm:$0xff]
        %v1341 = vld [vmem:[%s5 + $0x678] sm:$0xff]
        %v1342 = vld [vmem:[%s5 + $0x680] sm:$0xff]
        %v1343 = vld [vmem:[%s5 + $0x688] sm:$0xff]
        %v1344 = vld [vmem:[%s5 + $0x690] sm:$0xff]
        %v1345 = vld [vmem:[%s5 + $0x698] sm:$0xff]
        %v1346 = vld [vmem:[%s5 + $0x6a0] sm:$0xff]
        %v1347 = vld [vmem:[%s5 + $0x6a8] sm:$0xff]
        %v1348 = vld [vmem:[%s5 + $0x6b0] sm:$0xff]
        %v1349 = vld [vmem:[%s5 + $0x6b8] sm:$0xff]
        %v1350 = vld [vmem:[%s5 + $0x6c0] sm:$0xff]
        %v1351 = vld [vmem:[%s5 + $0x6c8] sm:$0xff]
        %v1352 = vld [vmem:[%s5 + $0x6d0] sm:$0xff]
        %v1353 = vld [vmem:[%s5 + $0x6d8] sm:$0xff]
        %v1354 = vld [vmem:[%s5 + $0x6e0] sm:$0xff]
        %v1355 = vld [vmem:[%s5 + $0x6e8] sm:$0xff]
        %v1356 = vld [vmem:[%s5 + $0x6f0] sm:$0xff]
        %v1357 = vld [vmem:[%s5 + $0x6f8] sm:$0xff]
        %v1358 = vld [vmem:[%s5 + $0x700] sm:$0xff]
        %v1359 = vld [vmem:[%s5 + $0x708] sm:$0xff]
        %v1360 = vld [vmem:[%s5 + $0x710] sm:$0xff]
        %v1361 = vld [vmem:[%s5 + $0x718] sm:$0xff]
        %v1362 = vld [vmem:[%s5 + $0x720] sm:$0xff]
        %v1363 = vld [vmem:[%s5 + $0x728] sm:$0xff]
        %v1364 = vld [vmem:[%s5 + $0x730] sm:$0xff]
        %v1365 = vld [vmem:[%s5 + $0x738] sm:$0xff]
        %v1366 = vld [vmem:[%s5 + $0x740] sm:$0xff]
        %v1367 = vld [vmem:[%s5 + $0x748] sm:$0xff]
        %v1368 = vld [vmem:[%s5 + $0x750] sm:$0xff]
        %v1369 = vld [vmem:[%s5 + $0x758] sm:$0xff]
        %v1370 = vld [vmem:[%s5 + $0x760] sm:$0xff]
        %v1371 = vld [vmem:[%s5 + $0x768] sm:$0xff]
        %v1372 = vld [vmem:[%s5 + $0x770] sm:$0xff]
        %v1373 = vld [vmem:[%s5 + $0x778] sm:$0xff]
        %v1374 = vld [vmem:[%s5 + $0x780] sm:$0xff]
        %v1375 = vld [vmem:[%s5 + $0x788] sm:$0xff]
        %v1376 = vld [vmem:[%s5 + $0x790] sm:$0xff]
        %v1377 = vld [vmem:[%s5 + $0x798] sm:$0xff]
        %v1378 = vld [vmem:[%s5 + $0x7a0] sm:$0xff]
        %v1379 = vld [vmem:[%s5 + $0x7a8] sm:$0xff]
        %v1380 = vld [vmem:[%s5 + $0x7b0] sm:$0xff]
        %v1381 = vld [vmem:[%s5 + $0x7b8] sm:$0xff]
        %v1382 = vld [vmem:[%s5 + $0x7c0] sm:$0xff]
        %v1383 = vld [vmem:[%s5 + $0x7c8] sm:$0xff]
        %v1384 = vld [vmem:[%s5 + $0x7d0] sm:$0xff]
        %v1385 = vld [vmem:[%s5 + $0x7d8] sm:$0xff]
        %v1386 = vld [vmem:[%s5 + $0x7e0] sm:$0xff]
        %v1387 = vld [vmem:[%s5 + $0x7e8] sm:$0xff]
        %v1388 = vld [vmem:[%s5 + $0x7f0] sm:$0xff]
        %v1389 = vld [vmem:[%s5 + $0x7f8] sm:$0xff]
        %v1390 = vld [vmem:[%s5 + $0x800] sm:$0xff]
        %v1391 = vld [vmem:[%s5 + $0x808] sm:$0xff]
        %v1392 = vld [vmem:[%s5 + $0x810] sm:$0xff]
        %v1393 = vld [vmem:[%s5 + $0x818] sm:$0xff]
        %v1394 = vld [vmem:[%s5 + $0x820] sm:$0xff]
        %v1395 = vld [vmem:[%s5 + $0x828] sm:$0xff]
        %v1396 = vld [vmem:[%s5 + $0x830] sm:$0xff]
        %v1397 = vld [vmem:[%s5 + $0x838] sm:$0xff]
        %v1398 = vld [vmem:[%s5 + $0x840] sm:$0xff]
        %v1399 = vld [vmem:[%s5 + $0x848] sm:$0xff]
        %v1400 = vld [vmem:[%s5 + $0x850] sm:$0xff]
        %v1401 = vld [vmem:[%s5 + $0x858] sm:$0xff]
        %v1402 = vld [vmem:[%s5 + $0x860] sm:$0xff]
        %v1403 = vld [vmem:[%s5 + $0x868] sm:$0xff]
        %v1404 = vld [vmem:[%s5 + $0x870] sm:$0xff]
        %v1405 = vld [vmem:[%s5 + $0x878] sm:$0xff]
        %v1406 = vld [vmem:[%s5 + $0x880] sm:$0xff]
        %v1407 = vld [vmem:[%s5 + $0x888] sm:$0xff]
        %v1408 = vld [vmem:[%s5 + $0x890] sm:$0xff]
        %v1409 = vld [vmem:[%s5 + $0x898] sm:$0xff]
        %v1410 = vld [vmem:[%s5 + $0x8a0] sm:$0xff]
        %v1411 = vld [vmem:[%s5 + $0x8a8] sm:$0xff]
        %v1412 = vld [vmem:[%s5 + $0x8b0] sm:$0xff]
        %v1413 = vld [vmem:[%s5 + $0x8b8] sm:$0xff]
        %v1414 = vld [vmem:[%s5 + $0x8c0] sm:$0xff]
        %v1415 = vld [vmem:[%s5 + $0x8c8] sm:$0xff]
        %v1416 = vld [vmem:[%s5 + $0x8d0] sm:$0xff]
        %v1417 = vld [vmem:[%s5 + $0x8d8] sm:$0xff]
        %v1418 = vld [vmem:[%s5 + $0x8e0] sm:$0xff]
        %v1419 = vld [vmem:[%s5 + $0x8e8] sm:$0xff]
        %v1420 = vld [vmem:[%s5 + $0x8f0] sm:$0xff]
        %v1421 = vld [vmem:[%s5 + $0x8f8] sm:$0xff]
        %v1422 = vld [vmem:[%s5 + $0x900] sm:$0xff]
        %v1423 = vld [vmem:[%s5 + $0x908] sm:$0xff]
        %v1424 = vld [vmem:[%s5 + $0x910] sm:$0xff]
        %v1425 = vld [vmem:[%s5 + $0x918] sm:$0xff]
        %v1426 = vld [vmem:[%s5 + $0x920] sm:$0xff]
        %v1427 = vld [vmem:[%s5 + $0x928] sm:$0xff]
        %v1428 = vld [vmem:[%s5 + $0x930] sm:$0xff]
        %v1429 = vld [vmem:[%s5 + $0x938] sm:$0xff]
        %v1430 = vld [vmem:[%s5 + $0x940] sm:$0xff]
        %v1431 = vld [vmem:[%s5 + $0x948] sm:$0xff]
        %v1432 = vld [vmem:[%s5 + $0x950] sm:$0xff]
        %v1433 = vld [vmem:[%s5 + $0x958] sm:$0xff]
        %v1434 = vld [vmem:[%s5 + $0x960] sm:$0xff]
        %v1435 = vld [vmem:[%s5 + $0x968] sm:$0xff]
        %v1436 = vld [vmem:[%s5 + $0x970] sm:$0xff]
        %v1437 = vld [vmem:[%s5 + $0x978] sm:$0xff]
        %v1438 = vld [vmem:[%s5 + $0x980] sm:$0xff]
        %v1439 = vld [vmem:[%s5 + $0x988] sm:$0xff]
        %v1440 = vld [vmem:[%s5 + $0x990] sm:$0xff]
        %v1441 = vld [vmem:[%s5 + $0x998] sm:$0xff]
        %v1442 = vld [vmem:[%s5 + $0x9a0] sm:$0xff]
        %v1443 = vld [vmem:[%s5 + $0x9a8] sm:$0xff]
        %v1444 = vld [vmem:[%s5 + $0x9b0] sm:$0xff]
        %v1445 = vld [vmem:[%s5 + $0x9b8] sm:$0xff]
        %v1446 = vld [vmem:[%s5 + $0x9c0] sm:$0xff]
        %v1447 = vld [vmem:[%s5 + $0x9c8] sm:$0xff]
        %v1448 = vld [vmem:[%s5 + $0x9d0] sm:$0xff]
        %v1449 = vld [vmem:[%s5 + $0x9d8] sm:$0xff]
        %v1450 = vld [vmem:[%s5 + $0x9e0] sm:$0xff]
        %v1451 = vld [vmem:[%s5 + $0x9e8] sm:$0xff]
        %v1452 = vld [vmem:[%s5 + $0x9f0] sm:$0xff]
        %v1453 = vld [vmem:[%s5 + $0x9f8] sm:$0xff]
        %v1454 = vld [vmem:[%s5 + $0xa00] sm:$0xff]
        %v1455 = vld [vmem:[%s5 + $0xa08] sm:$0xff]
        %v1456 = vld [vmem:[%s5 + $0xa10] sm:$0xff]
        %v1457 = vld [vmem:[%s5 + $0xa18] sm:$0xff]
        %v1458 = vld [vmem:[%s5 + $0xa20] sm:$0xff]
        %v1459 = vld [vmem:[%s5 + $0xa28] sm:$0xff]
        %v1460 = vld [vmem:[%s5 + $0xa30] sm:$0xff]
        %v1461 = vld [vmem:[%s5 + $0xa38] sm:$0xff]
        %v1462 = vld [vmem:[%s5 + $0xa40] sm:$0xff]
        %v1463 = vld [vmem:[%s5 + $0xa48] sm:$0xff]
        %v1464 = vld [vmem:[%s5 + $0xa50] sm:$0xff]
        %v1465 = vld [vmem:[%s5 + $0xa58] sm:$0xff]
        %v1466 = vld [vmem:[%s5 + $0xa60] sm:$0xff]
        %v1467 = vld [vmem:[%s5 + $0xa68] sm:$0xff]
        %v1468 = vld [vmem:[%s5 + $0xa70] sm:$0xff]
        %v1469 = vld [vmem:[%s5 + $0xa78] sm:$0xff]
        %v1470 = vld [vmem:[%s5 + $0xa80] sm:$0xff]
        %v1471 = vld [vmem:[%s5 + $0xa88] sm:$0xff]
        %v1472 = vld [vmem:[%s5 + $0xa90] sm:$0xff]
        %v1473 = vld [vmem:[%s5 + $0xa98] sm:$0xff]
        %v1474 = vld [vmem:[%s5 + $0xaa0] sm:$0xff]
        %v1475 = vld [vmem:[%s5 + $0xaa8] sm:$0xff]
        %v1476 = vld [vmem:[%s5 + $0xab0] sm:$0xff]
        %v1477 = vld [vmem:[%s5 + $0xab8] sm:$0xff]
        %v1478 = vld [vmem:[%s5 + $0xac0] sm:$0xff]
        %v1479 = vld [vmem:[%s5 + $0xac8] sm:$0xff]
        %v1480 = vld [vmem:[%s5 + $0xad0] sm:$0xff]
        %v1481 = vld [vmem:[%s5 + $0xad8] sm:$0xff]
        %v1482 = vld [vmem:[%s5 + $0xae0] sm:$0xff]
        %v1483 = vld [vmem:[%s5 + $0xae8] sm:$0xff]
        %v1484 = vld [vmem:[%s5 + $0xaf0] sm:$0xff]
        %v1485 = vld [vmem:[%s5 + $0xaf8] sm:$0xff]
        %v1486 = vld [vmem:[%s5 + $0xb00] sm:$0xff]
        %v1487 = vld [vmem:[%s5 + $0xb08] sm:$0xff]
        %v1488 = vld [vmem:[%s5 + $0xb10] sm:$0xff]
        %v1489 = vld [vmem:[%s5 + $0xb18] sm:$0xff]
        %v1490 = vld [vmem:[%s5 + $0xb20] sm:$0xff]
        %v1491 = vld [vmem:[%s5 + $0xb28] sm:$0xff]
        %v1492 = vld [vmem:[%s5 + $0xb30] sm:$0xff]
        %v1493 = vld [vmem:[%s5 + $0xb38] sm:$0xff]
        %v1494 = vld [vmem:[%s5 + $0xb40] sm:$0xff]
        %v1495 = vld [vmem:[%s5 + $0xb48] sm:$0xff]
        %v1496 = vld [vmem:[%s5 + $0xb50] sm:$0xff]
        %v1497 = vld [vmem:[%s5 + $0xb58] sm:$0xff]
        %v1498 = vld [vmem:[%s5 + $0xb60] sm:$0xff]
        %v1499 = vld [vmem:[%s5 + $0xb68] sm:$0xff]
        %v1500 = vld [vmem:[%s5 + $0xb70] sm:$0xff]
        %v1501 = vld [vmem:[%s5 + $0xb78] sm:$0xff]
        %v1502 = vld [vmem:[%s5 + $0xb80] sm:$0xff]
        %v1503 = vld [vmem:[%s5 + $0xb88] sm:$0x7f]
        %v1504 = vld [vmem:[%s5 + $0xb90] sm:$0x7f]
        %v1505 = vld [vmem:[%s5 + $0xb98] sm:$0x7f]
        %v1507 = vsel %vm733, %v1133, 0
        %vm1509 = vcmask 1046528
        %v1511 = vsel %vm1509, %v1503, 0
        %v1514 = vsel %vm1509, %v1504, 0
        %v1517 = vsel %vm1509, %v1505, 0
        %1519 = vmatprep.subr.mxu0 %v1180
        %1520 = vmatpush1.msra.mxu0 %v1179
        %1521 = vmatprep.subr.mxu0 %v1177
        %1522 = vmatpush1.msra.mxu0 %v1176
        %1523 = vmatprep.subr.mxu0 %v1174
        %1524 = vmatpush1.msra.mxu0 %v1173
        %1525 = vmatprep.subr.mxu0 %v1171
        %1526 = vmatpush1.msra.mxu0 %v1170
        %1527 = vmatprep.subr.mxu0 %v1168
        %1528 = vmatpush1.msra.mxu0 %v1167
        %1529 = vmatprep.subr.mxu0 %v1165
        %1530 = vmatpush1.msra.mxu0 %v1164
        %1531 = vmatprep.subr.mxu0 %v1162
        %1532 = vmatpush1.msra.mxu0 %v1161
        %1533 = vmatprep.subr.mxu0 %v1159
        %1534 = vmatpush1.msra.mxu0 %v1158
        %1535 = vmatprep.subr.mxu0 %v1156
        %1536 = vmatpush1.msra.mxu0 %v1155
        %1537 = vmatprep.subr.mxu0 %v1153
        %1538 = vmatpush1.msra.mxu0 %v1152
        %1539 = vmatprep.subr.mxu0 %v1150
        %1540 = vmatpush1.msra.mxu0 %v1149
        %1541 = vmatprep.subr.mxu0 %v1147
        %1542 = vmatpush1.msra.mxu0 %v1146
        %1543 = vmatprep.subr.mxu0 %v1144
        %1544 = vmatpush1.msra.mxu0 %v1143
        %1545 = vmatprep.subr.mxu0 %v1141
        %1546 = vmatpush1.msra.mxu0 %v1140
        %1547 = vmatprep.subr.mxu0 %v1138
        %1548 = vmatpush1.msra.mxu0 %v1137
        %1549 = vmatprep.subr.mxu0 %v1135
        %1550 = vmatpush1.msra.mxu0 %v1134
        %1551 = vmatprep.subr.mxu0 %v1228
        %1552 = vmatpush2.msra.mxu0 %v1227
        %1553 = vmatprep.subr.mxu0 %v1225
        %1554 = vmatpush2.msra.mxu0 %v1224
        %1555 = vmatprep.subr.mxu0 %v1222
        %1556 = vmatpush2.msra.mxu0 %v1221
        %1557 = vmatprep.subr.mxu0 %v1219
        %1558 = vmatpush2.msra.mxu0 %v1218
        %1559 = vmatprep.subr.mxu0 %v1216
        %1560 = vmatpush2.msra.mxu0 %v1215
        %1561 = vmatprep.subr.mxu0 %v1213
        %1562 = vmatpush2.msra.mxu0 %v1212
        %1563 = vmatprep.subr.mxu0 %v1210
        %1564 = vmatpush2.msra.mxu0 %v1209
        %1565 = vmatprep.subr.mxu0 %v1207
        %1566 = vmatpush2.msra.mxu0 %v1206
        %1567 = vmatprep.subr.mxu0 %v1204
        %1568 = vmatpush2.msra.mxu0 %v1203
        %1569 = vmatprep.subr.mxu0 %v1201
        %1570 = vmatpush2.msra.mxu0 %v1200
        %1571 = vmatprep.subr.mxu0 %v1198
        %1572 = vmatpush2.msra.mxu0 %v1197
        %1573 = vmatprep.subr.mxu0 %v1195
        %1574 = vmatpush2.msra.mxu0 %v1194
        %1575 = vmatprep.subr.mxu0 %v1192
        %1576 = vmatpush2.msra.mxu0 %v1191
        %1577 = vmatprep.subr.mxu0 %v1189
        %1578 = vmatpush2.msra.mxu0 %v1188
        %1579 = vmatprep.subr.mxu0 %v1186
        %1580 = vmatpush2.msra.mxu0 %v1185
        %1581 = vmatprep.subr.mxu0 %v1183
        %1582 = vmatpush2.msra.mxu0 %v1182
        %1583 = vmatprep.mubr.f32.mxu0 %v1127
        %1584 = vmatmul.mubr.f32.gmra.mxu0 %v1126
        %v1585 = vpop.f32.mrf.mxu0
        %v1586 = vadd.f32 0.0, %v1585
        %v1587 = vpop.f32.mrf.mxu0
        %v1588 = vadd.f32 0.0, %v1587
        %1589 = vdwg.mxu0
        %1590 = vmatprep.subr.mxu0 %v1276
        %1591 = vmatpush1.msra.mxu0 %v1275
        %1592 = vmatprep.subr.mxu0 %v1273
        %1593 = vmatpush1.msra.mxu0 %v1272
        %1594 = vmatprep.subr.mxu0 %v1270
        %1595 = vmatpush1.msra.mxu0 %v1269
        %1596 = vmatprep.subr.mxu0 %v1267
        %1597 = vmatpush1.msra.mxu0 %v1266
        %1598 = vmatprep.subr.mxu0 %v1264
        %1599 = vmatpush1.msra.mxu0 %v1263
        %1600 = vmatprep.subr.mxu0 %v1261
        %1601 = vmatpush1.msra.mxu0 %v1260
        %1602 = vmatprep.subr.mxu0 %v1258
        %1603 = vmatpush1.msra.mxu0 %v1257
        %1604 = vmatprep.subr.mxu0 %v1255
        %1605 = vmatpush1.msra.mxu0 %v1254
        %1606 = vmatprep.subr.mxu0 %v1252
        %1607 = vmatpush1.msra.mxu0 %v1251
        %1608 = vmatprep.subr.mxu0 %v1249
        %1609 = vmatpush1.msra.mxu0 %v1248
        %1610 = vmatprep.subr.mxu0 %v1246
        %1611 = vmatpush1.msra.mxu0 %v1245
        %1612 = vmatprep.subr.mxu0 %v1243
        %1613 = vmatpush1.msra.mxu0 %v1242
        %1614 = vmatprep.subr.mxu0 %v1240
        %1615 = vmatpush1.msra.mxu0 %v1239
        %1616 = vmatprep.subr.mxu0 %v1237
        %1617 = vmatpush1.msra.mxu0 %v1236
        %1618 = vmatprep.subr.mxu0 %v1234
        %1619 = vmatpush1.msra.mxu0 %v1233
        %1620 = vmatprep.subr.mxu0 %v1231
        %1621 = vmatpush1.msra.mxu0 %v1230
        %1622 = vmatprep.subr.mxu0 %v1324
        %1623 = vmatpush2.msra.mxu0 %v1323
        %1624 = vmatprep.subr.mxu0 %v1321
        %1625 = vmatpush2.msra.mxu0 %v1320
        %1626 = vmatprep.subr.mxu0 %v1318
        %1627 = vmatpush2.msra.mxu0 %v1317
        %1628 = vmatprep.subr.mxu0 %v1315
        %1629 = vmatpush2.msra.mxu0 %v1314
        %1630 = vmatprep.subr.mxu0 %v1312
        %1631 = vmatpush2.msra.mxu0 %v1311
        %1632 = vmatprep.subr.mxu0 %v1309
        %1633 = vmatpush2.msra.mxu0 %v1308
        %1634 = vmatprep.subr.mxu0 %v1306
        %1635 = vmatpush2.msra.mxu0 %v1305
        %1636 = vmatprep.subr.mxu0 %v1303
        %1637 = vmatpush2.msra.mxu0 %v1302
        %1638 = vmatprep.subr.mxu0 %v1300
        %1639 = vmatpush2.msra.mxu0 %v1299
        %1640 = vmatprep.subr.mxu0 %v1297
        %1641 = vmatpush2.msra.mxu0 %v1296
        %1642 = vmatprep.subr.mxu0 %v1294
        %1643 = vmatpush2.msra.mxu0 %v1293
        %1644 = vmatprep.subr.mxu0 %v1291
        %1645 = vmatpush2.msra.mxu0 %v1290
        %1646 = vmatprep.subr.mxu0 %v1288
        %1647 = vmatpush2.msra.mxu0 %v1287
        %1648 = vmatprep.subr.mxu0 %v1285
        %1649 = vmatpush2.msra.mxu0 %v1284
        %1650 = vmatprep.subr.mxu0 %v1282
        %1651 = vmatpush2.msra.mxu0 %v1281
        %1652 = vmatprep.subr.mxu0 %v1279
        %1653 = vmatpush2.msra.mxu0 %v1278
        %1654 = vmatprep.mubr.f32.mxu0 %v1129
        %1655 = vmatmul.mubr.f32.gmra.mxu0 %v1128
        %v1656 = vpop.f32.mrf.mxu0
        %v1657 = vadd.f32 %v1586, %v1656
        %v1658 = vpop.f32.mrf.mxu0
        %v1659 = vadd.f32 %v1588, %v1658
        %1660 = vdwg.mxu0
        %1661 = vmatprep.subr.mxu0 %v1372
        %1662 = vmatpush1.msra.mxu0 %v1371
        %1663 = vmatprep.subr.mxu0 %v1369
        %1664 = vmatpush1.msra.mxu0 %v1368
        %1665 = vmatprep.subr.mxu0 %v1366
        %1666 = vmatpush1.msra.mxu0 %v1365
        %1667 = vmatprep.subr.mxu0 %v1363
        %1668 = vmatpush1.msra.mxu0 %v1362
        %1669 = vmatprep.subr.mxu0 %v1360
        %1670 = vmatpush1.msra.mxu0 %v1359
        %1671 = vmatprep.subr.mxu0 %v1357
        %1672 = vmatpush1.msra.mxu0 %v1356
        %1673 = vmatprep.subr.mxu0 %v1354
        %1674 = vmatpush1.msra.mxu0 %v1353
        %1675 = vmatprep.subr.mxu0 %v1351
        %1676 = vmatpush1.msra.mxu0 %v1350
        %1677 = vmatprep.subr.mxu0 %v1348
        %1678 = vmatpush1.msra.mxu0 %v1347
        %1679 = vmatprep.subr.mxu0 %v1345
        %1680 = vmatpush1.msra.mxu0 %v1344
        %1681 = vmatprep.subr.mxu0 %v1342
        %1682 = vmatpush1.msra.mxu0 %v1341
        %1683 = vmatprep.subr.mxu0 %v1339
        %1684 = vmatpush1.msra.mxu0 %v1338
        %1685 = vmatprep.subr.mxu0 %v1336
        %1686 = vmatpush1.msra.mxu0 %v1335
        %1687 = vmatprep.subr.mxu0 %v1333
        %1688 = vmatpush1.msra.mxu0 %v1332
        %1689 = vmatprep.subr.mxu0 %v1330
        %1690 = vmatpush1.msra.mxu0 %v1329
        %1691 = vmatprep.subr.mxu0 %v1327
        %1692 = vmatpush1.msra.mxu0 %v1326
        %1693 = vmatprep.subr.mxu0 %v1420
        %1694 = vmatpush2.msra.mxu0 %v1419
        %1695 = vmatprep.subr.mxu0 %v1417
        %1696 = vmatpush2.msra.mxu0 %v1416
        %1697 = vmatprep.subr.mxu0 %v1414
        %1698 = vmatpush2.msra.mxu0 %v1413
        %1699 = vmatprep.subr.mxu0 %v1411
        %1700 = vmatpush2.msra.mxu0 %v1410
        %1701 = vmatprep.subr.mxu0 %v1408
        %1702 = vmatpush2.msra.mxu0 %v1407
        %1703 = vmatprep.subr.mxu0 %v1405
        %1704 = vmatpush2.msra.mxu0 %v1404
        %1705 = vmatprep.subr.mxu0 %v1402
        %1706 = vmatpush2.msra.mxu0 %v1401
        %1707 = vmatprep.subr.mxu0 %v1399
        %1708 = vmatpush2.msra.mxu0 %v1398
        %1709 = vmatprep.subr.mxu0 %v1396
        %1710 = vmatpush2.msra.mxu0 %v1395
        %1711 = vmatprep.subr.mxu0 %v1393
        %1712 = vmatpush2.msra.mxu0 %v1392
        %1713 = vmatprep.subr.mxu0 %v1390
        %1714 = vmatpush2.msra.mxu0 %v1389
        %1715 = vmatprep.subr.mxu0 %v1387
        %1716 = vmatpush2.msra.mxu0 %v1386
        %1717 = vmatprep.subr.mxu0 %v1384
        %1718 = vmatpush2.msra.mxu0 %v1383
        %1719 = vmatprep.subr.mxu0 %v1381
        %1720 = vmatpush2.msra.mxu0 %v1380
        %1721 = vmatprep.subr.mxu0 %v1378
        %1722 = vmatpush2.msra.mxu0 %v1377
        %1723 = vmatprep.subr.mxu0 %v1375
        %1724 = vmatpush2.msra.mxu0 %v1374
        %1725 = vmatprep.mubr.f32.mxu0 %v1131
        %1726 = vmatmul.mubr.f32.gmra.mxu0 %v1130
        %v1727 = vpop.f32.mrf.mxu0
        %v1728 = vadd.f32 %v1657, %v1727
        %v1729 = vpop.f32.mrf.mxu0
        %v1730 = vadd.f32 %v1659, %v1729
        %1731 = vdwg.mxu0
        %1732 = vmatprep.subr.mxu0 %v1468
        %1733 = vmatpush1.msra.mxu0 %v1467
        %1734 = vmatprep.subr.mxu0 %v1465
        %1735 = vmatpush1.msra.mxu0 %v1464
        %1736 = vmatprep.subr.mxu0 %v1462
        %1737 = vmatpush1.msra.mxu0 %v1461
        %1738 = vmatprep.subr.mxu0 %v1459
        %1739 = vmatpush1.msra.mxu0 %v1458
        %1740 = vmatprep.subr.mxu0 %v1456
        %1741 = vmatpush1.msra.mxu0 %v1455
        %1742 = vmatprep.subr.mxu0 %v1453
        %1743 = vmatpush1.msra.mxu0 %v1452
        %1744 = vmatprep.subr.mxu0 %v1450
        %1745 = vmatpush1.msra.mxu0 %v1449
        %1746 = vmatprep.subr.mxu0 %v1447
        %1747 = vmatpush1.msra.mxu0 %v1446
        %1748 = vmatprep.subr.mxu0 %v1444
        %1749 = vmatpush1.msra.mxu0 %v1443
        %1750 = vmatprep.subr.mxu0 %v1441
        %1751 = vmatpush1.msra.mxu0 %v1440
        %1752 = vmatprep.subr.mxu0 %v1438
        %1753 = vmatpush1.msra.mxu0 %v1437
        %1754 = vmatprep.subr.mxu0 %v1435
        %1755 = vmatpush1.msra.mxu0 %v1434
        %1756 = vmatprep.subr.mxu0 %v1432
        %1757 = vmatpush1.msra.mxu0 %v1431
        %1758 = vmatprep.subr.mxu0 %v1429
        %1759 = vmatpush1.msra.mxu0 %v1428
        %1760 = vmatprep.subr.mxu0 %v1426
        %1761 = vmatpush1.msra.mxu0 %v1425
        %1762 = vmatprep.subr.mxu0 %v1423
        %1763 = vmatpush1.msra.mxu0 %v1422
        %1764 = vmatprep.subr.mxu0 0.0
        %1765 = vmatpush2.msra.mxu0 0.0
        %1766 = vmatprep.subr.mxu0 0.0
        %1767 = vmatpush2.msra.mxu0 0.0
        %1768 = vmatprep.subr.mxu0 0.0
        %1769 = vmatpush2.msra.mxu0 0.0
        %1770 = vmatprep.subr.mxu0 0.0
        %1771 = vmatpush2.msra.mxu0 0.0
        %1772 = vmatprep.subr.mxu0 %v1514
        %1773 = vmatpush2.msra.mxu0 %v1511
        %1774 = vmatprep.subr.mxu0 %v1501
        %1775 = vmatpush2.msra.mxu0 %v1500
        %1776 = vmatprep.subr.mxu0 %v1498
        %1777 = vmatpush2.msra.mxu0 %v1497
        %1778 = vmatprep.subr.mxu0 %v1495
        %1779 = vmatpush2.msra.mxu0 %v1494
        %1780 = vmatprep.subr.mxu0 %v1492
        %1781 = vmatpush2.msra.mxu0 %v1491
        %1782 = vmatprep.subr.mxu0 %v1489
        %1783 = vmatpush2.msra.mxu0 %v1488
        %1784 = vmatprep.subr.mxu0 %v1486
        %1785 = vmatpush2.msra.mxu0 %v1485
        %1786 = vmatprep.subr.mxu0 %v1483
        %1787 = vmatpush2.msra.mxu0 %v1482
        %1788 = vmatprep.subr.mxu0 %v1480
        %1789 = vmatpush2.msra.mxu0 %v1479
        %1790 = vmatprep.subr.mxu0 %v1477
        %1791 = vmatpush2.msra.mxu0 %v1476
        %1792 = vmatprep.subr.mxu0 %v1474
        %1793 = vmatpush2.msra.mxu0 %v1473
        %1794 = vmatprep.subr.mxu0 %v1471
        %1795 = vmatpush2.msra.mxu0 %v1470
        %1796 = vmatprep.mubr.f32.mxu0 %v1507
        %1797 = vmatmul.mubr.f32.gmra.mxu0 %v1132
        %v1798 = vpop.f32.mrf.mxu0
        %v1799 = vadd.f32 %v1728, %v1798
        %v1800 = vpop.f32.mrf.mxu0
        %v1801 = vadd.f32 %v1730, %v1800
        %1802 = vdwg.mxu0
        %1803 = vmatprep.subr.mxu0 0.0
        %1804 = vmatpush1.msra.mxu0 %v1181
        %1805 = vmatprep.subr.mxu0 0.0
        %1806 = vmatpush1.msra.mxu0 %v1178
        %1807 = vmatprep.subr.mxu0 0.0
        %1808 = vmatpush1.msra.mxu0 %v1175
        %1809 = vmatprep.subr.mxu0 0.0
        %1810 = vmatpush1.msra.mxu0 %v1172
        %1811 = vmatprep.subr.mxu0 0.0
        %1812 = vmatpush1.msra.mxu0 %v1169
        %1813 = vmatprep.subr.mxu0 0.0
        %1814 = vmatpush1.msra.mxu0 %v1166
        %1815 = vmatprep.subr.mxu0 0.0
        %1816 = vmatpush1.msra.mxu0 %v1163
        %1817 = vmatprep.subr.mxu0 0.0
        %1818 = vmatpush1.msra.mxu0 %v1160
        %1819 = vmatprep.subr.mxu0 0.0
        %1820 = vmatpush1.msra.mxu0 %v1157
        %1821 = vmatprep.subr.mxu0 0.0
        %1822 = vmatpush1.msra.mxu0 %v1154
        %1823 = vmatprep.subr.mxu0 0.0
        %1824 = vmatpush1.msra.mxu0 %v1151
        %1825 = vmatprep.subr.mxu0 0.0
        %1826 = vmatpush1.msra.mxu0 %v1148
        %1827 = vmatprep.subr.mxu0 0.0
        %1828 = vmatpush1.msra.mxu0 %v1145
        %1829 = vmatprep.subr.mxu0 0.0
        %1830 = vmatpush1.msra.mxu0 %v1142
        %1831 = vmatprep.subr.mxu0 0.0
        %1832 = vmatpush1.msra.mxu0 %v1139
        %1833 = vmatprep.subr.mxu0 0.0
        %1834 = vmatpush1.msra.mxu0 %v1136
        %1835 = vmatprep.subr.mxu0 0.0
        %1836 = vmatpush2.msra.mxu0 %v1229
        %1837 = vmatprep.subr.mxu0 0.0
        %1838 = vmatpush2.msra.mxu0 %v1226
        %1839 = vmatprep.subr.mxu0 0.0
        %1840 = vmatpush2.msra.mxu0 %v1223
        %1841 = vmatprep.subr.mxu0 0.0
        %1842 = vmatpush2.msra.mxu0 %v1220
        %1843 = vmatprep.subr.mxu0 0.0
        %1844 = vmatpush2.msra.mxu0 %v1217
        %1845 = vmatprep.subr.mxu0 0.0
        %1846 = vmatpush2.msra.mxu0 %v1214
        %1847 = vmatprep.subr.mxu0 0.0
        %1848 = vmatpush2.msra.mxu0 %v1211
        %1849 = vmatprep.subr.mxu0 0.0
        %1850 = vmatpush2.msra.mxu0 %v1208
        %1851 = vmatprep.subr.mxu0 0.0
        %1852 = vmatpush2.msra.mxu0 %v1205
        %1853 = vmatprep.subr.mxu0 0.0
        %1854 = vmatpush2.msra.mxu0 %v1202
        %1855 = vmatprep.subr.mxu0 0.0
        %1856 = vmatpush2.msra.mxu0 %v1199
        %1857 = vmatprep.subr.mxu0 0.0
        %1858 = vmatpush2.msra.mxu0 %v1196
        %1859 = vmatprep.subr.mxu0 0.0
        %1860 = vmatpush2.msra.mxu0 %v1193
        %1861 = vmatprep.subr.mxu0 0.0
        %1862 = vmatpush2.msra.mxu0 %v1190
        %1863 = vmatprep.subr.mxu0 0.0
        %1864 = vmatpush2.msra.mxu0 %v1187
        %1865 = vmatprep.subr.mxu0 0.0
        %1866 = vmatpush2.msra.mxu0 %v1184
        %1867 = vmatprep.mubr.f32.mxu0 %v1127
        %1868 = vmatmul.mubr.f32.gmra.mxu0 %v1126
        %v1869 = vpop.f32.mrf.mxu0
        %v1870 = vadd.f32 0.0, %v1869
        %v1871 = vpop.f32.mrf.mxu0
        %1872 = vdwg.mxu0
        %1873 = vmatprep.subr.mxu0 0.0
        %1874 = vmatpush1.msra.mxu0 %v1277
        %1875 = vmatprep.subr.mxu0 0.0
        %1876 = vmatpush1.msra.mxu0 %v1274
        %1877 = vmatprep.subr.mxu0 0.0
        %1878 = vmatpush1.msra.mxu0 %v1271
        %1879 = vmatprep.subr.mxu0 0.0
        %1880 = vmatpush1.msra.mxu0 %v1268
        %1881 = vmatprep.subr.mxu0 0.0
        %1882 = vmatpush1.msra.mxu0 %v1265
        %1883 = vmatprep.subr.mxu0 0.0
        %1884 = vmatpush1.msra.mxu0 %v1262
        %1885 = vmatprep.subr.mxu0 0.0
        %1886 = vmatpush1.msra.mxu0 %v1259
        %1887 = vmatprep.subr.mxu0 0.0
        %1888 = vmatpush1.msra.mxu0 %v1256
        %1889 = vmatprep.subr.mxu0 0.0
        %1890 = vmatpush1.msra.mxu0 %v1253
        %1891 = vmatprep.subr.mxu0 0.0
        %1892 = vmatpush1.msra.mxu0 %v1250
        %1893 = vmatprep.subr.mxu0 0.0
        %1894 = vmatpush1.msra.mxu0 %v1247
        %1895 = vmatprep.subr.mxu0 0.0
        %1896 = vmatpush1.msra.mxu0 %v1244
        %1897 = vmatprep.subr.mxu0 0.0
        %1898 = vmatpush1.msra.mxu0 %v1241
        %1899 = vmatprep.subr.mxu0 0.0
        %1900 = vmatpush1.msra.mxu0 %v1238
        %1901 = vmatprep.subr.mxu0 0.0
        %1902 = vmatpush1.msra.mxu0 %v1235
        %1903 = vmatprep.subr.mxu0 0.0
        %1904 = vmatpush1.msra.mxu0 %v1232
        %1905 = vmatprep.subr.mxu0 0.0
        %1906 = vmatpush2.msra.mxu0 %v1325
        %1907 = vmatprep.subr.mxu0 0.0
        %1908 = vmatpush2.msra.mxu0 %v1322
        %1909 = vmatprep.subr.mxu0 0.0
        %1910 = vmatpush2.msra.mxu0 %v1319
        %1911 = vmatprep.subr.mxu0 0.0
        %1912 = vmatpush2.msra.mxu0 %v1316
        %1913 = vmatprep.subr.mxu0 0.0
        %1914 = vmatpush2.msra.mxu0 %v1313
        %1915 = vmatprep.subr.mxu0 0.0
        %1916 = vmatpush2.msra.mxu0 %v1310
        %1917 = vmatprep.subr.mxu0 0.0
        %1918 = vmatpush2.msra.mxu0 %v1307
        %1919 = vmatprep.subr.mxu0 0.0
        %1920 = vmatpush2.msra.mxu0 %v1304
        %1921 = vmatprep.subr.mxu0 0.0
        %1922 = vmatpush2.msra.mxu0 %v1301
        %1923 = vmatprep.subr.mxu0 0.0
        %1924 = vmatpush2.msra.mxu0 %v1298
        %1925 = vmatprep.subr.mxu0 0.0
        %1926 = vmatpush2.msra.mxu0 %v1295
        %1927 = vmatprep.subr.mxu0 0.0
        %1928 = vmatpush2.msra.mxu0 %v1292
        %1929 = vmatprep.subr.mxu0 0.0
        %1930 = vmatpush2.msra.mxu0 %v1289
        %1931 = vmatprep.subr.mxu0 0.0
        %1932 = vmatpush2.msra.mxu0 %v1286
        %1933 = vmatprep.subr.mxu0 0.0
        %1934 = vmatpush2.msra.mxu0 %v1283
        %1935 = vmatprep.subr.mxu0 0.0
        %1936 = vmatpush2.msra.mxu0 %v1280
        %1937 = vmatprep.mubr.f32.mxu0 %v1129
        %1938 = vmatmul.mubr.f32.gmra.mxu0 %v1128
        %v1939 = vpop.f32.mrf.mxu0
        %v1940 = vadd.f32 %v1870, %v1939
        %v1941 = vpop.f32.mrf.mxu0
        %1942 = vdwg.mxu0
        %1943 = vmatprep.subr.mxu0 0.0
        %1944 = vmatpush1.msra.mxu0 %v1373
        %1945 = vmatprep.subr.mxu0 0.0
        %1946 = vmatpush1.msra.mxu0 %v1370
        %1947 = vmatprep.subr.mxu0 0.0
        %1948 = vmatpush1.msra.mxu0 %v1367
        %1949 = vmatprep.subr.mxu0 0.0
        %1950 = vmatpush1.msra.mxu0 %v1364
        %1951 = vmatprep.subr.mxu0 0.0
        %1952 = vmatpush1.msra.mxu0 %v1361
        %1953 = vmatprep.subr.mxu0 0.0
        %1954 = vmatpush1.msra.mxu0 %v1358
        %1955 = vmatprep.subr.mxu0 0.0
        %1956 = vmatpush1.msra.mxu0 %v1355
        %1957 = vmatprep.subr.mxu0 0.0
        %1958 = vmatpush1.msra.mxu0 %v1352
        %1959 = vmatprep.subr.mxu0 0.0
        %1960 = vmatpush1.msra.mxu0 %v1349
        %1961 = vmatprep.subr.mxu0 0.0
        %1962 = vmatpush1.msra.mxu0 %v1346
        %1963 = vmatprep.subr.mxu0 0.0
        %1964 = vmatpush1.msra.mxu0 %v1343
        %1965 = vmatprep.subr.mxu0 0.0
        %1966 = vmatpush1.msra.mxu0 %v1340
        %1967 = vmatprep.subr.mxu0 0.0
        %1968 = vmatpush1.msra.mxu0 %v1337
        %1969 = vmatprep.subr.mxu0 0.0
        %1970 = vmatpush1.msra.mxu0 %v1334
        %1971 = vmatprep.subr.mxu0 0.0
        %1972 = vmatpush1.msra.mxu0 %v1331
        %1973 = vmatprep.subr.mxu0 0.0
        %1974 = vmatpush1.msra.mxu0 %v1328
        %1975 = vmatprep.subr.mxu0 0.0
        %1976 = vmatpush2.msra.mxu0 %v1421
        %1977 = vmatprep.subr.mxu0 0.0
        %1978 = vmatpush2.msra.mxu0 %v1418
        %1979 = vmatprep.subr.mxu0 0.0
        %1980 = vmatpush2.msra.mxu0 %v1415
        %1981 = vmatprep.subr.mxu0 0.0
        %1982 = vmatpush2.msra.mxu0 %v1412
        %1983 = vmatprep.subr.mxu0 0.0
        %1984 = vmatpush2.msra.mxu0 %v1409
        %1985 = vmatprep.subr.mxu0 0.0
        %1986 = vmatpush2.msra.mxu0 %v1406
        %1987 = vmatprep.subr.mxu0 0.0
        %1988 = vmatpush2.msra.mxu0 %v1403
        %1989 = vmatprep.subr.mxu0 0.0
        %1990 = vmatpush2.msra.mxu0 %v1400
        %1991 = vmatprep.subr.mxu0 0.0
        %1992 = vmatpush2.msra.mxu0 %v1397
        %1993 = vmatprep.subr.mxu0 0.0
        %1994 = vmatpush2.msra.mxu0 %v1394
        %1995 = vmatprep.subr.mxu0 0.0
        %1996 = vmatpush2.msra.mxu0 %v1391
        %1997 = vmatprep.subr.mxu0 0.0
        %1998 = vmatpush2.msra.mxu0 %v1388
        %1999 = vmatprep.subr.mxu0 0.0
        %2000 = vmatpush2.msra.mxu0 %v1385
        %2001 = vmatprep.subr.mxu0 0.0
        %2002 = vmatpush2.msra.mxu0 %v1382
        %2003 = vmatprep.subr.mxu0 0.0
        %2004 = vmatpush2.msra.mxu0 %v1379
        %2005 = vmatprep.subr.mxu0 0.0
        %2006 = vmatpush2.msra.mxu0 %v1376
        %2007 = vmatprep.mubr.f32.mxu0 %v1131
        %2008 = vmatmul.mubr.f32.gmra.mxu0 %v1130
        %v2009 = vpop.f32.mrf.mxu0
        %v2010 = vadd.f32 %v1940, %v2009
        %v2011 = vpop.f32.mrf.mxu0
        %2012 = vdwg.mxu0
        %2013 = vmatprep.subr.mxu0 0.0
        %2014 = vmatpush1.msra.mxu0 %v1469
        %2015 = vmatprep.subr.mxu0 0.0
        %2016 = vmatpush1.msra.mxu0 %v1466
        %2017 = vmatprep.subr.mxu0 0.0
        %2018 = vmatpush1.msra.mxu0 %v1463
        %2019 = vmatprep.subr.mxu0 0.0
        %2020 = vmatpush1.msra.mxu0 %v1460
        %2021 = vmatprep.subr.mxu0 0.0
        %2022 = vmatpush1.msra.mxu0 %v1457
        %2023 = vmatprep.subr.mxu0 0.0
        %2024 = vmatpush1.msra.mxu0 %v1454
        %2025 = vmatprep.subr.mxu0 0.0
        %2026 = vmatpush1.msra.mxu0 %v1451
        %2027 = vmatprep.subr.mxu0 0.0
        %2028 = vmatpush1.msra.mxu0 %v1448
        %2029 = vmatprep.subr.mxu0 0.0
        %2030 = vmatpush1.msra.mxu0 %v1445
        %2031 = vmatprep.subr.mxu0 0.0
        %2032 = vmatpush1.msra.mxu0 %v1442
        %2033 = vmatprep.subr.mxu0 0.0
        %2034 = vmatpush1.msra.mxu0 %v1439
        %2035 = vmatprep.subr.mxu0 0.0
        %2036 = vmatpush1.msra.mxu0 %v1436
        %2037 = vmatprep.subr.mxu0 0.0
        %2038 = vmatpush1.msra.mxu0 %v1433
        %2039 = vmatprep.subr.mxu0 0.0
        %2040 = vmatpush1.msra.mxu0 %v1430
        %2041 = vmatprep.subr.mxu0 0.0
        %2042 = vmatpush1.msra.mxu0 %v1427
        %2043 = vmatprep.subr.mxu0 0.0
        %2044 = vmatpush1.msra.mxu0 %v1424
        %2045 = vmatprep.subr.mxu0 0.0
        %2046 = vmatpush2.msra.mxu0 0.0
        %2047 = vmatprep.subr.mxu0 0.0
        %2048 = vmatpush2.msra.mxu0 0.0
        %2049 = vmatprep.subr.mxu0 0.0
        %2050 = vmatpush2.msra.mxu0 0.0
        %2051 = vmatprep.subr.mxu0 0.0
        %2052 = vmatpush2.msra.mxu0 0.0
        %2053 = vmatprep.subr.mxu0 0.0
        %2054 = vmatpush2.msra.mxu0 %v1517
        %2055 = vmatprep.subr.mxu0 0.0
        %2056 = vmatpush2.msra.mxu0 %v1502
        %2057 = vmatprep.subr.mxu0 0.0
        %2058 = vmatpush2.msra.mxu0 %v1499
        %2059 = vmatprep.subr.mxu0 0.0
        %2060 = vmatpush2.msra.mxu0 %v1496
        %2061 = vmatprep.subr.mxu0 0.0
        %2062 = vmatpush2.msra.mxu0 %v1493
        %2063 = vmatprep.subr.mxu0 0.0
        %2064 = vmatpush2.msra.mxu0 %v1490
        %2065 = vmatprep.subr.mxu0 0.0
        %2066 = vmatpush2.msra.mxu0 %v1487
        %2067 = vmatprep.subr.mxu0 0.0
        %2068 = vmatpush2.msra.mxu0 %v1484
        %2069 = vmatprep.subr.mxu0 0.0
        %2070 = vmatpush2.msra.mxu0 %v1481
        %2071 = vmatprep.subr.mxu0 0.0
        %2072 = vmatpush2.msra.mxu0 %v1478
        %2073 = vmatprep.subr.mxu0 0.0
        %2074 = vmatpush2.msra.mxu0 %v1475
        %2075 = vmatprep.subr.mxu0 0.0
        %2076 = vmatpush2.msra.mxu0 %v1472
        %2077 = vmatprep.mubr.f32.mxu0 %v1507
        %2078 = vmatmul.mubr.f32.gmra.mxu0 %v1132
        %v2079 = vpop.f32.mrf.mxu0
        %v2080 = vadd.f32 %v2010, %v2079
        %v2081 = vpop.f32.mrf.mxu0
        %2082 = vdwg.mxu0
        %v2083 = vld [vmem:[%s3] sm:$0xff]
        %v2084 = vld [vmem:[%s3 + $0x8] sm:$0xff]
        %s2085 = scalar_lea.vmem %s3, 16
        %v2086 = vld [vmem:[%s2085] sm:$0xff]
        %v2087 = vld [vmem:[%s2085 + $0x8] sm:$0xff]
        %2090 = vrot.lane.b32.xlu0 %v1799, 127
        %v2091 = vpop.permute.xlu0 %2090
        %2092 = vrot.lane.b32.xlu0 %v1801, 127
        %v2093 = vpop.permute.xlu0 %2092
        %v2094 = vsel %vm538, %v2091, %v2093
        %vm2095 = vcmask 48128
        %v2097 = vsel %vm2095, %v2086, 0
        %v2100 = vsel %vm2095, %v2087, 0
        %vm2102 = vcmask 1045504
        %v2103 = vsel %vm2102, %v2094, 0
        %v2105 = vsel %vm2102, %v2093, 0
        %2107 = vmatprep.subr.mxu0 0.0
        %2108 = vmatpush1.msra.mxu0 0.0
        %2109 = vmatprep.subr.mxu0 0.0
        %2110 = vmatpush1.msra.mxu0 0.0
        %2111 = vmatprep.subr.mxu0 0.0
        %2112 = vmatpush1.msra.mxu0 0.0
        %2113 = vmatprep.subr.mxu0 0.0
        %2114 = vmatpush1.msra.mxu0 0.0
        %2115 = vmatprep.subr.mxu0 0.0
        %2116 = vmatpush1.msra.mxu0 0.0
        %2117 = vmatprep.subr.mxu0 0.0
        %2118 = vmatpush1.msra.mxu0 0.0
        %2119 = vmatprep.subr.mxu0 0.0
        %2120 = vmatpush1.msra.mxu0 0.0
        %2121 = vmatprep.subr.mxu0 0.0
        %2122 = vmatpush1.msra.mxu0 0.0
        %2123 = vmatprep.subr.mxu0 0.0
        %2124 = vmatpush1.msra.mxu0 0.0
        %2125 = vmatprep.subr.mxu0 0.0
        %2126 = vmatpush1.msra.mxu0 0.0
        %2127 = vmatprep.subr.mxu0 0.0
        %2128 = vmatpush1.msra.mxu0 0.0
        %2129 = vmatprep.subr.mxu0 0.0
        %2130 = vmatpush1.msra.mxu0 0.0
        %2131 = vmatprep.subr.mxu0 0.0
        %2132 = vmatpush1.msra.mxu0 0.0
        %2133 = vmatprep.subr.mxu0 0.0
        %2134 = vmatpush1.msra.mxu0 0.0
        %2135 = vmatprep.subr.mxu0 0.0
        %2136 = vmatpush1.msra.mxu0 0.0
        %2137 = vmatprep.subr.mxu0 %v2105
        %2138 = vmatpush1.msra.mxu0 %v2103
        %2139 = vmatprep.subr.mxu0 0.0
        %2140 = vmatpush2.msra.mxu0 0.0
        %2141 = vmatprep.subr.mxu0 0.0
        %2142 = vmatpush2.msra.mxu0 0.0
        %2143 = vmatprep.subr.mxu0 0.0
        %2144 = vmatpush2.msra.mxu0 0.0
        %2145 = vmatprep.subr.mxu0 0.0
        %2146 = vmatpush2.msra.mxu0 0.0
        %2147 = vmatprep.subr.mxu0 0.0
        %2148 = vmatpush2.msra.mxu0 0.0
        %2149 = vmatprep.subr.mxu0 0.0
        %2150 = vmatpush2.msra.mxu0 0.0
        %2151 = vmatprep.subr.mxu0 0.0
        %2152 = vmatpush2.msra.mxu0 0.0
        %2153 = vmatprep.subr.mxu0 0.0
        %2154 = vmatpush2.msra.mxu0 0.0
        %2155 = vmatprep.subr.mxu0 0.0
        %2156 = vmatpush2.msra.mxu0 0.0
        %2157 = vmatprep.subr.mxu0 0.0
        %2158 = vmatpush2.msra.mxu0 0.0
        %2159 = vmatprep.subr.mxu0 0.0
        %2160 = vmatpush2.msra.mxu0 0.0
        %2161 = vmatprep.subr.mxu0 0.0
        %2162 = vmatpush2.msra.mxu0 0.0
        %2163 = vmatprep.subr.mxu0 0.0
        %2164 = vmatpush2.msra.mxu0 0.0
        %2165 = vmatprep.subr.mxu0 0.0
        %2166 = vmatpush2.msra.mxu0 0.0
        %2167 = vmatprep.subr.mxu0 0.0
        %2168 = vmatpush2.msra.mxu0 0.0
        %2169 = vmatprep.subr.mxu0 0.0
        %2170 = vmatpush2.msra.mxu0 0.0
        %2171 = vmatprep.mubr.f32.mxu0 0.0
        %2172 = vmatmul.mubr.f32.gmra.mxu0 %v2097
        %v2173 = vpop.f32.mrf.mxu0
        %v2174 = vadd.f32 0.0, %v2173
        %v2175 = vpop.f32.mrf.mxu0
        %v2176 = vadd.f32 0.0, %v2175
        %2177 = vmatprep.mubr.f32.mxu0 0.0
        %2178 = vmatmul.mubr.f32.gmra.mxu0 %v2100
        %v2179 = vpop.f32.mrf.mxu0
        %v2180 = vadd.f32 0.0, %v2179
        %v2181 = vpop.f32.mrf.mxu0
        %v2182 = vadd.f32 0.0, %v2181
        %2183 = vdwg.mxu0
        %v2185 = vsel %vm2095, %v2083, 0
        %v2188 = vsel %vm2095, %v2084, 0
        %v2190 = vsel %vm2102, %v1799, 0
        %v2192 = vsel %vm2102, %v1801, 0
        %2194 = vmatprep.subr.mxu0 0.0
        %2195 = vmatpush1.msra.mxu0 0.0
        %2196 = vmatprep.subr.mxu0 0.0
        %2197 = vmatpush1.msra.mxu0 0.0
        %2198 = vmatprep.subr.mxu0 0.0
        %2199 = vmatpush1.msra.mxu0 0.0
        %2200 = vmatprep.subr.mxu0 0.0
        %2201 = vmatpush1.msra.mxu0 0.0
        %2202 = vmatprep.subr.mxu0 0.0
        %2203 = vmatpush1.msra.mxu0 0.0
        %2204 = vmatprep.subr.mxu0 0.0
        %2205 = vmatpush1.msra.mxu0 0.0
        %2206 = vmatprep.subr.mxu0 0.0
        %2207 = vmatpush1.msra.mxu0 0.0
        %2208 = vmatprep.subr.mxu0 0.0
        %2209 = vmatpush1.msra.mxu0 0.0
        %2210 = vmatprep.subr.mxu0 0.0
        %2211 = vmatpush1.msra.mxu0 0.0
        %2212 = vmatprep.subr.mxu0 0.0
        %2213 = vmatpush1.msra.mxu0 0.0
        %2214 = vmatprep.subr.mxu0 0.0
        %2215 = vmatpush1.msra.mxu0 0.0
        %2216 = vmatprep.subr.mxu0 0.0
        %2217 = vmatpush1.msra.mxu0 0.0
        %2218 = vmatprep.subr.mxu0 0.0
        %2219 = vmatpush1.msra.mxu0 0.0
        %2220 = vmatprep.subr.mxu0 0.0
        %2221 = vmatpush1.msra.mxu0 0.0
        %2222 = vmatprep.subr.mxu0 0.0
        %2223 = vmatpush1.msra.mxu0 0.0
        %2224 = vmatprep.subr.mxu0 %v2192
        %2225 = vmatpush1.msra.mxu0 %v2190
        %2226 = vmatprep.subr.mxu0 0.0
        %2227 = vmatpush2.msra.mxu0 0.0
        %2228 = vmatprep.subr.mxu0 0.0
        %2229 = vmatpush2.msra.mxu0 0.0
        %2230 = vmatprep.subr.mxu0 0.0
        %2231 = vmatpush2.msra.mxu0 0.0
        %2232 = vmatprep.subr.mxu0 0.0
        %2233 = vmatpush2.msra.mxu0 0.0
        %2234 = vmatprep.subr.mxu0 0.0
        %2235 = vmatpush2.msra.mxu0 0.0
        %2236 = vmatprep.subr.mxu0 0.0
        %2237 = vmatpush2.msra.mxu0 0.0
        %2238 = vmatprep.subr.mxu0 0.0
        %2239 = vmatpush2.msra.mxu0 0.0
        %2240 = vmatprep.subr.mxu0 0.0
        %2241 = vmatpush2.msra.mxu0 0.0
        %2242 = vmatprep.subr.mxu0 0.0
        %2243 = vmatpush2.msra.mxu0 0.0
        %2244 = vmatprep.subr.mxu0 0.0
        %2245 = vmatpush2.msra.mxu0 0.0
        %2246 = vmatprep.subr.mxu0 0.0
        %2247 = vmatpush2.msra.mxu0 0.0
        %2248 = vmatprep.subr.mxu0 0.0
        %2249 = vmatpush2.msra.mxu0 0.0
        %2250 = vmatprep.subr.mxu0 0.0
        %2251 = vmatpush2.msra.mxu0 0.0
        %2252 = vmatprep.subr.mxu0 0.0
        %2253 = vmatpush2.msra.mxu0 0.0
        %2254 = vmatprep.subr.mxu0 0.0
        %2255 = vmatpush2.msra.mxu0 0.0
        %2256 = vmatprep.subr.mxu0 0.0
        %2257 = vmatpush2.msra.mxu0 0.0
        %2258 = vmatprep.mubr.f32.mxu0 0.0
        %2259 = vmatmul.mubr.f32.gmra.mxu0 %v2185
        %v2260 = vpop.f32.mrf.mxu0
        %v2261 = vadd.f32 %v2174, %v2260
        %v2262 = vpop.f32.mrf.mxu0
        %v2263 = vadd.f32 %v2176, %v2262
        %2264 = vmatprep.mubr.f32.mxu0 0.0
        %2265 = vmatmul.mubr.f32.gmra.mxu0 %v2188
        %v2266 = vpop.f32.mrf.mxu0
        %v2267 = vadd.f32 %v2180, %v2266
        %v2268 = vpop.f32.mrf.mxu0
        %v2269 = vadd.f32 %v2182, %v2268
        %2270 = vdwg.mxu0
        %s2271 = scalar_lea.vmem %s3, 32
        %v2272 = vld [vmem:[%s2271] sm:$0xff]
        %v2273 = vld [vmem:[%s2271 + $0x8] sm:$0xff]
        %2274 = vrot.lane.b32.xlu0 %v1799, 126
        %v2275 = vpop.permute.xlu0 %2274
        %2276 = vrot.lane.b32.xlu0 %v1801, 126
        %v2277 = vpop.permute.xlu0 %2276
        %v2278 = vsel %vm603, %v2275, %v2277
        %v2280 = vsel %vm2095, %v2272, 0
        %v2283 = vsel %vm2095, %v2273, 0
        %v2285 = vsel %vm2102, %v2278, 0
        %v2287 = vsel %vm2102, %v2277, 0
        %2289 = vmatprep.subr.mxu0 0.0
        %2290 = vmatpush1.msra.mxu0 0.0
        %2291 = vmatprep.subr.mxu0 0.0
        %2292 = vmatpush1.msra.mxu0 0.0
        %2293 = vmatprep.subr.mxu0 0.0
        %2294 = vmatpush1.msra.mxu0 0.0
        %2295 = vmatprep.subr.mxu0 0.0
        %2296 = vmatpush1.msra.mxu0 0.0
        %2297 = vmatprep.subr.mxu0 0.0
        %2298 = vmatpush1.msra.mxu0 0.0
        %2299 = vmatprep.subr.mxu0 0.0
        %2300 = vmatpush1.msra.mxu0 0.0
        %2301 = vmatprep.subr.mxu0 0.0
        %2302 = vmatpush1.msra.mxu0 0.0
        %2303 = vmatprep.subr.mxu0 0.0
        %2304 = vmatpush1.msra.mxu0 0.0
        %2305 = vmatprep.subr.mxu0 0.0
        %2306 = vmatpush1.msra.mxu0 0.0
        %2307 = vmatprep.subr.mxu0 0.0
        %2308 = vmatpush1.msra.mxu0 0.0
        %2309 = vmatprep.subr.mxu0 0.0
        %2310 = vmatpush1.msra.mxu0 0.0
        %2311 = vmatprep.subr.mxu0 0.0
        %2312 = vmatpush1.msra.mxu0 0.0
        %2313 = vmatprep.subr.mxu0 0.0
        %2314 = vmatpush1.msra.mxu0 0.0
        %2315 = vmatprep.subr.mxu0 0.0
        %2316 = vmatpush1.msra.mxu0 0.0
        %2317 = vmatprep.subr.mxu0 0.0
        %2318 = vmatpush1.msra.mxu0 0.0
        %2319 = vmatprep.subr.mxu0 %v2287
        %2320 = vmatpush1.msra.mxu0 %v2285
        %2321 = vmatprep.subr.mxu0 0.0
        %2322 = vmatpush2.msra.mxu0 0.0
        %2323 = vmatprep.subr.mxu0 0.0
        %2324 = vmatpush2.msra.mxu0 0.0
        %2325 = vmatprep.subr.mxu0 0.0
        %2326 = vmatpush2.msra.mxu0 0.0
        %2327 = vmatprep.subr.mxu0 0.0
        %2328 = vmatpush2.msra.mxu0 0.0
        %2329 = vmatprep.subr.mxu0 0.0
        %2330 = vmatpush2.msra.mxu0 0.0
        %2331 = vmatprep.subr.mxu0 0.0
        %2332 = vmatpush2.msra.mxu0 0.0
        %2333 = vmatprep.subr.mxu0 0.0
        %2334 = vmatpush2.msra.mxu0 0.0
        %2335 = vmatprep.subr.mxu0 0.0
        %2336 = vmatpush2.msra.mxu0 0.0
        %2337 = vmatprep.subr.mxu0 0.0
        %2338 = vmatpush2.msra.mxu0 0.0
        %2339 = vmatprep.subr.mxu0 0.0
        %2340 = vmatpush2.msra.mxu0 0.0
        %2341 = vmatprep.subr.mxu0 0.0
        %2342 = vmatpush2.msra.mxu0 0.0
        %2343 = vmatprep.subr.mxu0 0.0
        %2344 = vmatpush2.msra.mxu0 0.0
        %2345 = vmatprep.subr.mxu0 0.0
        %2346 = vmatpush2.msra.mxu0 0.0
        %2347 = vmatprep.subr.mxu0 0.0
        %2348 = vmatpush2.msra.mxu0 0.0
        %2349 = vmatprep.subr.mxu0 0.0
        %2350 = vmatpush2.msra.mxu0 0.0
        %2351 = vmatprep.subr.mxu0 0.0
        %2352 = vmatpush2.msra.mxu0 0.0
        %2353 = vmatprep.mubr.f32.mxu0 0.0
        %2354 = vmatmul.mubr.f32.gmra.mxu0 %v2280
        %v2355 = vpop.f32.mrf.mxu0
        %v2356 = vadd.f32 0.0, %v2355
        %v2357 = vpop.f32.mrf.mxu0
        %v2358 = vadd.f32 0.0, %v2357
        %2359 = vmatprep.mubr.f32.mxu0 0.0
        %2360 = vmatmul.mubr.f32.gmra.mxu0 %v2283
        %v2361 = vpop.f32.mrf.mxu0
        %v2362 = vadd.f32 0.0, %v2361
        %v2363 = vpop.f32.mrf.mxu0
        %v2364 = vadd.f32 0.0, %v2363
        %2365 = vdwg.mxu0
        %v2366 = vadd.f32 %v2261, %v2356
        %v2367 = vadd.f32 %v2263, %v2358
        %v2368 = vadd.f32 %v2267, %v2362
        %v2369 = vadd.f32 %v2269, %v2364
        %s2370 = scalar_lea.vmem %s3, 48
        %v2371 = vld [vmem:[%s2370] sm:$0xff]
        %v2372 = vld [vmem:[%s2370 + $0x8] sm:$0xff]
        %2373 = vrot.lane.b32.xlu0 %v1799, 113
        %v2374 = vpop.permute.xlu0 %2373
        %2375 = vrot.lane.b32.xlu0 %v1801, 113
        %v2376 = vpop.permute.xlu0 %2375
        %vm2377 = vcmask 924672
        %v2378 = vsel %vm2377, %v2374, %v2376
        %v2380 = vsel %vm2095, %v2371, 0
        %v2383 = vsel %vm2095, %v2372, 0
        %v2385 = vsel %vm2102, %v2378, 0
        %v2387 = vsel %vm2102, %v2376, 0
        %2389 = vmatprep.subr.mxu0 0.0
        %2390 = vmatpush1.msra.mxu0 0.0
        %2391 = vmatprep.subr.mxu0 0.0
        %2392 = vmatpush1.msra.mxu0 0.0
        %2393 = vmatprep.subr.mxu0 0.0
        %2394 = vmatpush1.msra.mxu0 0.0
        %2395 = vmatprep.subr.mxu0 0.0
        %2396 = vmatpush1.msra.mxu0 0.0
        %2397 = vmatprep.subr.mxu0 0.0
        %2398 = vmatpush1.msra.mxu0 0.0
        %2399 = vmatprep.subr.mxu0 0.0
        %2400 = vmatpush1.msra.mxu0 0.0
        %2401 = vmatprep.subr.mxu0 0.0
        %2402 = vmatpush1.msra.mxu0 0.0
        %2403 = vmatprep.subr.mxu0 0.0
        %2404 = vmatpush1.msra.mxu0 0.0
        %2405 = vmatprep.subr.mxu0 0.0
        %2406 = vmatpush1.msra.mxu0 0.0
        %2407 = vmatprep.subr.mxu0 0.0
        %2408 = vmatpush1.msra.mxu0 0.0
        %2409 = vmatprep.subr.mxu0 0.0
        %2410 = vmatpush1.msra.mxu0 0.0
        %2411 = vmatprep.subr.mxu0 0.0
        %2412 = vmatpush1.msra.mxu0 0.0
        %2413 = vmatprep.subr.mxu0 0.0
        %2414 = vmatpush1.msra.mxu0 0.0
        %2415 = vmatprep.subr.mxu0 0.0
        %2416 = vmatpush1.msra.mxu0 0.0
        %2417 = vmatprep.subr.mxu0 0.0
        %2418 = vmatpush1.msra.mxu0 0.0
        %2419 = vmatprep.subr.mxu0 %v2387
        %2420 = vmatpush1.msra.mxu0 %v2385
        %2421 = vmatprep.subr.mxu0 0.0
        %2422 = vmatpush2.msra.mxu0 0.0
        %2423 = vmatprep.subr.mxu0 0.0
        %2424 = vmatpush2.msra.mxu0 0.0
        %2425 = vmatprep.subr.mxu0 0.0
        %2426 = vmatpush2.msra.mxu0 0.0
        %2427 = vmatprep.subr.mxu0 0.0
        %2428 = vmatpush2.msra.mxu0 0.0
        %2429 = vmatprep.subr.mxu0 0.0
        %2430 = vmatpush2.msra.mxu0 0.0
        %2431 = vmatprep.subr.mxu0 0.0
        %2432 = vmatpush2.msra.mxu0 0.0
        %2433 = vmatprep.subr.mxu0 0.0
        %2434 = vmatpush2.msra.mxu0 0.0
        %2435 = vmatprep.subr.mxu0 0.0
        %2436 = vmatpush2.msra.mxu0 0.0
        %2437 = vmatprep.subr.mxu0 0.0
        %2438 = vmatpush2.msra.mxu0 0.0
        %2439 = vmatprep.subr.mxu0 0.0
        %2440 = vmatpush2.msra.mxu0 0.0
        %2441 = vmatprep.subr.mxu0 0.0
        %2442 = vmatpush2.msra.mxu0 0.0
        %2443 = vmatprep.subr.mxu0 0.0
        %2444 = vmatpush2.msra.mxu0 0.0
        %2445 = vmatprep.subr.mxu0 0.0
        %2446 = vmatpush2.msra.mxu0 0.0
        %2447 = vmatprep.subr.mxu0 0.0
        %2448 = vmatpush2.msra.mxu0 0.0
        %2449 = vmatprep.subr.mxu0 0.0
        %2450 = vmatpush2.msra.mxu0 0.0
        %2451 = vmatprep.subr.mxu0 0.0
        %2452 = vmatpush2.msra.mxu0 0.0
        %2453 = vmatprep.mubr.f32.mxu0 0.0
        %2454 = vmatmul.mubr.f32.gmra.mxu0 %v2380
        %v2455 = vpop.f32.mrf.mxu0
        %v2456 = vadd.f32 0.0, %v2455
        %v2457 = vpop.f32.mrf.mxu0
        %v2458 = vadd.f32 0.0, %v2457
        %2459 = vmatprep.mubr.f32.mxu0 0.0
        %2460 = vmatmul.mubr.f32.gmra.mxu0 %v2383
        %v2461 = vpop.f32.mrf.mxu0
        %v2462 = vadd.f32 0.0, %v2461
        %v2463 = vpop.f32.mrf.mxu0
        %v2464 = vadd.f32 0.0, %v2463
        %2465 = vdwg.mxu0
        %v2466 = vadd.f32 %v2366, %v2456
        %v2467 = vadd.f32 %v2367, %v2458
        %v2468 = vadd.f32 %v2368, %v2462
        %v2469 = vadd.f32 %v2369, %v2464
        %s2470 = scalar_lea.vmem %s3, 64
        %v2471 = vld [vmem:[%s2470] sm:$0xff]
        %v2472 = vld [vmem:[%s2470 + $0x8] sm:$0xff]
        %2473 = vrot.lane.b32.xlu0 %v1799, 112
        %v2474 = vpop.permute.xlu0 %2473
        %2475 = vrot.lane.b32.xlu0 %v1801, 112
        %v2476 = vpop.permute.xlu0 %2475
        %vm2477 = vcmask 916480
        %v2478 = vsel %vm2477, %v2474, %v2476
        %v2480 = vsel %vm2095, %v2471, 0
        %v2483 = vsel %vm2095, %v2472, 0
        %v2485 = vsel %vm2102, %v2478, 0
        %v2487 = vsel %vm2102, %v2476, 0
        %2489 = vmatprep.subr.mxu0 0.0
        %2490 = vmatpush1.msra.mxu0 0.0
        %2491 = vmatprep.subr.mxu0 0.0
        %2492 = vmatpush1.msra.mxu0 0.0
        %2493 = vmatprep.subr.mxu0 0.0
        %2494 = vmatpush1.msra.mxu0 0.0
        %2495 = vmatprep.subr.mxu0 0.0
        %2496 = vmatpush1.msra.mxu0 0.0
        %2497 = vmatprep.subr.mxu0 0.0
        %2498 = vmatpush1.msra.mxu0 0.0
        %2499 = vmatprep.subr.mxu0 0.0
        %2500 = vmatpush1.msra.mxu0 0.0
        %2501 = vmatprep.subr.mxu0 0.0
        %2502 = vmatpush1.msra.mxu0 0.0
        %2503 = vmatprep.subr.mxu0 0.0
        %2504 = vmatpush1.msra.mxu0 0.0
        %2505 = vmatprep.subr.mxu0 0.0
        %2506 = vmatpush1.msra.mxu0 0.0
        %2507 = vmatprep.subr.mxu0 0.0
        %2508 = vmatpush1.msra.mxu0 0.0
        %2509 = vmatprep.subr.mxu0 0.0
        %2510 = vmatpush1.msra.mxu0 0.0
        %2511 = vmatprep.subr.mxu0 0.0
        %2512 = vmatpush1.msra.mxu0 0.0
        %2513 = vmatprep.subr.mxu0 0.0
        %2514 = vmatpush1.msra.mxu0 0.0
        %2515 = vmatprep.subr.mxu0 0.0
        %2516 = vmatpush1.msra.mxu0 0.0
        %2517 = vmatprep.subr.mxu0 0.0
        %2518 = vmatpush1.msra.mxu0 0.0
        %2519 = vmatprep.subr.mxu0 %v2487
        %2520 = vmatpush1.msra.mxu0 %v2485
        %2521 = vmatprep.subr.mxu0 0.0
        %2522 = vmatpush2.msra.mxu0 0.0
        %2523 = vmatprep.subr.mxu0 0.0
        %2524 = vmatpush2.msra.mxu0 0.0
        %2525 = vmatprep.subr.mxu0 0.0
        %2526 = vmatpush2.msra.mxu0 0.0
        %2527 = vmatprep.subr.mxu0 0.0
        %2528 = vmatpush2.msra.mxu0 0.0
        %2529 = vmatprep.subr.mxu0 0.0
        %2530 = vmatpush2.msra.mxu0 0.0
        %2531 = vmatprep.subr.mxu0 0.0
        %2532 = vmatpush2.msra.mxu0 0.0
        %2533 = vmatprep.subr.mxu0 0.0
        %2534 = vmatpush2.msra.mxu0 0.0
        %2535 = vmatprep.subr.mxu0 0.0
        %2536 = vmatpush2.msra.mxu0 0.0
        %2537 = vmatprep.subr.mxu0 0.0
        %2538 = vmatpush2.msra.mxu0 0.0
        %2539 = vmatprep.subr.mxu0 0.0
        %2540 = vmatpush2.msra.mxu0 0.0
        %2541 = vmatprep.subr.mxu0 0.0
        %2542 = vmatpush2.msra.mxu0 0.0
        %2543 = vmatprep.subr.mxu0 0.0
        %2544 = vmatpush2.msra.mxu0 0.0
        %2545 = vmatprep.subr.mxu0 0.0
        %2546 = vmatpush2.msra.mxu0 0.0
        %2547 = vmatprep.subr.mxu0 0.0
        %2548 = vmatpush2.msra.mxu0 0.0
        %2549 = vmatprep.subr.mxu0 0.0
        %2550 = vmatpush2.msra.mxu0 0.0
        %2551 = vmatprep.subr.mxu0 0.0
        %2552 = vmatpush2.msra.mxu0 0.0
        %2553 = vmatprep.mubr.f32.mxu0 0.0
        %2554 = vmatmul.mubr.f32.gmra.mxu0 %v2480
        %v2555 = vpop.f32.mrf.mxu0
        %v2556 = vadd.f32 0.0, %v2555
        %v2557 = vpop.f32.mrf.mxu0
        %v2558 = vadd.f32 0.0, %v2557
        %2559 = vmatprep.mubr.f32.mxu0 0.0
        %2560 = vmatmul.mubr.f32.gmra.mxu0 %v2483
        %v2561 = vpop.f32.mrf.mxu0
        %v2562 = vadd.f32 0.0, %v2561
        %v2563 = vpop.f32.mrf.mxu0
        %v2564 = vadd.f32 0.0, %v2563
        %2565 = vdwg.mxu0
        %v2566 = vadd.f32 %v2466, %v2556
        %v2567 = vadd.f32 %v2467, %v2558
        %v2568 = vadd.f32 %v2468, %v2562
        %v2569 = vadd.f32 %v2469, %v2564
        %s2570 = scalar_lea.vmem %s3, 80
        %v2571 = vld [vmem:[%s2570] sm:$0xff]
        %v2572 = vld [vmem:[%s2570 + $0x8] sm:$0xff]
        %2573 = vrot.lane.b32.xlu0 %v1799, 111
        %v2574 = vpop.permute.xlu0 %2573
        %2575 = vrot.lane.b32.xlu0 %v1801, 111
        %v2576 = vpop.permute.xlu0 %2575
        %vm2577 = vcmask 908288
        %v2578 = vsel %vm2577, %v2574, %v2576
        %v2580 = vsel %vm2095, %v2571, 0
        %v2583 = vsel %vm2095, %v2572, 0
        %v2585 = vsel %vm2102, %v2578, 0
        %v2587 = vsel %vm2102, %v2576, 0
        %2589 = vmatprep.subr.mxu0 0.0
        %2590 = vmatpush1.msra.mxu0 0.0
        %2591 = vmatprep.subr.mxu0 0.0
        %2592 = vmatpush1.msra.mxu0 0.0
        %2593 = vmatprep.subr.mxu0 0.0
        %2594 = vmatpush1.msra.mxu0 0.0
        %2595 = vmatprep.subr.mxu0 0.0
        %2596 = vmatpush1.msra.mxu0 0.0
        %2597 = vmatprep.subr.mxu0 0.0
        %2598 = vmatpush1.msra.mxu0 0.0
        %2599 = vmatprep.subr.mxu0 0.0
        %2600 = vmatpush1.msra.mxu0 0.0
        %2601 = vmatprep.subr.mxu0 0.0
        %2602 = vmatpush1.msra.mxu0 0.0
        %2603 = vmatprep.subr.mxu0 0.0
        %2604 = vmatpush1.msra.mxu0 0.0
        %2605 = vmatprep.subr.mxu0 0.0
        %2606 = vmatpush1.msra.mxu0 0.0
        %2607 = vmatprep.subr.mxu0 0.0
        %2608 = vmatpush1.msra.mxu0 0.0
        %2609 = vmatprep.subr.mxu0 0.0
        %2610 = vmatpush1.msra.mxu0 0.0
        %2611 = vmatprep.subr.mxu0 0.0
        %2612 = vmatpush1.msra.mxu0 0.0
        %2613 = vmatprep.subr.mxu0 0.0
        %2614 = vmatpush1.msra.mxu0 0.0
        %2615 = vmatprep.subr.mxu0 0.0
        %2616 = vmatpush1.msra.mxu0 0.0
        %2617 = vmatprep.subr.mxu0 0.0
        %2618 = vmatpush1.msra.mxu0 0.0
        %2619 = vmatprep.subr.mxu0 %v2587
        %2620 = vmatpush1.msra.mxu0 %v2585
        %2621 = vmatprep.subr.mxu0 0.0
        %2622 = vmatpush2.msra.mxu0 0.0
        %2623 = vmatprep.subr.mxu0 0.0
        %2624 = vmatpush2.msra.mxu0 0.0
        %2625 = vmatprep.subr.mxu0 0.0
        %2626 = vmatpush2.msra.mxu0 0.0
        %2627 = vmatprep.subr.mxu0 0.0
        %2628 = vmatpush2.msra.mxu0 0.0
        %2629 = vmatprep.subr.mxu0 0.0
        %2630 = vmatpush2.msra.mxu0 0.0
        %2631 = vmatprep.subr.mxu0 0.0
        %2632 = vmatpush2.msra.mxu0 0.0
        %2633 = vmatprep.subr.mxu0 0.0
        %2634 = vmatpush2.msra.mxu0 0.0
        %2635 = vmatprep.subr.mxu0 0.0
        %2636 = vmatpush2.msra.mxu0 0.0
        %2637 = vmatprep.subr.mxu0 0.0
        %2638 = vmatpush2.msra.mxu0 0.0
        %2639 = vmatprep.subr.mxu0 0.0
        %2640 = vmatpush2.msra.mxu0 0.0
        %2641 = vmatprep.subr.mxu0 0.0
        %2642 = vmatpush2.msra.mxu0 0.0
        %2643 = vmatprep.subr.mxu0 0.0
        %2644 = vmatpush2.msra.mxu0 0.0
        %2645 = vmatprep.subr.mxu0 0.0
        %2646 = vmatpush2.msra.mxu0 0.0
        %2647 = vmatprep.subr.mxu0 0.0
        %2648 = vmatpush2.msra.mxu0 0.0
        %2649 = vmatprep.subr.mxu0 0.0
        %2650 = vmatpush2.msra.mxu0 0.0
        %2651 = vmatprep.subr.mxu0 0.0
        %2652 = vmatpush2.msra.mxu0 0.0
        %2653 = vmatprep.mubr.f32.mxu0 0.0
        %2654 = vmatmul.mubr.f32.gmra.mxu0 %v2580
        %v2655 = vpop.f32.mrf.mxu0
        %v2656 = vadd.f32 0.0, %v2655
        %v2657 = vpop.f32.mrf.mxu0
        %v2658 = vadd.f32 0.0, %v2657
        %2659 = vmatprep.mubr.f32.mxu0 0.0
        %2660 = vmatmul.mubr.f32.gmra.mxu0 %v2583
        %v2661 = vpop.f32.mrf.mxu0
        %v2662 = vadd.f32 0.0, %v2661
        %v2663 = vpop.f32.mrf.mxu0
        %v2664 = vadd.f32 0.0, %v2663
        %2665 = vdwg.mxu0
        %v2666 = vadd.f32 %v2566, %v2656
        %v2667 = vadd.f32 %v2567, %v2658
        %v2668 = vadd.f32 %v2568, %v2662
        %v2669 = vadd.f32 %v2569, %v2664
        %s2670 = scalar_lea.vmem %s3, 96
        %v2671 = vld [vmem:[%s2670] sm:$0xff]
        %v2672 = vld [vmem:[%s2670 + $0x8] sm:$0xff]
        %2673 = vrot.lane.b32.xlu0 %v1799, 98
        %v2674 = vpop.permute.xlu0 %2673
        %2675 = vrot.lane.b32.xlu0 %v1801, 98
        %v2676 = vpop.permute.xlu0 %2675
        %vm2677 = vcmask 801792
        %v2678 = vsel %vm2677, %v2674, %v2676
        %v2680 = vsel %vm2095, %v2671, 0
        %v2683 = vsel %vm2095, %v2672, 0
        %v2685 = vsel %vm2102, %v2678, 0
        %v2687 = vsel %vm2102, %v2676, 0
        %2689 = vmatprep.subr.mxu0 0.0
        %2690 = vmatpush1.msra.mxu0 0.0
        %2691 = vmatprep.subr.mxu0 0.0
        %2692 = vmatpush1.msra.mxu0 0.0
        %2693 = vmatprep.subr.mxu0 0.0
        %2694 = vmatpush1.msra.mxu0 0.0
        %2695 = vmatprep.subr.mxu0 0.0
        %2696 = vmatpush1.msra.mxu0 0.0
        %2697 = vmatprep.subr.mxu0 0.0
        %2698 = vmatpush1.msra.mxu0 0.0
        %2699 = vmatprep.subr.mxu0 0.0
        %2700 = vmatpush1.msra.mxu0 0.0
        %2701 = vmatprep.subr.mxu0 0.0
        %2702 = vmatpush1.msra.mxu0 0.0
        %2703 = vmatprep.subr.mxu0 0.0
        %2704 = vmatpush1.msra.mxu0 0.0
        %2705 = vmatprep.subr.mxu0 0.0
        %2706 = vmatpush1.msra.mxu0 0.0
        %2707 = vmatprep.subr.mxu0 0.0
        %2708 = vmatpush1.msra.mxu0 0.0
        %2709 = vmatprep.subr.mxu0 0.0
        %2710 = vmatpush1.msra.mxu0 0.0
        %2711 = vmatprep.subr.mxu0 0.0
        %2712 = vmatpush1.msra.mxu0 0.0
        %2713 = vmatprep.subr.mxu0 0.0
        %2714 = vmatpush1.msra.mxu0 0.0
        %2715 = vmatprep.subr.mxu0 0.0
        %2716 = vmatpush1.msra.mxu0 0.0
        %2717 = vmatprep.subr.mxu0 0.0
        %2718 = vmatpush1.msra.mxu0 0.0
        %2719 = vmatprep.subr.mxu0 %v2687
        %2720 = vmatpush1.msra.mxu0 %v2685
        %2721 = vmatprep.subr.mxu0 0.0
        %2722 = vmatpush2.msra.mxu0 0.0
        %2723 = vmatprep.subr.mxu0 0.0
        %2724 = vmatpush2.msra.mxu0 0.0
        %2725 = vmatprep.subr.mxu0 0.0
        %2726 = vmatpush2.msra.mxu0 0.0
        %2727 = vmatprep.subr.mxu0 0.0
        %2728 = vmatpush2.msra.mxu0 0.0
        %2729 = vmatprep.subr.mxu0 0.0
        %2730 = vmatpush2.msra.mxu0 0.0
        %2731 = vmatprep.subr.mxu0 0.0
        %2732 = vmatpush2.msra.mxu0 0.0
        %2733 = vmatprep.subr.mxu0 0.0
        %2734 = vmatpush2.msra.mxu0 0.0
        %2735 = vmatprep.subr.mxu0 0.0
        %2736 = vmatpush2.msra.mxu0 0.0
        %2737 = vmatprep.subr.mxu0 0.0
        %2738 = vmatpush2.msra.mxu0 0.0
        %2739 = vmatprep.subr.mxu0 0.0
        %2740 = vmatpush2.msra.mxu0 0.0
        %2741 = vmatprep.subr.mxu0 0.0
        %2742 = vmatpush2.msra.mxu0 0.0
        %2743 = vmatprep.subr.mxu0 0.0
        %2744 = vmatpush2.msra.mxu0 0.0
        %2745 = vmatprep.subr.mxu0 0.0
        %2746 = vmatpush2.msra.mxu0 0.0
        %2747 = vmatprep.subr.mxu0 0.0
        %2748 = vmatpush2.msra.mxu0 0.0
        %2749 = vmatprep.subr.mxu0 0.0
        %2750 = vmatpush2.msra.mxu0 0.0
        %2751 = vmatprep.subr.mxu0 0.0
        %2752 = vmatpush2.msra.mxu0 0.0
        %2753 = vmatprep.mubr.f32.mxu0 0.0
        %2754 = vmatmul.mubr.f32.gmra.mxu0 %v2680
        %v2755 = vpop.f32.mrf.mxu0
        %v2756 = vadd.f32 0.0, %v2755
        %v2757 = vpop.f32.mrf.mxu0
        %v2758 = vadd.f32 0.0, %v2757
        %2759 = vmatprep.mubr.f32.mxu0 0.0
        %2760 = vmatmul.mubr.f32.gmra.mxu0 %v2683
        %v2761 = vpop.f32.mrf.mxu0
        %v2762 = vadd.f32 0.0, %v2761
        %v2763 = vpop.f32.mrf.mxu0
        %v2764 = vadd.f32 0.0, %v2763
        %2765 = vdwg.mxu0
        %v2766 = vadd.f32 %v2666, %v2756
        %v2767 = vadd.f32 %v2667, %v2758
        %v2768 = vadd.f32 %v2668, %v2762
        %v2769 = vadd.f32 %v2669, %v2764
        %s2770 = scalar_lea.vmem %s3, 112
        %v2771 = vld [vmem:[%s2770] sm:$0xff]
        %v2772 = vld [vmem:[%s2770 + $0x8] sm:$0xff]
        %2773 = vrot.lane.b32.xlu0 %v1799, 97
        %v2774 = vpop.permute.xlu0 %2773
        %2775 = vrot.lane.b32.xlu0 %v1801, 97
        %v2776 = vpop.permute.xlu0 %2775
        %vm2777 = vcmask 793600
        %v2778 = vsel %vm2777, %v2774, %v2776
        %v2780 = vsel %vm2095, %v2771, 0
        %v2783 = vsel %vm2095, %v2772, 0
        %v2785 = vsel %vm2102, %v2778, 0
        %v2787 = vsel %vm2102, %v2776, 0
        %2789 = vmatprep.subr.mxu0 0.0
        %2790 = vmatpush1.msra.mxu0 0.0
        %2791 = vmatprep.subr.mxu0 0.0
        %2792 = vmatpush1.msra.mxu0 0.0
        %2793 = vmatprep.subr.mxu0 0.0
        %2794 = vmatpush1.msra.mxu0 0.0
        %2795 = vmatprep.subr.mxu0 0.0
        %2796 = vmatpush1.msra.mxu0 0.0
        %2797 = vmatprep.subr.mxu0 0.0
        %2798 = vmatpush1.msra.mxu0 0.0
        %2799 = vmatprep.subr.mxu0 0.0
        %2800 = vmatpush1.msra.mxu0 0.0
        %2801 = vmatprep.subr.mxu0 0.0
        %2802 = vmatpush1.msra.mxu0 0.0
        %2803 = vmatprep.subr.mxu0 0.0
        %2804 = vmatpush1.msra.mxu0 0.0
        %2805 = vmatprep.subr.mxu0 0.0
        %2806 = vmatpush1.msra.mxu0 0.0
        %2807 = vmatprep.subr.mxu0 0.0
        %2808 = vmatpush1.msra.mxu0 0.0
        %2809 = vmatprep.subr.mxu0 0.0
        %2810 = vmatpush1.msra.mxu0 0.0
        %2811 = vmatprep.subr.mxu0 0.0
        %2812 = vmatpush1.msra.mxu0 0.0
        %2813 = vmatprep.subr.mxu0 0.0
        %2814 = vmatpush1.msra.mxu0 0.0
        %2815 = vmatprep.subr.mxu0 0.0
        %2816 = vmatpush1.msra.mxu0 0.0
        %2817 = vmatprep.subr.mxu0 0.0
        %2818 = vmatpush1.msra.mxu0 0.0
        %2819 = vmatprep.subr.mxu0 %v2787
        %2820 = vmatpush1.msra.mxu0 %v2785
        %2821 = vmatprep.subr.mxu0 0.0
        %2822 = vmatpush2.msra.mxu0 0.0
        %2823 = vmatprep.subr.mxu0 0.0
        %2824 = vmatpush2.msra.mxu0 0.0
        %2825 = vmatprep.subr.mxu0 0.0
        %2826 = vmatpush2.msra.mxu0 0.0
        %2827 = vmatprep.subr.mxu0 0.0
        %2828 = vmatpush2.msra.mxu0 0.0
        %2829 = vmatprep.subr.mxu0 0.0
        %2830 = vmatpush2.msra.mxu0 0.0
        %2831 = vmatprep.subr.mxu0 0.0
        %2832 = vmatpush2.msra.mxu0 0.0
        %2833 = vmatprep.subr.mxu0 0.0
        %2834 = vmatpush2.msra.mxu0 0.0
        %2835 = vmatprep.subr.mxu0 0.0
        %2836 = vmatpush2.msra.mxu0 0.0
        %2837 = vmatprep.subr.mxu0 0.0
        %2838 = vmatpush2.msra.mxu0 0.0
        %2839 = vmatprep.subr.mxu0 0.0
        %2840 = vmatpush2.msra.mxu0 0.0
        %2841 = vmatprep.subr.mxu0 0.0
        %2842 = vmatpush2.msra.mxu0 0.0
        %2843 = vmatprep.subr.mxu0 0.0
        %2844 = vmatpush2.msra.mxu0 0.0
        %2845 = vmatprep.subr.mxu0 0.0
        %2846 = vmatpush2.msra.mxu0 0.0
        %2847 = vmatprep.subr.mxu0 0.0
        %2848 = vmatpush2.msra.mxu0 0.0
        %2849 = vmatprep.subr.mxu0 0.0
        %2850 = vmatpush2.msra.mxu0 0.0
        %2851 = vmatprep.subr.mxu0 0.0
        %2852 = vmatpush2.msra.mxu0 0.0
        %2853 = vmatprep.mubr.f32.mxu0 0.0
        %2854 = vmatmul.mubr.f32.gmra.mxu0 %v2780
        %v2855 = vpop.f32.mrf.mxu0
        %v2856 = vadd.f32 0.0, %v2855
        %v2857 = vpop.f32.mrf.mxu0
        %v2858 = vadd.f32 0.0, %v2857
        %2859 = vmatprep.mubr.f32.mxu0 0.0
        %2860 = vmatmul.mubr.f32.gmra.mxu0 %v2783
        %v2861 = vpop.f32.mrf.mxu0
        %v2862 = vadd.f32 0.0, %v2861
        %v2863 = vpop.f32.mrf.mxu0
        %v2864 = vadd.f32 0.0, %v2863
        %2865 = vdwg.mxu0
        %v2866 = vadd.f32 %v2766, %v2856
        %v2867 = vadd.f32 %v2767, %v2858
        %v2868 = vadd.f32 %v2768, %v2862
        %v2869 = vadd.f32 %v2769, %v2864
        %s2870 = scalar_lea.vmem %s3, 128
        %v2871 = vld [vmem:[%s2870] sm:$0xff]
        %v2872 = vld [vmem:[%s2870 + $0x8] sm:$0xff]
        %2874 = vrot.lane.b32.xlu0 %v1799, 96
        %v2875 = vpop.permute.xlu0 %2874
        %2876 = vrot.lane.b32.xlu0 %v1801, 96
        %v2877 = vpop.permute.xlu0 %2876
        %2878 = vrot.lane.b32.xlu0 %v2080, 96
        %v2879 = vpop.permute.xlu0 %2878
        %v2880 = vsel %vm668, %v2875, %v2877
        %v2881 = vsel %vm668, %v2877, %v2879
        %v2883 = vsel %vm2095, %v2871, 0
        %v2886 = vsel %vm2095, %v2872, 0
        %v2888 = vsel %vm2102, %v2880, 0
        %v2890 = vsel %vm2102, %v2881, 0
        %2892 = vmatprep.subr.mxu0 0.0
        %2893 = vmatpush1.msra.mxu0 0.0
        %2894 = vmatprep.subr.mxu0 0.0
        %2895 = vmatpush1.msra.mxu0 0.0
        %2896 = vmatprep.subr.mxu0 0.0
        %2897 = vmatpush1.msra.mxu0 0.0
        %2898 = vmatprep.subr.mxu0 0.0
        %2899 = vmatpush1.msra.mxu0 0.0
        %2900 = vmatprep.subr.mxu0 0.0
        %2901 = vmatpush1.msra.mxu0 0.0
        %2902 = vmatprep.subr.mxu0 0.0
        %2903 = vmatpush1.msra.mxu0 0.0
        %2904 = vmatprep.subr.mxu0 0.0
        %2905 = vmatpush1.msra.mxu0 0.0
        %2906 = vmatprep.subr.mxu0 0.0
        %2907 = vmatpush1.msra.mxu0 0.0
        %2908 = vmatprep.subr.mxu0 0.0
        %2909 = vmatpush1.msra.mxu0 0.0
        %2910 = vmatprep.subr.mxu0 0.0
        %2911 = vmatpush1.msra.mxu0 0.0
        %2912 = vmatprep.subr.mxu0 0.0
        %2913 = vmatpush1.msra.mxu0 0.0
        %2914 = vmatprep.subr.mxu0 0.0
        %2915 = vmatpush1.msra.mxu0 0.0
        %2916 = vmatprep.subr.mxu0 0.0
        %2917 = vmatpush1.msra.mxu0 0.0
        %2918 = vmatprep.subr.mxu0 0.0
        %2919 = vmatpush1.msra.mxu0 0.0
        %2920 = vmatprep.subr.mxu0 0.0
        %2921 = vmatpush1.msra.mxu0 0.0
        %2922 = vmatprep.subr.mxu0 %v2890
        %2923 = vmatpush1.msra.mxu0 %v2888
        %2924 = vmatprep.subr.mxu0 0.0
        %2925 = vmatpush2.msra.mxu0 0.0
        %2926 = vmatprep.subr.mxu0 0.0
        %2927 = vmatpush2.msra.mxu0 0.0
        %2928 = vmatprep.subr.mxu0 0.0
        %2929 = vmatpush2.msra.mxu0 0.0
        %2930 = vmatprep.subr.mxu0 0.0
        %2931 = vmatpush2.msra.mxu0 0.0
        %2932 = vmatprep.subr.mxu0 0.0
        %2933 = vmatpush2.msra.mxu0 0.0
        %2934 = vmatprep.subr.mxu0 0.0
        %2935 = vmatpush2.msra.mxu0 0.0
        %2936 = vmatprep.subr.mxu0 0.0
        %2937 = vmatpush2.msra.mxu0 0.0
        %2938 = vmatprep.subr.mxu0 0.0
        %2939 = vmatpush2.msra.mxu0 0.0
        %2940 = vmatprep.subr.mxu0 0.0
        %2941 = vmatpush2.msra.mxu0 0.0
        %2942 = vmatprep.subr.mxu0 0.0
        %2943 = vmatpush2.msra.mxu0 0.0
        %2944 = vmatprep.subr.mxu0 0.0
        %2945 = vmatpush2.msra.mxu0 0.0
        %2946 = vmatprep.subr.mxu0 0.0
        %2947 = vmatpush2.msra.mxu0 0.0
        %2948 = vmatprep.subr.mxu0 0.0
        %2949 = vmatpush2.msra.mxu0 0.0
        %2950 = vmatprep.subr.mxu0 0.0
        %2951 = vmatpush2.msra.mxu0 0.0
        %2952 = vmatprep.subr.mxu0 0.0
        %2953 = vmatpush2.msra.mxu0 0.0
        %2954 = vmatprep.subr.mxu0 0.0
        %2955 = vmatpush2.msra.mxu0 0.0
        %2956 = vmatprep.mubr.f32.mxu0 0.0
        %2957 = vmatmul.mubr.f32.gmra.mxu0 %v2883
        %v2958 = vpop.f32.mrf.mxu0
        %v2959 = vadd.f32 0.0, %v2958
        %v2960 = vpop.f32.mrf.mxu0
        %v2961 = vadd.f32 0.0, %v2960
        %2962 = vmatprep.mubr.f32.mxu0 0.0
        %2963 = vmatmul.mubr.f32.gmra.mxu0 %v2886
        %v2964 = vpop.f32.mrf.mxu0
        %v2965 = vadd.f32 0.0, %v2964
        %v2966 = vpop.f32.mrf.mxu0
        %v2967 = vadd.f32 0.0, %v2966
        %2968 = vdwg.mxu0
        %v2969 = vadd.f32 %v2866, %v2959
        %v2970 = vadd.f32 %v2867, %v2961
        %v2971 = vadd.f32 %v2868, %v2965
        %v2972 = vadd.f32 %v2869, %v2967
        %v2973 = vld [vmem:[%s4] sm:$0xff]
        %v2974 = vld [vmem:[%s4 + $0x8] sm:$0xff]
        %2976 = vset.pattern.permute.xlu0 0
        %2977 = vperm.xlu0 %2976, %v2973
        %v2978 = vpop.permute.xlu0 %2977
        %2981 = vset.pattern.permute.xlu0 0
        %2982 = vperm.xlu0 %2981, %v2974
        %v2983 = vpop.permute.xlu0 %2982
        %v2985 = vadd.f32 %v2969, %v2978
        %v2986 = vadd.f32 %v2970, %v2978
        %v2987 = vadd.f32 %v2971, %v2983
        %v2988 = vadd.f32 %v2972, %v2983
        %v2989 = vmax.f32 %v2985, 0.0
        %v2990 = vmax.f32 %v2986, 0.0
        %v2991 = vmax.f32 %v2987, 0.0
        %v2992 = vmax.f32 %v2988, 0.0
        %2997 = vrot.lane.b32.xlu0 %v2989, 127
        %v2998 = vpop.permute.xlu0 %2997
        %2999 = vrot.lane.b32.xlu0 %v2990, 127
        %v3000 = vpop.permute.xlu0 %2999
        %3001 = vrot.lane.b32.xlu0 %v2991, 127
        %v3002 = vpop.permute.xlu0 %3001
        %3003 = vrot.lane.b32.xlu0 %v2992, 127
        %v3004 = vpop.permute.xlu0 %3003
        %v3005 = vsel %vm538, %v2998, %v3000
        %v3006 = vsel %vm538, %v3002, %v3004
        %v3011 = vmax.f32 %v2989, %v3005
        %v3012 = vmax.f32 %v2990, %v3000
        %v3013 = vmax.f32 %v2991, %v3006
        %v3014 = vmax.f32 %v2992, %v3004
        %3019 = vrot.lane.b32.xlu0 %v3011, 113
        %v3020 = vpop.permute.xlu0 %3019
        %3021 = vrot.lane.b32.xlu0 %v3012, 113
        %v3022 = vpop.permute.xlu0 %3021
        %3023 = vrot.lane.b32.xlu0 %v3013, 113
        %v3024 = vpop.permute.xlu0 %3023
        %3025 = vrot.lane.b32.xlu0 %v3014, 113
        %v3026 = vpop.permute.xlu0 %3025
        %v3027 = vsel %vm2377, %v3020, %v3022
        %v3028 = vsel %vm2377, %v3024, %v3026
        %v3033 = vmax.f32 %v3011, %v3027
        %v3034 = vmax.f32 %v3012, %v3022
        %v3035 = vmax.f32 %v3013, %v3028
        %v3036 = vmax.f32 %v3014, %v3026
        %v3037 = vld [vmem:[%s6] sm:$0xff]
        %v3038 = vld [vmem:[%s6 + $0x8] sm:$0xff]
        %v3039 = vld [vmem:[%s6 + $0x10] sm:$0xff]
        %v3040 = vld [vmem:[%s6 + $0x18] sm:$0xff]
        %v3041 = vld [vmem:[%s6 + $0x20] sm:$0xff]
        %v3042 = vld [vmem:[%s6 + $0x28] sm:$0xff]
        %v3043 = vld [vmem:[%s6 + $0x30] sm:$0xff]
        %v3044 = vld [vmem:[%s6 + $0x38] sm:$0xff]
        %v3045 = vld [vmem:[%s6 + $0x40] sm:$0xff]
        %v3046 = vld [vmem:[%s6 + $0x48] sm:$0xff]
        %v3047 = vld [vmem:[%s6 + $0x50] sm:$0xff]
        %v3048 = vld [vmem:[%s6 + $0x58] sm:$0xff]
        %v3049 = vld [vmem:[%s6 + $0x60] sm:$0xff]
        %v3050 = vld [vmem:[%s6 + $0x68] sm:$0xff]
        %v3051 = vld [vmem:[%s6 + $0x70] sm:$0xff]
        %v3052 = vld [vmem:[%s6 + $0x78] sm:$0xff]
        %v3053 = vld [vmem:[%s6 + $0x80] sm:$0xff]
        %v3054 = vld [vmem:[%s6 + $0x88] sm:$0xff]
        %v3055 = vld [vmem:[%s6 + $0x90] sm:$0xff]
        %v3056 = vld [vmem:[%s6 + $0x98] sm:$0xff]
        %v3057 = vld [vmem:[%s6 + $0xa0] sm:$0xff]
        %v3058 = vld [vmem:[%s6 + $0xa8] sm:$0xff]
        %v3059 = vld [vmem:[%s6 + $0xb0] sm:$0xff]
        %v3060 = vld [vmem:[%s6 + $0xb8] sm:$0xff]
        %v3061 = vld [vmem:[%s6 + $0xc0] sm:$0xff]
        %v3062 = vld [vmem:[%s6 + $0xc8] sm:$0xff]
        %v3063 = vld [vmem:[%s6 + $0xd0] sm:$0x1]
        %vm3064 = vcmask 662528
        %v3066 = vsel %vm3064, %v3034, 0
        %v3069 = vsel %vm3064, %v3036, 0
        %vm3071 = vcmask 1040384
        %v3073 = vsel %vm3071, %v3063, 0
        %3075 = vmatprep.subr.mxu0 0.0
        %3076 = vmatpush1.msra.mxu0 %v3052
        %3077 = vmatprep.subr.mxu0 0.0
        %3078 = vmatpush1.msra.mxu0 %v3051
        %3079 = vmatprep.subr.mxu0 0.0
        %3080 = vmatpush1.msra.mxu0 %v3050
        %3081 = vmatprep.subr.mxu0 0.0
        %3082 = vmatpush1.msra.mxu0 %v3049
        %3083 = vmatprep.subr.mxu0 0.0
        %3084 = vmatpush1.msra.mxu0 %v3048
        %3085 = vmatprep.subr.mxu0 0.0
        %3086 = vmatpush1.msra.mxu0 %v3047
        %3087 = vmatprep.subr.mxu0 0.0
        %3088 = vmatpush1.msra.mxu0 %v3046
        %3089 = vmatprep.subr.mxu0 0.0
        %3090 = vmatpush1.msra.mxu0 %v3045
        %3091 = vmatprep.subr.mxu0 0.0
        %3092 = vmatpush1.msra.mxu0 %v3044
        %3093 = vmatprep.subr.mxu0 0.0
        %3094 = vmatpush1.msra.mxu0 %v3043
        %3095 = vmatprep.subr.mxu0 0.0
        %3096 = vmatpush1.msra.mxu0 %v3042
        %3097 = vmatprep.subr.mxu0 0.0
        %3098 = vmatpush1.msra.mxu0 %v3041
        %3099 = vmatprep.subr.mxu0 0.0
        %3100 = vmatpush1.msra.mxu0 %v3040
        %3101 = vmatprep.subr.mxu0 0.0
        %3102 = vmatpush1.msra.mxu0 %v3039
        %3103 = vmatprep.subr.mxu0 0.0
        %3104 = vmatpush1.msra.mxu0 %v3038
        %3105 = vmatprep.subr.mxu0 0.0
        %3106 = vmatpush1.msra.mxu0 %v3037
        %3107 = vmatprep.subr.mxu0 0.0
        %3108 = vmatpush2.msra.mxu0 0.0
        %3109 = vmatprep.subr.mxu0 0.0
        %3110 = vmatpush2.msra.mxu0 0.0
        %3111 = vmatprep.subr.mxu0 0.0
        %3112 = vmatpush2.msra.mxu0 0.0
        %3113 = vmatprep.subr.mxu0 0.0
        %3114 = vmatpush2.msra.mxu0 0.0
        %3115 = vmatprep.subr.mxu0 0.0
        %3116 = vmatpush2.msra.mxu0 0.0
        %3117 = vmatprep.subr.mxu0 0.0
        %3118 = vmatpush2.msra.mxu0 %v3073
        %3119 = vmatprep.subr.mxu0 0.0
        %3120 = vmatpush2.msra.mxu0 %v3062
        %3121 = vmatprep.subr.mxu0 0.0
        %3122 = vmatpush2.msra.mxu0 %v3061
        %3123 = vmatprep.subr.mxu0 0.0
        %3124 = vmatpush2.msra.mxu0 %v3060
        %3125 = vmatprep.subr.mxu0 0.0
        %3126 = vmatpush2.msra.mxu0 %v3059
        %3127 = vmatprep.subr.mxu0 0.0
        %3128 = vmatpush2.msra.mxu0 %v3058
        %3129 = vmatprep.subr.mxu0 0.0
        %3130 = vmatpush2.msra.mxu0 %v3057
        %3131 = vmatprep.subr.mxu0 0.0
        %3132 = vmatpush2.msra.mxu0 %v3056
        %3133 = vmatprep.subr.mxu0 0.0
        %3134 = vmatpush2.msra.mxu0 %v3055
        %3135 = vmatprep.subr.mxu0 0.0
        %3136 = vmatpush2.msra.mxu0 %v3054
        %3137 = vmatprep.subr.mxu0 0.0
        %3138 = vmatpush2.msra.mxu0 %v3053
        %3139 = vmatprep.mubr.f32.mxu0 %v3066
        %3140 = vmatmul.mubr.f32.gmra.mxu0 %v3033
        %v3141 = vpop.f32.mrf.mxu0
        %v3142 = vadd.f32 0.0, %v3141
        %v3143 = vpop.f32.mrf.mxu0
        %3144 = vmatprep.mubr.f32.mxu0 %v3069
        %3145 = vmatmul.mubr.f32.gmra.mxu0 %v3035
        %v3146 = vpop.f32.mrf.mxu0
        %v3147 = vadd.f32 0.0, %v3146
        %v3148 = vpop.f32.mrf.mxu0
        %3149 = vdwg.mxu0
        %v3150 = vld [vmem:[%s7] sm:$0xff]
        %v3151 = vld [vmem:[%s7 + $0x8] sm:$0xff]
        %v3152 = vld [vmem:[%s7 + $0x10] sm:$0xff]
        %v3153 = vld [vmem:[%s7 + $0x18] sm:$0xff]
        %v3154 = vld [vmem:[%s7 + $0x20] sm:$0xf]
        %s3155 = scalar_lea.vmem %s7, 40
        %v3156 = vld [vmem:[%s3155] sm:$0xff]
        %v3157 = vld [vmem:[%s3155 + $0x8] sm:$0xff]
        %v3158 = vld [vmem:[%s3155 + $0x10] sm:$0xff]
        %v3159 = vld [vmem:[%s3155 + $0x18] sm:$0xff]
        %v3160 = vld [vmem:[%s3155 + $0x20] sm:$0xf]
        %v3162 = vrot.slane %v3142, 1
        %vm3163 = vcmask 293888
        %v3164 = vsel %vm3163, %v3162, 0
        %vm3166 = vcmask 1043456
        %v3168 = vsel %vm3166, %v3160, 0
        %3170 = vmatprep.subr.mxu0 0.0
        %3171 = vmatpush1.msra.mxu0 0.0
        %3172 = vmatprep.subr.mxu0 0.0
        %3173 = vmatpush1.msra.mxu0 0.0
        %3174 = vmatprep.subr.mxu0 0.0
        %3175 = vmatpush1.msra.mxu0 0.0
        %3176 = vmatprep.subr.mxu0 0.0
        %3177 = vmatpush1.msra.mxu0 0.0
        %3178 = vmatprep.subr.mxu0 0.0
        %3179 = vmatpush1.msra.mxu0 0.0
        %3180 = vmatprep.subr.mxu0 0.0
        %3181 = vmatpush1.msra.mxu0 0.0
        %3182 = vmatprep.subr.mxu0 0.0
        %3183 = vmatpush1.msra.mxu0 0.0
        %3184 = vmatprep.subr.mxu0 0.0
        %3185 = vmatpush1.msra.mxu0 0.0
        %3186 = vmatprep.subr.mxu0 0.0
        %3187 = vmatpush1.msra.mxu0 0.0
        %3188 = vmatprep.subr.mxu0 0.0
        %3189 = vmatpush1.msra.mxu0 0.0
        %3190 = vmatprep.subr.mxu0 0.0
        %3191 = vmatpush1.msra.mxu0 0.0
        %3192 = vmatprep.subr.mxu0 0.0
        %3193 = vmatpush1.msra.mxu0 %v3168
        %3194 = vmatprep.subr.mxu0 0.0
        %3195 = vmatpush1.msra.mxu0 %v3159
        %3196 = vmatprep.subr.mxu0 0.0
        %3197 = vmatpush1.msra.mxu0 %v3158
        %3198 = vmatprep.subr.mxu0 0.0
        %3199 = vmatpush1.msra.mxu0 %v3157
        %3200 = vmatprep.subr.mxu0 0.0
        %3201 = vmatpush1.msra.mxu0 %v3156
        %3202 = vmatprep.subr.mxu0 0.0
        %3203 = vmatpush2.msra.mxu0 0.0
        %3204 = vmatprep.subr.mxu0 0.0
        %3205 = vmatpush2.msra.mxu0 0.0
        %3206 = vmatprep.subr.mxu0 0.0
        %3207 = vmatpush2.msra.mxu0 0.0
        %3208 = vmatprep.subr.mxu0 0.0
        %3209 = vmatpush2.msra.mxu0 0.0
        %3210 = vmatprep.subr.mxu0 0.0
        %3211 = vmatpush2.msra.mxu0 0.0
        %3212 = vmatprep.subr.mxu0 0.0
        %3213 = vmatpush2.msra.mxu0 0.0
        %3214 = vmatprep.subr.mxu0 0.0
        %3215 = vmatpush2.msra.mxu0 0.0
        %3216 = vmatprep.subr.mxu0 0.0
        %3217 = vmatpush2.msra.mxu0 0.0
        %3218 = vmatprep.subr.mxu0 0.0
        %3219 = vmatpush2.msra.mxu0 0.0
        %3220 = vmatprep.subr.mxu0 0.0
        %3221 = vmatpush2.msra.mxu0 0.0
        %3222 = vmatprep.subr.mxu0 0.0
        %3223 = vmatpush2.msra.mxu0 0.0
        %3224 = vmatprep.subr.mxu0 0.0
        %3225 = vmatpush2.msra.mxu0 0.0
        %3226 = vmatprep.subr.mxu0 0.0
        %3227 = vmatpush2.msra.mxu0 0.0
        %3228 = vmatprep.subr.mxu0 0.0
        %3229 = vmatpush2.msra.mxu0 0.0
        %3230 = vmatprep.subr.mxu0 0.0
        %3231 = vmatpush2.msra.mxu0 0.0
        %3232 = vmatprep.subr.mxu0 0.0
        %3233 = vmatpush2.msra.mxu0 0.0
        %3234 = vmatprep.mubr.f32.mxu0 0.0
        %3235 = vmatmul.mubr.f32.gmra.mxu0 %v3164
        %v3236 = vpop.f32.mrf.mxu0
        %v3237 = vadd.f32 0.0, %v3236
        %v3238 = vpop.f32.mrf.mxu0
        %3239 = vdwg.mxu0
        %v3240 = vsel %vm3163, %v3142, 0
        %v3243 = vsel %vm3166, %v3154, 0
        %3245 = vmatprep.subr.mxu0 0.0
        %3246 = vmatpush1.msra.mxu0 0.0
        %3247 = vmatprep.subr.mxu0 0.0
        %3248 = vmatpush1.msra.mxu0 0.0
        %3249 = vmatprep.subr.mxu0 0.0
        %3250 = vmatpush1.msra.mxu0 0.0
        %3251 = vmatprep.subr.mxu0 0.0
        %3252 = vmatpush1.msra.mxu0 0.0
        %3253 = vmatprep.subr.mxu0 0.0
        %3254 = vmatpush1.msra.mxu0 0.0
        %3255 = vmatprep.subr.mxu0 0.0
        %3256 = vmatpush1.msra.mxu0 0.0
        %3257 = vmatprep.subr.mxu0 0.0
        %3258 = vmatpush1.msra.mxu0 0.0
        %3259 = vmatprep.subr.mxu0 0.0
        %3260 = vmatpush1.msra.mxu0 0.0
        %3261 = vmatprep.subr.mxu0 0.0
        %3262 = vmatpush1.msra.mxu0 0.0
        %3263 = vmatprep.subr.mxu0 0.0
        %3264 = vmatpush1.msra.mxu0 0.0
        %3265 = vmatprep.subr.mxu0 0.0
        %3266 = vmatpush1.msra.mxu0 0.0
        %3267 = vmatprep.subr.mxu0 0.0
        %3268 = vmatpush1.msra.mxu0 %v3243
        %3269 = vmatprep.subr.mxu0 0.0
        %3270 = vmatpush1.msra.mxu0 %v3153
        %3271 = vmatprep.subr.mxu0 0.0
        %3272 = vmatpush1.msra.mxu0 %v3152
        %3273 = vmatprep.subr.mxu0 0.0
        %3274 = vmatpush1.msra.mxu0 %v3151
        %3275 = vmatprep.subr.mxu0 0.0
        %3276 = vmatpush1.msra.mxu0 %v3150
        %3277 = vmatprep.subr.mxu0 0.0
        %3278 = vmatpush2.msra.mxu0 0.0
        %3279 = vmatprep.subr.mxu0 0.0
        %3280 = vmatpush2.msra.mxu0 0.0
        %3281 = vmatprep.subr.mxu0 0.0
        %3282 = vmatpush2.msra.mxu0 0.0
        %3283 = vmatprep.subr.mxu0 0.0
        %3284 = vmatpush2.msra.mxu0 0.0
        %3285 = vmatprep.subr.mxu0 0.0
        %3286 = vmatpush2.msra.mxu0 0.0
        %3287 = vmatprep.subr.mxu0 0.0
        %3288 = vmatpush2.msra.mxu0 0.0
        %3289 = vmatprep.subr.mxu0 0.0
        %3290 = vmatpush2.msra.mxu0 0.0
        %3291 = vmatprep.subr.mxu0 0.0
        %3292 = vmatpush2.msra.mxu0 0.0
        %3293 = vmatprep.subr.mxu0 0.0
        %3294 = vmatpush2.msra.mxu0 0.0
        %3295 = vmatprep.subr.mxu0 0.0
        %3296 = vmatpush2.msra.mxu0 0.0
        %3297 = vmatprep.subr.mxu0 0.0
        %3298 = vmatpush2.msra.mxu0 0.0
        %3299 = vmatprep.subr.mxu0 0.0
        %3300 = vmatpush2.msra.mxu0 0.0
        %3301 = vmatprep.subr.mxu0 0.0
        %3302 = vmatpush2.msra.mxu0 0.0
        %3303 = vmatprep.subr.mxu0 0.0
        %3304 = vmatpush2.msra.mxu0 0.0
        %3305 = vmatprep.subr.mxu0 0.0
        %3306 = vmatpush2.msra.mxu0 0.0
        %3307 = vmatprep.subr.mxu0 0.0
        %3308 = vmatpush2.msra.mxu0 0.0
        %3309 = vmatprep.mubr.f32.mxu0 0.0
        %3310 = vmatmul.mubr.f32.gmra.mxu0 %v3240
        %v3311 = vpop.f32.mrf.mxu0
        %v3312 = vadd.f32 %v3237, %v3311
        %v3313 = vpop.f32.mrf.mxu0
        %3314 = vdwg.mxu0
        %s3315 = scalar_lea.vmem %s7, 80
        %v3316 = vld [vmem:[%s3315] sm:$0xff]
        %v3317 = vld [vmem:[%s3315 + $0x8] sm:$0xff]
        %v3318 = vld [vmem:[%s3315 + $0x10] sm:$0xff]
        %v3319 = vld [vmem:[%s3315 + $0x18] sm:$0xff]
        %v3320 = vld [vmem:[%s3315 + $0x20] sm:$0xf]
        %v3321 = vrot.slane %v3142, 2
        %v3322 = vsel %vm3163, %v3321, 0
        %v3325 = vsel %vm3166, %v3320, 0
        %3327 = vmatprep.subr.mxu0 0.0
        %3328 = vmatpush1.msra.mxu0 0.0
        %3329 = vmatprep.subr.mxu0 0.0
        %3330 = vmatpush1.msra.mxu0 0.0
        %3331 = vmatprep.subr.mxu0 0.0
        %3332 = vmatpush1.msra.mxu0 0.0
        %3333 = vmatprep.subr.mxu0 0.0
        %3334 = vmatpush1.msra.mxu0 0.0
        %3335 = vmatprep.subr.mxu0 0.0
        %3336 = vmatpush1.msra.mxu0 0.0
        %3337 = vmatprep.subr.mxu0 0.0
        %3338 = vmatpush1.msra.mxu0 0.0
        %3339 = vmatprep.subr.mxu0 0.0
        %3340 = vmatpush1.msra.mxu0 0.0
        %3341 = vmatprep.subr.mxu0 0.0
        %3342 = vmatpush1.msra.mxu0 0.0
        %3343 = vmatprep.subr.mxu0 0.0
        %3344 = vmatpush1.msra.mxu0 0.0
        %3345 = vmatprep.subr.mxu0 0.0
        %3346 = vmatpush1.msra.mxu0 0.0
        %3347 = vmatprep.subr.mxu0 0.0
        %3348 = vmatpush1.msra.mxu0 0.0
        %3349 = vmatprep.subr.mxu0 0.0
        %3350 = vmatpush1.msra.mxu0 %v3325
        %3351 = vmatprep.subr.mxu0 0.0
        %3352 = vmatpush1.msra.mxu0 %v3319
        %3353 = vmatprep.subr.mxu0 0.0
        %3354 = vmatpush1.msra.mxu0 %v3318
        %3355 = vmatprep.subr.mxu0 0.0
        %3356 = vmatpush1.msra.mxu0 %v3317
        %3357 = vmatprep.subr.mxu0 0.0
        %3358 = vmatpush1.msra.mxu0 %v3316
        %3359 = vmatprep.subr.mxu0 0.0
        %3360 = vmatpush2.msra.mxu0 0.0
        %3361 = vmatprep.subr.mxu0 0.0
        %3362 = vmatpush2.msra.mxu0 0.0
        %3363 = vmatprep.subr.mxu0 0.0
        %3364 = vmatpush2.msra.mxu0 0.0
        %3365 = vmatprep.subr.mxu0 0.0
        %3366 = vmatpush2.msra.mxu0 0.0
        %3367 = vmatprep.subr.mxu0 0.0
        %3368 = vmatpush2.msra.mxu0 0.0
        %3369 = vmatprep.subr.mxu0 0.0
        %3370 = vmatpush2.msra.mxu0 0.0
        %3371 = vmatprep.subr.mxu0 0.0
        %3372 = vmatpush2.msra.mxu0 0.0
        %3373 = vmatprep.subr.mxu0 0.0
        %3374 = vmatpush2.msra.mxu0 0.0
        %3375 = vmatprep.subr.mxu0 0.0
        %3376 = vmatpush2.msra.mxu0 0.0
        %3377 = vmatprep.subr.mxu0 0.0
        %3378 = vmatpush2.msra.mxu0 0.0
        %3379 = vmatprep.subr.mxu0 0.0
        %3380 = vmatpush2.msra.mxu0 0.0
        %3381 = vmatprep.subr.mxu0 0.0
        %3382 = vmatpush2.msra.mxu0 0.0
        %3383 = vmatprep.subr.mxu0 0.0
        %3384 = vmatpush2.msra.mxu0 0.0
        %3385 = vmatprep.subr.mxu0 0.0
        %3386 = vmatpush2.msra.mxu0 0.0
        %3387 = vmatprep.subr.mxu0 0.0
        %3388 = vmatpush2.msra.mxu0 0.0
        %3389 = vmatprep.subr.mxu0 0.0
        %3390 = vmatpush2.msra.mxu0 0.0
        %3391 = vmatprep.mubr.f32.mxu0 0.0
        %3392 = vmatmul.mubr.f32.gmra.mxu0 %v3322
        %v3393 = vpop.f32.mrf.mxu0
        %v3394 = vadd.f32 0.0, %v3393
        %v3395 = vpop.f32.mrf.mxu0
        %3396 = vdwg.mxu0
        %v3397 = vadd.f32 %v3312, %v3394
        %s3398 = scalar_lea.vmem %s7, 120
        %v3399 = vld [vmem:[%s3398] sm:$0xff]
        %v3400 = vld [vmem:[%s3398 + $0x8] sm:$0xff]
        %v3401 = vld [vmem:[%s3398 + $0x10] sm:$0xff]
        %v3402 = vld [vmem:[%s3398 + $0x18] sm:$0xff]
        %v3403 = vld [vmem:[%s3398 + $0x20] sm:$0xf]
        %v3404 = vrot.slane %v3142, 3
        %v3405 = vsel %vm3163, %v3404, 0
        %v3408 = vsel %vm3166, %v3403, 0
        %3410 = vmatprep.subr.mxu0 0.0
        %3411 = vmatpush1.msra.mxu0 0.0
        %3412 = vmatprep.subr.mxu0 0.0
        %3413 = vmatpush1.msra.mxu0 0.0
        %3414 = vmatprep.subr.mxu0 0.0
        %3415 = vmatpush1.msra.mxu0 0.0
        %3416 = vmatprep.subr.mxu0 0.0
        %3417 = vmatpush1.msra.mxu0 0.0
        %3418 = vmatprep.subr.mxu0 0.0
        %3419 = vmatpush1.msra.mxu0 0.0
        %3420 = vmatprep.subr.mxu0 0.0
        %3421 = vmatpush1.msra.mxu0 0.0
        %3422 = vmatprep.subr.mxu0 0.0
        %3423 = vmatpush1.msra.mxu0 0.0
        %3424 = vmatprep.subr.mxu0 0.0
        %3425 = vmatpush1.msra.mxu0 0.0
        %3426 = vmatprep.subr.mxu0 0.0
        %3427 = vmatpush1.msra.mxu0 0.0
        %3428 = vmatprep.subr.mxu0 0.0
        %3429 = vmatpush1.msra.mxu0 0.0
        %3430 = vmatprep.subr.mxu0 0.0
        %3431 = vmatpush1.msra.mxu0 0.0
        %3432 = vmatprep.subr.mxu0 0.0
        %3433 = vmatpush1.msra.mxu0 %v3408
        %3434 = vmatprep.subr.mxu0 0.0
        %3435 = vmatpush1.msra.mxu0 %v3402
        %3436 = vmatprep.subr.mxu0 0.0
        %3437 = vmatpush1.msra.mxu0 %v3401
        %3438 = vmatprep.subr.mxu0 0.0
        %3439 = vmatpush1.msra.mxu0 %v3400
        %3440 = vmatprep.subr.mxu0 0.0
        %3441 = vmatpush1.msra.mxu0 %v3399
        %3442 = vmatprep.subr.mxu0 0.0
        %3443 = vmatpush2.msra.mxu0 0.0
        %3444 = vmatprep.subr.mxu0 0.0
        %3445 = vmatpush2.msra.mxu0 0.0
        %3446 = vmatprep.subr.mxu0 0.0
        %3447 = vmatpush2.msra.mxu0 0.0
        %3448 = vmatprep.subr.mxu0 0.0
        %3449 = vmatpush2.msra.mxu0 0.0
        %3450 = vmatprep.subr.mxu0 0.0
        %3451 = vmatpush2.msra.mxu0 0.0
        %3452 = vmatprep.subr.mxu0 0.0
        %3453 = vmatpush2.msra.mxu0 0.0
        %3454 = vmatprep.subr.mxu0 0.0
        %3455 = vmatpush2.msra.mxu0 0.0
        %3456 = vmatprep.subr.mxu0 0.0
        %3457 = vmatpush2.msra.mxu0 0.0
        %3458 = vmatprep.subr.mxu0 0.0
        %3459 = vmatpush2.msra.mxu0 0.0
        %3460 = vmatprep.subr.mxu0 0.0
        %3461 = vmatpush2.msra.mxu0 0.0
        %3462 = vmatprep.subr.mxu0 0.0
        %3463 = vmatpush2.msra.mxu0 0.0
        %3464 = vmatprep.subr.mxu0 0.0
        %3465 = vmatpush2.msra.mxu0 0.0
        %3466 = vmatprep.subr.mxu0 0.0
        %3467 = vmatpush2.msra.mxu0 0.0
        %3468 = vmatprep.subr.mxu0 0.0
        %3469 = vmatpush2.msra.mxu0 0.0
        %3470 = vmatprep.subr.mxu0 0.0
        %3471 = vmatpush2.msra.mxu0 0.0
        %3472 = vmatprep.subr.mxu0 0.0
        %3473 = vmatpush2.msra.mxu0 0.0
        %3474 = vmatprep.mubr.f32.mxu0 0.0
        %3475 = vmatmul.mubr.f32.gmra.mxu0 %v3405
        %v3476 = vpop.f32.mrf.mxu0
        %v3477 = vadd.f32 0.0, %v3476
        %v3478 = vpop.f32.mrf.mxu0
        %3479 = vdwg.mxu0
        %v3480 = vadd.f32 %v3397, %v3477
        %s3481 = scalar_lea.vmem %s7, 160
        %v3482 = vld [vmem:[%s3481] sm:$0xff]
        %v3483 = vld [vmem:[%s3481 + $0x8] sm:$0xff]
        %v3484 = vld [vmem:[%s3481 + $0x10] sm:$0xff]
        %v3485 = vld [vmem:[%s3481 + $0x18] sm:$0xff]
        %v3486 = vld [vmem:[%s3481 + $0x20] sm:$0xf]
        %v3487 = vrot.slane %v3142, 4
        %v3488 = vsel %vm3163, %v3487, 0
        %v3491 = vsel %vm3166, %v3486, 0
        %3493 = vmatprep.subr.mxu0 0.0
        %3494 = vmatpush1.msra.mxu0 0.0
        %3495 = vmatprep.subr.mxu0 0.0
        %3496 = vmatpush1.msra.mxu0 0.0
        %3497 = vmatprep.subr.mxu0 0.0
        %3498 = vmatpush1.msra.mxu0 0.0
        %3499 = vmatprep.subr.mxu0 0.0
        %3500 = vmatpush1.msra.mxu0 0.0
        %3501 = vmatprep.subr.mxu0 0.0
        %3502 = vmatpush1.msra.mxu0 0.0
        %3503 = vmatprep.subr.mxu0 0.0
        %3504 = vmatpush1.msra.mxu0 0.0
        %3505 = vmatprep.subr.mxu0 0.0
        %3506 = vmatpush1.msra.mxu0 0.0
        %3507 = vmatprep.subr.mxu0 0.0
        %3508 = vmatpush1.msra.mxu0 0.0
        %3509 = vmatprep.subr.mxu0 0.0
        %3510 = vmatpush1.msra.mxu0 0.0
        %3511 = vmatprep.subr.mxu0 0.0
        %3512 = vmatpush1.msra.mxu0 0.0
        %3513 = vmatprep.subr.mxu0 0.0
        %3514 = vmatpush1.msra.mxu0 0.0
        %3515 = vmatprep.subr.mxu0 0.0
        %3516 = vmatpush1.msra.mxu0 %v3491
        %3517 = vmatprep.subr.mxu0 0.0
        %3518 = vmatpush1.msra.mxu0 %v3485
        %3519 = vmatprep.subr.mxu0 0.0
        %3520 = vmatpush1.msra.mxu0 %v3484
        %3521 = vmatprep.subr.mxu0 0.0
        %3522 = vmatpush1.msra.mxu0 %v3483
        %3523 = vmatprep.subr.mxu0 0.0
        %3524 = vmatpush1.msra.mxu0 %v3482
        %3525 = vmatprep.subr.mxu0 0.0
        %3526 = vmatpush2.msra.mxu0 0.0
        %3527 = vmatprep.subr.mxu0 0.0
        %3528 = vmatpush2.msra.mxu0 0.0
        %3529 = vmatprep.subr.mxu0 0.0
        %3530 = vmatpush2.msra.mxu0 0.0
        %3531 = vmatprep.subr.mxu0 0.0
        %3532 = vmatpush2.msra.mxu0 0.0
        %3533 = vmatprep.subr.mxu0 0.0
        %3534 = vmatpush2.msra.mxu0 0.0
        %3535 = vmatprep.subr.mxu0 0.0
        %3536 = vmatpush2.msra.mxu0 0.0
        %3537 = vmatprep.subr.mxu0 0.0
        %3538 = vmatpush2.msra.mxu0 0.0
        %3539 = vmatprep.subr.mxu0 0.0
        %3540 = vmatpush2.msra.mxu0 0.0
        %3541 = vmatprep.subr.mxu0 0.0
        %3542 = vmatpush2.msra.mxu0 0.0
        %3543 = vmatprep.subr.mxu0 0.0
        %3544 = vmatpush2.msra.mxu0 0.0
        %3545 = vmatprep.subr.mxu0 0.0
        %3546 = vmatpush2.msra.mxu0 0.0
        %3547 = vmatprep.subr.mxu0 0.0
        %3548 = vmatpush2.msra.mxu0 0.0
        %3549 = vmatprep.subr.mxu0 0.0
        %3550 = vmatpush2.msra.mxu0 0.0
        %3551 = vmatprep.subr.mxu0 0.0
        %3552 = vmatpush2.msra.mxu0 0.0
        %3553 = vmatprep.subr.mxu0 0.0
        %3554 = vmatpush2.msra.mxu0 0.0
        %3555 = vmatprep.subr.mxu0 0.0
        %3556 = vmatpush2.msra.mxu0 0.0
        %3557 = vmatprep.mubr.f32.mxu0 0.0
        %3558 = vmatmul.mubr.f32.gmra.mxu0 %v3488
        %v3559 = vpop.f32.mrf.mxu0
        %v3560 = vadd.f32 0.0, %v3559
        %v3561 = vpop.f32.mrf.mxu0
        %3562 = vdwg.mxu0
        %v3563 = vadd.f32 %v3480, %v3560
        %s3564 = scalar_lea.vmem %s7, 200
        %v3565 = vld [vmem:[%s3564] sm:$0xff]
        %v3566 = vld [vmem:[%s3564 + $0x8] sm:$0xff]
        %v3567 = vld [vmem:[%s3564 + $0x10] sm:$0xff]
        %v3568 = vld [vmem:[%s3564 + $0x18] sm:$0xff]
        %v3569 = vld [vmem:[%s3564 + $0x20] sm:$0xf]
        %v3570 = vrot.slane %v3142, 5
        %v3571 = vsel %vm3163, %v3570, 0
        %v3574 = vsel %vm3166, %v3569, 0
        %3576 = vmatprep.subr.mxu0 0.0
        %3577 = vmatpush1.msra.mxu0 0.0
        %3578 = vmatprep.subr.mxu0 0.0
        %3579 = vmatpush1.msra.mxu0 0.0
        %3580 = vmatprep.subr.mxu0 0.0
        %3581 = vmatpush1.msra.mxu0 0.0
        %3582 = vmatprep.subr.mxu0 0.0
        %3583 = vmatpush1.msra.mxu0 0.0
        %3584 = vmatprep.subr.mxu0 0.0
        %3585 = vmatpush1.msra.mxu0 0.0
        %3586 = vmatprep.subr.mxu0 0.0
        %3587 = vmatpush1.msra.mxu0 0.0
        %3588 = vmatprep.subr.mxu0 0.0
        %3589 = vmatpush1.msra.mxu0 0.0
        %3590 = vmatprep.subr.mxu0 0.0
        %3591 = vmatpush1.msra.mxu0 0.0
        %3592 = vmatprep.subr.mxu0 0.0
        %3593 = vmatpush1.msra.mxu0 0.0
        %3594 = vmatprep.subr.mxu0 0.0
        %3595 = vmatpush1.msra.mxu0 0.0
        %3596 = vmatprep.subr.mxu0 0.0
        %3597 = vmatpush1.msra.mxu0 0.0
        %3598 = vmatprep.subr.mxu0 0.0
        %3599 = vmatpush1.msra.mxu0 %v3574
        %3600 = vmatprep.subr.mxu0 0.0
        %3601 = vmatpush1.msra.mxu0 %v3568
        %3602 = vmatprep.subr.mxu0 0.0
        %3603 = vmatpush1.msra.mxu0 %v3567
        %3604 = vmatprep.subr.mxu0 0.0
        %3605 = vmatpush1.msra.mxu0 %v3566
        %3606 = vmatprep.subr.mxu0 0.0
        %3607 = vmatpush1.msra.mxu0 %v3565
        %3608 = vmatprep.subr.mxu0 0.0
        %3609 = vmatpush2.msra.mxu0 0.0
        %3610 = vmatprep.subr.mxu0 0.0
        %3611 = vmatpush2.msra.mxu0 0.0
        %3612 = vmatprep.subr.mxu0 0.0
        %3613 = vmatpush2.msra.mxu0 0.0
        %3614 = vmatprep.subr.mxu0 0.0
        %3615 = vmatpush2.msra.mxu0 0.0
        %3616 = vmatprep.subr.mxu0 0.0
        %3617 = vmatpush2.msra.mxu0 0.0
        %3618 = vmatprep.subr.mxu0 0.0
        %3619 = vmatpush2.msra.mxu0 0.0
        %3620 = vmatprep.subr.mxu0 0.0
        %3621 = vmatpush2.msra.mxu0 0.0
        %3622 = vmatprep.subr.mxu0 0.0
        %3623 = vmatpush2.msra.mxu0 0.0
        %3624 = vmatprep.subr.mxu0 0.0
        %3625 = vmatpush2.msra.mxu0 0.0
        %3626 = vmatprep.subr.mxu0 0.0
        %3627 = vmatpush2.msra.mxu0 0.0
        %3628 = vmatprep.subr.mxu0 0.0
        %3629 = vmatpush2.msra.mxu0 0.0
        %3630 = vmatprep.subr.mxu0 0.0
        %3631 = vmatpush2.msra.mxu0 0.0
        %3632 = vmatprep.subr.mxu0 0.0
        %3633 = vmatpush2.msra.mxu0 0.0
        %3634 = vmatprep.subr.mxu0 0.0
        %3635 = vmatpush2.msra.mxu0 0.0
        %3636 = vmatprep.subr.mxu0 0.0
        %3637 = vmatpush2.msra.mxu0 0.0
        %3638 = vmatprep.subr.mxu0 0.0
        %3639 = vmatpush2.msra.mxu0 0.0
        %3640 = vmatprep.mubr.f32.mxu0 0.0
        %3641 = vmatmul.mubr.f32.gmra.mxu0 %v3571
        %v3642 = vpop.f32.mrf.mxu0
        %v3643 = vadd.f32 0.0, %v3642
        %v3644 = vpop.f32.mrf.mxu0
        %3645 = vdwg.mxu0
        %v3646 = vadd.f32 %v3563, %v3643
        %s3647 = scalar_lea.vmem %s7, 240
        %v3648 = vld [vmem:[%s3647] sm:$0xff]
        %v3649 = vld [vmem:[%s3647 + $0x8] sm:$0xff]
        %v3650 = vld [vmem:[%s3647 + $0x10] sm:$0xff]
        %v3651 = vld [vmem:[%s3647 + $0x18] sm:$0xff]
        %v3652 = vld [vmem:[%s3647 + $0x20] sm:$0xf]
        %v3653 = vrot.slane %v3142, 6
        %v3654 = vsel %vm3163, %v3653, 0
        %v3657 = vsel %vm3166, %v3652, 0
        %3659 = vmatprep.subr.mxu0 0.0
        %3660 = vmatpush1.msra.mxu0 0.0
        %3661 = vmatprep.subr.mxu0 0.0
        %3662 = vmatpush1.msra.mxu0 0.0
        %3663 = vmatprep.subr.mxu0 0.0
        %3664 = vmatpush1.msra.mxu0 0.0
        %3665 = vmatprep.subr.mxu0 0.0
        %3666 = vmatpush1.msra.mxu0 0.0
        %3667 = vmatprep.subr.mxu0 0.0
        %3668 = vmatpush1.msra.mxu0 0.0
        %3669 = vmatprep.subr.mxu0 0.0
        %3670 = vmatpush1.msra.mxu0 0.0
        %3671 = vmatprep.subr.mxu0 0.0
        %3672 = vmatpush1.msra.mxu0 0.0
        %3673 = vmatprep.subr.mxu0 0.0
        %3674 = vmatpush1.msra.mxu0 0.0
        %3675 = vmatprep.subr.mxu0 0.0
        %3676 = vmatpush1.msra.mxu0 0.0
        %3677 = vmatprep.subr.mxu0 0.0
        %3678 = vmatpush1.msra.mxu0 0.0
        %3679 = vmatprep.subr.mxu0 0.0
        %3680 = vmatpush1.msra.mxu0 0.0
        %3681 = vmatprep.subr.mxu0 0.0
        %3682 = vmatpush1.msra.mxu0 %v3657
        %3683 = vmatprep.subr.mxu0 0.0
        %3684 = vmatpush1.msra.mxu0 %v3651
        %3685 = vmatprep.subr.mxu0 0.0
        %3686 = vmatpush1.msra.mxu0 %v3650
        %3687 = vmatprep.subr.mxu0 0.0
        %3688 = vmatpush1.msra.mxu0 %v3649
        %3689 = vmatprep.subr.mxu0 0.0
        %3690 = vmatpush1.msra.mxu0 %v3648
        %3691 = vmatprep.subr.mxu0 0.0
        %3692 = vmatpush2.msra.mxu0 0.0
        %3693 = vmatprep.subr.mxu0 0.0
        %3694 = vmatpush2.msra.mxu0 0.0
        %3695 = vmatprep.subr.mxu0 0.0
        %3696 = vmatpush2.msra.mxu0 0.0
        %3697 = vmatprep.subr.mxu0 0.0
        %3698 = vmatpush2.msra.mxu0 0.0
        %3699 = vmatprep.subr.mxu0 0.0
        %3700 = vmatpush2.msra.mxu0 0.0
        %3701 = vmatprep.subr.mxu0 0.0
        %3702 = vmatpush2.msra.mxu0 0.0
        %3703 = vmatprep.subr.mxu0 0.0
        %3704 = vmatpush2.msra.mxu0 0.0
        %3705 = vmatprep.subr.mxu0 0.0
        %3706 = vmatpush2.msra.mxu0 0.0
        %3707 = vmatprep.subr.mxu0 0.0
        %3708 = vmatpush2.msra.mxu0 0.0
        %3709 = vmatprep.subr.mxu0 0.0
        %3710 = vmatpush2.msra.mxu0 0.0
        %3711 = vmatprep.subr.mxu0 0.0
        %3712 = vmatpush2.msra.mxu0 0.0
        %3713 = vmatprep.subr.mxu0 0.0
        %3714 = vmatpush2.msra.mxu0 0.0
        %3715 = vmatprep.subr.mxu0 0.0
        %3716 = vmatpush2.msra.mxu0 0.0
        %3717 = vmatprep.subr.mxu0 0.0
        %3718 = vmatpush2.msra.mxu0 0.0
        %3719 = vmatprep.subr.mxu0 0.0
        %3720 = vmatpush2.msra.mxu0 0.0
        %3721 = vmatprep.subr.mxu0 0.0
        %3722 = vmatpush2.msra.mxu0 0.0
        %3723 = vmatprep.mubr.f32.mxu0 0.0
        %3724 = vmatmul.mubr.f32.gmra.mxu0 %v3654
        %v3725 = vpop.f32.mrf.mxu0
        %v3726 = vadd.f32 0.0, %v3725
        %v3727 = vpop.f32.mrf.mxu0
        %3728 = vdwg.mxu0
        %v3729 = vadd.f32 %v3646, %v3726
        %s3730 = scalar_lea.vmem %s7, 280
        %v3731 = vld [vmem:[%s3730] sm:$0xff]
        %v3732 = vld [vmem:[%s3730 + $0x8] sm:$0xff]
        %v3733 = vld [vmem:[%s3730 + $0x10] sm:$0xff]
        %v3734 = vld [vmem:[%s3730 + $0x18] sm:$0xff]
        %v3735 = vld [vmem:[%s3730 + $0x20] sm:$0xf]
        %v3736 = vrot.slane %v3142, 7
        %v3737 = vsel %vm3163, %v3736, 0
        %v3740 = vsel %vm3166, %v3735, 0
        %3742 = vmatprep.subr.mxu0 0.0
        %3743 = vmatpush1.msra.mxu0 0.0
        %3744 = vmatprep.subr.mxu0 0.0
        %3745 = vmatpush1.msra.mxu0 0.0
        %3746 = vmatprep.subr.mxu0 0.0
        %3747 = vmatpush1.msra.mxu0 0.0
        %3748 = vmatprep.subr.mxu0 0.0
        %3749 = vmatpush1.msra.mxu0 0.0
        %3750 = vmatprep.subr.mxu0 0.0
        %3751 = vmatpush1.msra.mxu0 0.0
        %3752 = vmatprep.subr.mxu0 0.0
        %3753 = vmatpush1.msra.mxu0 0.0
        %3754 = vmatprep.subr.mxu0 0.0
        %3755 = vmatpush1.msra.mxu0 0.0
        %3756 = vmatprep.subr.mxu0 0.0
        %3757 = vmatpush1.msra.mxu0 0.0
        %3758 = vmatprep.subr.mxu0 0.0
        %3759 = vmatpush1.msra.mxu0 0.0
        %3760 = vmatprep.subr.mxu0 0.0
        %3761 = vmatpush1.msra.mxu0 0.0
        %3762 = vmatprep.subr.mxu0 0.0
        %3763 = vmatpush1.msra.mxu0 0.0
        %3764 = vmatprep.subr.mxu0 0.0
        %3765 = vmatpush1.msra.mxu0 %v3740
        %3766 = vmatprep.subr.mxu0 0.0
        %3767 = vmatpush1.msra.mxu0 %v3734
        %3768 = vmatprep.subr.mxu0 0.0
        %3769 = vmatpush1.msra.mxu0 %v3733
        %3770 = vmatprep.subr.mxu0 0.0
        %3771 = vmatpush1.msra.mxu0 %v3732
        %3772 = vmatprep.subr.mxu0 0.0
        %3773 = vmatpush1.msra.mxu0 %v3731
        %3774 = vmatprep.subr.mxu0 0.0
        %3775 = vmatpush2.msra.mxu0 0.0
        %3776 = vmatprep.subr.mxu0 0.0
        %3777 = vmatpush2.msra.mxu0 0.0
        %3778 = vmatprep.subr.mxu0 0.0
        %3779 = vmatpush2.msra.mxu0 0.0
        %3780 = vmatprep.subr.mxu0 0.0
        %3781 = vmatpush2.msra.mxu0 0.0
        %3782 = vmatprep.subr.mxu0 0.0
        %3783 = vmatpush2.msra.mxu0 0.0
        %3784 = vmatprep.subr.mxu0 0.0
        %3785 = vmatpush2.msra.mxu0 0.0
        %3786 = vmatprep.subr.mxu0 0.0
        %3787 = vmatpush2.msra.mxu0 0.0
        %3788 = vmatprep.subr.mxu0 0.0
        %3789 = vmatpush2.msra.mxu0 0.0
        %3790 = vmatprep.subr.mxu0 0.0
        %3791 = vmatpush2.msra.mxu0 0.0
        %3792 = vmatprep.subr.mxu0 0.0
        %3793 = vmatpush2.msra.mxu0 0.0
        %3794 = vmatprep.subr.mxu0 0.0
        %3795 = vmatpush2.msra.mxu0 0.0
        %3796 = vmatprep.subr.mxu0 0.0
        %3797 = vmatpush2.msra.mxu0 0.0
        %3798 = vmatprep.subr.mxu0 0.0
        %3799 = vmatpush2.msra.mxu0 0.0
        %3800 = vmatprep.subr.mxu0 0.0
        %3801 = vmatpush2.msra.mxu0 0.0
        %3802 = vmatprep.subr.mxu0 0.0
        %3803 = vmatpush2.msra.mxu0 0.0
        %3804 = vmatprep.subr.mxu0 0.0
        %3805 = vmatpush2.msra.mxu0 0.0
        %3806 = vmatprep.mubr.f32.mxu0 0.0
        %3807 = vmatmul.mubr.f32.gmra.mxu0 %v3737
        %v3808 = vpop.f32.mrf.mxu0
        %v3809 = vadd.f32 0.0, %v3808
        %v3810 = vpop.f32.mrf.mxu0
        %3811 = vdwg.mxu0
        %v3812 = vadd.f32 %v3729, %v3809
        %s3813 = scalar_lea.vmem %s7, 320
        %v3814 = vld [vmem:[%s3813] sm:$0xff]
        %v3815 = vld [vmem:[%s3813 + $0x8] sm:$0xff]
        %v3816 = vld [vmem:[%s3813 + $0x10] sm:$0xff]
        %v3817 = vld [vmem:[%s3813 + $0x18] sm:$0xff]
        %v3818 = vld [vmem:[%s3813 + $0x20] sm:$0xf]
        %v3820 = vsel %vm3163, %v3147, 0
        %v3823 = vsel %vm3166, %v3818, 0
        %3825 = vmatprep.subr.mxu0 0.0
        %3826 = vmatpush1.msra.mxu0 0.0
        %3827 = vmatprep.subr.mxu0 0.0
        %3828 = vmatpush1.msra.mxu0 0.0
        %3829 = vmatprep.subr.mxu0 0.0
        %3830 = vmatpush1.msra.mxu0 0.0
        %3831 = vmatprep.subr.mxu0 0.0
        %3832 = vmatpush1.msra.mxu0 0.0
        %3833 = vmatprep.subr.mxu0 0.0
        %3834 = vmatpush1.msra.mxu0 0.0
        %3835 = vmatprep.subr.mxu0 0.0
        %3836 = vmatpush1.msra.mxu0 0.0
        %3837 = vmatprep.subr.mxu0 0.0
        %3838 = vmatpush1.msra.mxu0 0.0
        %3839 = vmatprep.subr.mxu0 0.0
        %3840 = vmatpush1.msra.mxu0 0.0
        %3841 = vmatprep.subr.mxu0 0.0
        %3842 = vmatpush1.msra.mxu0 0.0
        %3843 = vmatprep.subr.mxu0 0.0
        %3844 = vmatpush1.msra.mxu0 0.0
        %3845 = vmatprep.subr.mxu0 0.0
        %3846 = vmatpush1.msra.mxu0 0.0
        %3847 = vmatprep.subr.mxu0 0.0
        %3848 = vmatpush1.msra.mxu0 %v3823
        %3849 = vmatprep.subr.mxu0 0.0
        %3850 = vmatpush1.msra.mxu0 %v3817
        %3851 = vmatprep.subr.mxu0 0.0
        %3852 = vmatpush1.msra.mxu0 %v3816
        %3853 = vmatprep.subr.mxu0 0.0
        %3854 = vmatpush1.msra.mxu0 %v3815
        %3855 = vmatprep.subr.mxu0 0.0
        %3856 = vmatpush1.msra.mxu0 %v3814
        %3857 = vmatprep.subr.mxu0 0.0
        %3858 = vmatpush2.msra.mxu0 0.0
        %3859 = vmatprep.subr.mxu0 0.0
        %3860 = vmatpush2.msra.mxu0 0.0
        %3861 = vmatprep.subr.mxu0 0.0
        %3862 = vmatpush2.msra.mxu0 0.0
        %3863 = vmatprep.subr.mxu0 0.0
        %3864 = vmatpush2.msra.mxu0 0.0
        %3865 = vmatprep.subr.mxu0 0.0
        %3866 = vmatpush2.msra.mxu0 0.0
        %3867 = vmatprep.subr.mxu0 0.0
        %3868 = vmatpush2.msra.mxu0 0.0
        %3869 = vmatprep.subr.mxu0 0.0
        %3870 = vmatpush2.msra.mxu0 0.0
        %3871 = vmatprep.subr.mxu0 0.0
        %3872 = vmatpush2.msra.mxu0 0.0
        %3873 = vmatprep.subr.mxu0 0.0
        %3874 = vmatpush2.msra.mxu0 0.0
        %3875 = vmatprep.subr.mxu0 0.0
        %3876 = vmatpush2.msra.mxu0 0.0
        %3877 = vmatprep.subr.mxu0 0.0
        %3878 = vmatpush2.msra.mxu0 0.0
        %3879 = vmatprep.subr.mxu0 0.0
        %3880 = vmatpush2.msra.mxu0 0.0
        %3881 = vmatprep.subr.mxu0 0.0
        %3882 = vmatpush2.msra.mxu0 0.0
        %3883 = vmatprep.subr.mxu0 0.0
        %3884 = vmatpush2.msra.mxu0 0.0
        %3885 = vmatprep.subr.mxu0 0.0
        %3886 = vmatpush2.msra.mxu0 0.0
        %3887 = vmatprep.subr.mxu0 0.0
        %3888 = vmatpush2.msra.mxu0 0.0
        %3889 = vmatprep.mubr.f32.mxu0 0.0
        %3890 = vmatmul.mubr.f32.gmra.mxu0 %v3820
        %v3891 = vpop.f32.mrf.mxu0
        %v3892 = vadd.f32 0.0, %v3891
        %v3893 = vpop.f32.mrf.mxu0
        %3894 = vdwg.mxu0
        %v3895 = vadd.f32 %v3812, %v3892
        %s3896 = scalar_lea.vmem %s7, 360
        %v3897 = vld [vmem:[%s3896] sm:$0xff]
        %v3898 = vld [vmem:[%s3896 + $0x8] sm:$0xff]
        %v3899 = vld [vmem:[%s3896 + $0x10] sm:$0xff]
        %v3900 = vld [vmem:[%s3896 + $0x18] sm:$0xff]
        %v3901 = vld [vmem:[%s3896 + $0x20] sm:$0xf]
        %v3902 = vrot.slane %v3147, 1
        %v3903 = vsel %vm3163, %v3902, 0
        %v3906 = vsel %vm3166, %v3901, 0
        %3908 = vmatprep.subr.mxu0 0.0
        %3909 = vmatpush1.msra.mxu0 0.0
        %3910 = vmatprep.subr.mxu0 0.0
        %3911 = vmatpush1.msra.mxu0 0.0
        %3912 = vmatprep.subr.mxu0 0.0
        %3913 = vmatpush1.msra.mxu0 0.0
        %3914 = vmatprep.subr.mxu0 0.0
        %3915 = vmatpush1.msra.mxu0 0.0
        %3916 = vmatprep.subr.mxu0 0.0
        %3917 = vmatpush1.msra.mxu0 0.0
        %3918 = vmatprep.subr.mxu0 0.0
        %3919 = vmatpush1.msra.mxu0 0.0
        %3920 = vmatprep.subr.mxu0 0.0
        %3921 = vmatpush1.msra.mxu0 0.0
        %3922 = vmatprep.subr.mxu0 0.0
        %3923 = vmatpush1.msra.mxu0 0.0
        %3924 = vmatprep.subr.mxu0 0.0
        %3925 = vmatpush1.msra.mxu0 0.0
        %3926 = vmatprep.subr.mxu0 0.0
        %3927 = vmatpush1.msra.mxu0 0.0
        %3928 = vmatprep.subr.mxu0 0.0
        %3929 = vmatpush1.msra.mxu0 0.0
        %3930 = vmatprep.subr.mxu0 0.0
        %3931 = vmatpush1.msra.mxu0 %v3906
        %3932 = vmatprep.subr.mxu0 0.0
        %3933 = vmatpush1.msra.mxu0 %v3900
        %3934 = vmatprep.subr.mxu0 0.0
        %3935 = vmatpush1.msra.mxu0 %v3899
        %3936 = vmatprep.subr.mxu0 0.0
        %3937 = vmatpush1.msra.mxu0 %v3898
        %3938 = vmatprep.subr.mxu0 0.0
        %3939 = vmatpush1.msra.mxu0 %v3897
        %3940 = vmatprep.subr.mxu0 0.0
        %3941 = vmatpush2.msra.mxu0 0.0
        %3942 = vmatprep.subr.mxu0 0.0
        %3943 = vmatpush2.msra.mxu0 0.0
        %3944 = vmatprep.subr.mxu0 0.0
        %3945 = vmatpush2.msra.mxu0 0.0
        %3946 = vmatprep.subr.mxu0 0.0
        %3947 = vmatpush2.msra.mxu0 0.0
        %3948 = vmatprep.subr.mxu0 0.0
        %3949 = vmatpush2.msra.mxu0 0.0
        %3950 = vmatprep.subr.mxu0 0.0
        %3951 = vmatpush2.msra.mxu0 0.0
        %3952 = vmatprep.subr.mxu0 0.0
        %3953 = vmatpush2.msra.mxu0 0.0
        %3954 = vmatprep.subr.mxu0 0.0
        %3955 = vmatpush2.msra.mxu0 0.0
        %3956 = vmatprep.subr.mxu0 0.0
        %3957 = vmatpush2.msra.mxu0 0.0
        %3958 = vmatprep.subr.mxu0 0.0
        %3959 = vmatpush2.msra.mxu0 0.0
        %3960 = vmatprep.subr.mxu0 0.0
        %3961 = vmatpush2.msra.mxu0 0.0
        %3962 = vmatprep.subr.mxu0 0.0
        %3963 = vmatpush2.msra.mxu0 0.0
        %3964 = vmatprep.subr.mxu0 0.0
        %3965 = vmatpush2.msra.mxu0 0.0
        %3966 = vmatprep.subr.mxu0 0.0
        %3967 = vmatpush2.msra.mxu0 0.0
        %3968 = vmatprep.subr.mxu0 0.0
        %3969 = vmatpush2.msra.mxu0 0.0
        %3970 = vmatprep.subr.mxu0 0.0
        %3971 = vmatpush2.msra.mxu0 0.0
        %3972 = vmatprep.mubr.f32.mxu0 0.0
        %3973 = vmatmul.mubr.f32.gmra.mxu0 %v3903
        %v3974 = vpop.f32.mrf.mxu0
        %v3975 = vadd.f32 0.0, %v3974
        %v3976 = vpop.f32.mrf.mxu0
        %3977 = vdwg.mxu0
        %v3978 = vadd.f32 %v3895, %v3975
        %s3979 = scalar_lea.vmem %s7, 400
        %v3980 = vld [vmem:[%s3979] sm:$0xff]
        %v3981 = vld [vmem:[%s3979 + $0x8] sm:$0xff]
        %v3982 = vld [vmem:[%s3979 + $0x10] sm:$0xff]
        %v3983 = vld [vmem:[%s3979 + $0x18] sm:$0xff]
        %v3984 = vld [vmem:[%s3979 + $0x20] sm:$0xf]
        %v3985 = vrot.slane %v3147, 2
        %v3986 = vsel %vm3163, %v3985, 0
        %v3989 = vsel %vm3166, %v3984, 0
        %3991 = vmatprep.subr.mxu0 0.0
        %3992 = vmatpush1.msra.mxu0 0.0
        %3993 = vmatprep.subr.mxu0 0.0
        %3994 = vmatpush1.msra.mxu0 0.0
        %3995 = vmatprep.subr.mxu0 0.0
        %3996 = vmatpush1.msra.mxu0 0.0
        %3997 = vmatprep.subr.mxu0 0.0
        %3998 = vmatpush1.msra.mxu0 0.0
        %3999 = vmatprep.subr.mxu0 0.0
        %4000 = vmatpush1.msra.mxu0 0.0
        %4001 = vmatprep.subr.mxu0 0.0
        %4002 = vmatpush1.msra.mxu0 0.0
        %4003 = vmatprep.subr.mxu0 0.0
        %4004 = vmatpush1.msra.mxu0 0.0
        %4005 = vmatprep.subr.mxu0 0.0
        %4006 = vmatpush1.msra.mxu0 0.0
        %4007 = vmatprep.subr.mxu0 0.0
        %4008 = vmatpush1.msra.mxu0 0.0
        %4009 = vmatprep.subr.mxu0 0.0
        %4010 = vmatpush1.msra.mxu0 0.0
        %4011 = vmatprep.subr.mxu0 0.0
        %4012 = vmatpush1.msra.mxu0 0.0
        %4013 = vmatprep.subr.mxu0 0.0
        %4014 = vmatpush1.msra.mxu0 %v3989
        %4015 = vmatprep.subr.mxu0 0.0
        %4016 = vmatpush1.msra.mxu0 %v3983
        %4017 = vmatprep.subr.mxu0 0.0
        %4018 = vmatpush1.msra.mxu0 %v3982
        %4019 = vmatprep.subr.mxu0 0.0
        %4020 = vmatpush1.msra.mxu0 %v3981
        %4021 = vmatprep.subr.mxu0 0.0
        %4022 = vmatpush1.msra.mxu0 %v3980
        %4023 = vmatprep.subr.mxu0 0.0
        %4024 = vmatpush2.msra.mxu0 0.0
        %4025 = vmatprep.subr.mxu0 0.0
        %4026 = vmatpush2.msra.mxu0 0.0
        %4027 = vmatprep.subr.mxu0 0.0
        %4028 = vmatpush2.msra.mxu0 0.0
        %4029 = vmatprep.subr.mxu0 0.0
        %4030 = vmatpush2.msra.mxu0 0.0
        %4031 = vmatprep.subr.mxu0 0.0
        %4032 = vmatpush2.msra.mxu0 0.0
        %4033 = vmatprep.subr.mxu0 0.0
        %4034 = vmatpush2.msra.mxu0 0.0
        %4035 = vmatprep.subr.mxu0 0.0
        %4036 = vmatpush2.msra.mxu0 0.0
        %4037 = vmatprep.subr.mxu0 0.0
        %4038 = vmatpush2.msra.mxu0 0.0
        %4039 = vmatprep.subr.mxu0 0.0
        %4040 = vmatpush2.msra.mxu0 0.0
        %4041 = vmatprep.subr.mxu0 0.0
        %4042 = vmatpush2.msra.mxu0 0.0
        %4043 = vmatprep.subr.mxu0 0.0
        %4044 = vmatpush2.msra.mxu0 0.0
        %4045 = vmatprep.subr.mxu0 0.0
        %4046 = vmatpush2.msra.mxu0 0.0
        %4047 = vmatprep.subr.mxu0 0.0
        %4048 = vmatpush2.msra.mxu0 0.0
        %4049 = vmatprep.subr.mxu0 0.0
        %4050 = vmatpush2.msra.mxu0 0.0
        %4051 = vmatprep.subr.mxu0 0.0
        %4052 = vmatpush2.msra.mxu0 0.0
        %4053 = vmatprep.subr.mxu0 0.0
        %4054 = vmatpush2.msra.mxu0 0.0
        %4055 = vmatprep.mubr.f32.mxu0 0.0
        %4056 = vmatmul.mubr.f32.gmra.mxu0 %v3986
        %v4057 = vpop.f32.mrf.mxu0
        %v4058 = vadd.f32 0.0, %v4057
        %v4059 = vpop.f32.mrf.mxu0
        %4060 = vdwg.mxu0
        %v4061 = vadd.f32 %v3978, %v4058
        %s4062 = scalar_lea.vmem %s7, 440
        %v4063 = vld [vmem:[%s4062] sm:$0xff]
        %v4064 = vld [vmem:[%s4062 + $0x8] sm:$0xff]
        %v4065 = vld [vmem:[%s4062 + $0x10] sm:$0xff]
        %v4066 = vld [vmem:[%s4062 + $0x18] sm:$0xff]
        %v4067 = vld [vmem:[%s4062 + $0x20] sm:$0xf]
        %v4068 = vrot.slane %v3147, 3
        %v4069 = vsel %vm3163, %v4068, 0
        %v4072 = vsel %vm3166, %v4067, 0
        %4074 = vmatprep.subr.mxu0 0.0
        %4075 = vmatpush1.msra.mxu0 0.0
        %4076 = vmatprep.subr.mxu0 0.0
        %4077 = vmatpush1.msra.mxu0 0.0
        %4078 = vmatprep.subr.mxu0 0.0
        %4079 = vmatpush1.msra.mxu0 0.0
        %4080 = vmatprep.subr.mxu0 0.0
        %4081 = vmatpush1.msra.mxu0 0.0
        %4082 = vmatprep.subr.mxu0 0.0
        %4083 = vmatpush1.msra.mxu0 0.0
        %4084 = vmatprep.subr.mxu0 0.0
        %4085 = vmatpush1.msra.mxu0 0.0
        %4086 = vmatprep.subr.mxu0 0.0
        %4087 = vmatpush1.msra.mxu0 0.0
        %4088 = vmatprep.subr.mxu0 0.0
        %4089 = vmatpush1.msra.mxu0 0.0
        %4090 = vmatprep.subr.mxu0 0.0
        %4091 = vmatpush1.msra.mxu0 0.0
        %4092 = vmatprep.subr.mxu0 0.0
        %4093 = vmatpush1.msra.mxu0 0.0
        %4094 = vmatprep.subr.mxu0 0.0
        %4095 = vmatpush1.msra.mxu0 0.0
        %4096 = vmatprep.subr.mxu0 0.0
        %4097 = vmatpush1.msra.mxu0 %v4072
        %4098 = vmatprep.subr.mxu0 0.0
        %4099 = vmatpush1.msra.mxu0 %v4066
        %4100 = vmatprep.subr.mxu0 0.0
        %4101 = vmatpush1.msra.mxu0 %v4065
        %4102 = vmatprep.subr.mxu0 0.0
        %4103 = vmatpush1.msra.mxu0 %v4064
        %4104 = vmatprep.subr.mxu0 0.0
        %4105 = vmatpush1.msra.mxu0 %v4063
        %4106 = vmatprep.subr.mxu0 0.0
        %4107 = vmatpush2.msra.mxu0 0.0
        %4108 = vmatprep.subr.mxu0 0.0
        %4109 = vmatpush2.msra.mxu0 0.0
        %4110 = vmatprep.subr.mxu0 0.0
        %4111 = vmatpush2.msra.mxu0 0.0
        %4112 = vmatprep.subr.mxu0 0.0
        %4113 = vmatpush2.msra.mxu0 0.0
        %4114 = vmatprep.subr.mxu0 0.0
        %4115 = vmatpush2.msra.mxu0 0.0
        %4116 = vmatprep.subr.mxu0 0.0
        %4117 = vmatpush2.msra.mxu0 0.0
        %4118 = vmatprep.subr.mxu0 0.0
        %4119 = vmatpush2.msra.mxu0 0.0
        %4120 = vmatprep.subr.mxu0 0.0
        %4121 = vmatpush2.msra.mxu0 0.0
        %4122 = vmatprep.subr.mxu0 0.0
        %4123 = vmatpush2.msra.mxu0 0.0
        %4124 = vmatprep.subr.mxu0 0.0
        %4125 = vmatpush2.msra.mxu0 0.0
        %4126 = vmatprep.subr.mxu0 0.0
        %4127 = vmatpush2.msra.mxu0 0.0
        %4128 = vmatprep.subr.mxu0 0.0
        %4129 = vmatpush2.msra.mxu0 0.0
        %4130 = vmatprep.subr.mxu0 0.0
        %4131 = vmatpush2.msra.mxu0 0.0
        %4132 = vmatprep.subr.mxu0 0.0
        %4133 = vmatpush2.msra.mxu0 0.0
        %4134 = vmatprep.subr.mxu0 0.0
        %4135 = vmatpush2.msra.mxu0 0.0
        %4136 = vmatprep.subr.mxu0 0.0
        %4137 = vmatpush2.msra.mxu0 0.0
        %4138 = vmatprep.mubr.f32.mxu0 0.0
        %4139 = vmatmul.mubr.f32.gmra.mxu0 %v4069
        %v4140 = vpop.f32.mrf.mxu0
        %v4141 = vadd.f32 0.0, %v4140
        %v4142 = vpop.f32.mrf.mxu0
        %4143 = vdwg.mxu0
        %v4144 = vadd.f32 %v4061, %v4141
        %s4145 = scalar_lea.vmem %s7, 480
        %v4146 = vld [vmem:[%s4145] sm:$0xff]
        %v4147 = vld [vmem:[%s4145 + $0x8] sm:$0xff]
        %v4148 = vld [vmem:[%s4145 + $0x10] sm:$0xff]
        %v4149 = vld [vmem:[%s4145 + $0x18] sm:$0xff]
        %v4150 = vld [vmem:[%s4145 + $0x20] sm:$0xf]
        %v4151 = vrot.slane %v3147, 4
        %v4152 = vsel %vm3163, %v4151, 0
        %v4155 = vsel %vm3166, %v4150, 0
        %4157 = vmatprep.subr.mxu0 0.0
        %4158 = vmatpush1.msra.mxu0 0.0
        %4159 = vmatprep.subr.mxu0 0.0
        %4160 = vmatpush1.msra.mxu0 0.0
        %4161 = vmatprep.subr.mxu0 0.0
        %4162 = vmatpush1.msra.mxu0 0.0
        %4163 = vmatprep.subr.mxu0 0.0
        %4164 = vmatpush1.msra.mxu0 0.0
        %4165 = vmatprep.subr.mxu0 0.0
        %4166 = vmatpush1.msra.mxu0 0.0
        %4167 = vmatprep.subr.mxu0 0.0
        %4168 = vmatpush1.msra.mxu0 0.0
        %4169 = vmatprep.subr.mxu0 0.0
        %4170 = vmatpush1.msra.mxu0 0.0
        %4171 = vmatprep.subr.mxu0 0.0
        %4172 = vmatpush1.msra.mxu0 0.0
        %4173 = vmatprep.subr.mxu0 0.0
        %4174 = vmatpush1.msra.mxu0 0.0
        %4175 = vmatprep.subr.mxu0 0.0
        %4176 = vmatpush1.msra.mxu0 0.0
        %4177 = vmatprep.subr.mxu0 0.0
        %4178 = vmatpush1.msra.mxu0 0.0
        %4179 = vmatprep.subr.mxu0 0.0
        %4180 = vmatpush1.msra.mxu0 %v4155
        %4181 = vmatprep.subr.mxu0 0.0
        %4182 = vmatpush1.msra.mxu0 %v4149
        %4183 = vmatprep.subr.mxu0 0.0
        %4184 = vmatpush1.msra.mxu0 %v4148
        %4185 = vmatprep.subr.mxu0 0.0
        %4186 = vmatpush1.msra.mxu0 %v4147
        %4187 = vmatprep.subr.mxu0 0.0
        %4188 = vmatpush1.msra.mxu0 %v4146
        %4189 = vmatprep.subr.mxu0 0.0
        %4190 = vmatpush2.msra.mxu0 0.0
        %4191 = vmatprep.subr.mxu0 0.0
        %4192 = vmatpush2.msra.mxu0 0.0
        %4193 = vmatprep.subr.mxu0 0.0
        %4194 = vmatpush2.msra.mxu0 0.0
        %4195 = vmatprep.subr.mxu0 0.0
        %4196 = vmatpush2.msra.mxu0 0.0
        %4197 = vmatprep.subr.mxu0 0.0
        %4198 = vmatpush2.msra.mxu0 0.0
        %4199 = vmatprep.subr.mxu0 0.0
        %4200 = vmatpush2.msra.mxu0 0.0
        %4201 = vmatprep.subr.mxu0 0.0
        %4202 = vmatpush2.msra.mxu0 0.0
        %4203 = vmatprep.subr.mxu0 0.0
        %4204 = vmatpush2.msra.mxu0 0.0
        %4205 = vmatprep.subr.mxu0 0.0
        %4206 = vmatpush2.msra.mxu0 0.0
        %4207 = vmatprep.subr.mxu0 0.0
        %4208 = vmatpush2.msra.mxu0 0.0
        %4209 = vmatprep.subr.mxu0 0.0
        %4210 = vmatpush2.msra.mxu0 0.0
        %4211 = vmatprep.subr.mxu0 0.0
        %4212 = vmatpush2.msra.mxu0 0.0
        %4213 = vmatprep.subr.mxu0 0.0
        %4214 = vmatpush2.msra.mxu0 0.0
        %4215 = vmatprep.subr.mxu0 0.0
        %4216 = vmatpush2.msra.mxu0 0.0
        %4217 = vmatprep.subr.mxu0 0.0
        %4218 = vmatpush2.msra.mxu0 0.0
        %4219 = vmatprep.subr.mxu0 0.0
        %4220 = vmatpush2.msra.mxu0 0.0
        %4221 = vmatprep.mubr.f32.mxu0 0.0
        %4222 = vmatmul.mubr.f32.gmra.mxu0 %v4152
        %v4223 = vpop.f32.mrf.mxu0
        %v4224 = vadd.f32 0.0, %v4223
        %v4225 = vpop.f32.mrf.mxu0
        %4226 = vdwg.mxu0
        %v4227 = vadd.f32 %v4144, %v4224
        %s4228 = scalar_lea.vmem %s7, 520
        %v4229 = vld [vmem:[%s4228] sm:$0xff]
        %v4230 = vld [vmem:[%s4228 + $0x8] sm:$0xff]
        %v4231 = vld [vmem:[%s4228 + $0x10] sm:$0xff]
        %v4232 = vld [vmem:[%s4228 + $0x18] sm:$0xff]
        %v4233 = vld [vmem:[%s4228 + $0x20] sm:$0xf]
        %v4234 = vrot.slane %v3147, 5
        %v4235 = vsel %vm3163, %v4234, 0
        %v4238 = vsel %vm3166, %v4233, 0
        %4240 = vmatprep.subr.mxu0 0.0
        %4241 = vmatpush1.msra.mxu0 0.0
        %4242 = vmatprep.subr.mxu0 0.0
        %4243 = vmatpush1.msra.mxu0 0.0
        %4244 = vmatprep.subr.mxu0 0.0
        %4245 = vmatpush1.msra.mxu0 0.0
        %4246 = vmatprep.subr.mxu0 0.0
        %4247 = vmatpush1.msra.mxu0 0.0
        %4248 = vmatprep.subr.mxu0 0.0
        %4249 = vmatpush1.msra.mxu0 0.0
        %4250 = vmatprep.subr.mxu0 0.0
        %4251 = vmatpush1.msra.mxu0 0.0
        %4252 = vmatprep.subr.mxu0 0.0
        %4253 = vmatpush1.msra.mxu0 0.0
        %4254 = vmatprep.subr.mxu0 0.0
        %4255 = vmatpush1.msra.mxu0 0.0
        %4256 = vmatprep.subr.mxu0 0.0
        %4257 = vmatpush1.msra.mxu0 0.0
        %4258 = vmatprep.subr.mxu0 0.0
        %4259 = vmatpush1.msra.mxu0 0.0
        %4260 = vmatprep.subr.mxu0 0.0
        %4261 = vmatpush1.msra.mxu0 0.0
        %4262 = vmatprep.subr.mxu0 0.0
        %4263 = vmatpush1.msra.mxu0 %v4238
        %4264 = vmatprep.subr.mxu0 0.0
        %4265 = vmatpush1.msra.mxu0 %v4232
        %4266 = vmatprep.subr.mxu0 0.0
        %4267 = vmatpush1.msra.mxu0 %v4231
        %4268 = vmatprep.subr.mxu0 0.0
        %4269 = vmatpush1.msra.mxu0 %v4230
        %4270 = vmatprep.subr.mxu0 0.0
        %4271 = vmatpush1.msra.mxu0 %v4229
        %4272 = vmatprep.subr.mxu0 0.0
        %4273 = vmatpush2.msra.mxu0 0.0
        %4274 = vmatprep.subr.mxu0 0.0
        %4275 = vmatpush2.msra.mxu0 0.0
        %4276 = vmatprep.subr.mxu0 0.0
        %4277 = vmatpush2.msra.mxu0 0.0
        %4278 = vmatprep.subr.mxu0 0.0
        %4279 = vmatpush2.msra.mxu0 0.0
        %4280 = vmatprep.subr.mxu0 0.0
        %4281 = vmatpush2.msra.mxu0 0.0
        %4282 = vmatprep.subr.mxu0 0.0
        %4283 = vmatpush2.msra.mxu0 0.0
        %4284 = vmatprep.subr.mxu0 0.0
        %4285 = vmatpush2.msra.mxu0 0.0
        %4286 = vmatprep.subr.mxu0 0.0
        %4287 = vmatpush2.msra.mxu0 0.0
        %4288 = vmatprep.subr.mxu0 0.0
        %4289 = vmatpush2.msra.mxu0 0.0
        %4290 = vmatprep.subr.mxu0 0.0
        %4291 = vmatpush2.msra.mxu0 0.0
        %4292 = vmatprep.subr.mxu0 0.0
        %4293 = vmatpush2.msra.mxu0 0.0
        %4294 = vmatprep.subr.mxu0 0.0
        %4295 = vmatpush2.msra.mxu0 0.0
        %4296 = vmatprep.subr.mxu0 0.0
        %4297 = vmatpush2.msra.mxu0 0.0
        %4298 = vmatprep.subr.mxu0 0.0
        %4299 = vmatpush2.msra.mxu0 0.0
        %4300 = vmatprep.subr.mxu0 0.0
        %4301 = vmatpush2.msra.mxu0 0.0
        %4302 = vmatprep.subr.mxu0 0.0
        %4303 = vmatpush2.msra.mxu0 0.0
        %4304 = vmatprep.mubr.f32.mxu0 0.0
        %4305 = vmatmul.mubr.f32.gmra.mxu0 %v4235
        %v4306 = vpop.f32.mrf.mxu0
        %v4307 = vadd.f32 0.0, %v4306
        %v4308 = vpop.f32.mrf.mxu0
        %4309 = vdwg.mxu0
        %v4310 = vadd.f32 %v4227, %v4307
        %s4311 = scalar_lea.vmem %s7, 560
        %v4312 = vld [vmem:[%s4311] sm:$0xff]
        %v4313 = vld [vmem:[%s4311 + $0x8] sm:$0xff]
        %v4314 = vld [vmem:[%s4311 + $0x10] sm:$0xff]
        %v4315 = vld [vmem:[%s4311 + $0x18] sm:$0xff]
        %v4316 = vld [vmem:[%s4311 + $0x20] sm:$0xf]
        %v4317 = vrot.slane %v3147, 6
        %v4318 = vsel %vm3163, %v4317, 0
        %v4321 = vsel %vm3166, %v4316, 0
        %4323 = vmatprep.subr.mxu0 0.0
        %4324 = vmatpush1.msra.mxu0 0.0
        %4325 = vmatprep.subr.mxu0 0.0
        %4326 = vmatpush1.msra.mxu0 0.0
        %4327 = vmatprep.subr.mxu0 0.0
        %4328 = vmatpush1.msra.mxu0 0.0
        %4329 = vmatprep.subr.mxu0 0.0
        %4330 = vmatpush1.msra.mxu0 0.0
        %4331 = vmatprep.subr.mxu0 0.0
        %4332 = vmatpush1.msra.mxu0 0.0
        %4333 = vmatprep.subr.mxu0 0.0
        %4334 = vmatpush1.msra.mxu0 0.0
        %4335 = vmatprep.subr.mxu0 0.0
        %4336 = vmatpush1.msra.mxu0 0.0
        %4337 = vmatprep.subr.mxu0 0.0
        %4338 = vmatpush1.msra.mxu0 0.0
        %4339 = vmatprep.subr.mxu0 0.0
        %4340 = vmatpush1.msra.mxu0 0.0
        %4341 = vmatprep.subr.mxu0 0.0
        %4342 = vmatpush1.msra.mxu0 0.0
        %4343 = vmatprep.subr.mxu0 0.0
        %4344 = vmatpush1.msra.mxu0 0.0
        %4345 = vmatprep.subr.mxu0 0.0
        %4346 = vmatpush1.msra.mxu0 %v4321
        %4347 = vmatprep.subr.mxu0 0.0
        %4348 = vmatpush1.msra.mxu0 %v4315
        %4349 = vmatprep.subr.mxu0 0.0
        %4350 = vmatpush1.msra.mxu0 %v4314
        %4351 = vmatprep.subr.mxu0 0.0
        %4352 = vmatpush1.msra.mxu0 %v4313
        %4353 = vmatprep.subr.mxu0 0.0
        %4354 = vmatpush1.msra.mxu0 %v4312
        %4355 = vmatprep.subr.mxu0 0.0
        %4356 = vmatpush2.msra.mxu0 0.0
        %4357 = vmatprep.subr.mxu0 0.0
        %4358 = vmatpush2.msra.mxu0 0.0
        %4359 = vmatprep.subr.mxu0 0.0
        %4360 = vmatpush2.msra.mxu0 0.0
        %4361 = vmatprep.subr.mxu0 0.0
        %4362 = vmatpush2.msra.mxu0 0.0
        %4363 = vmatprep.subr.mxu0 0.0
        %4364 = vmatpush2.msra.mxu0 0.0
        %4365 = vmatprep.subr.mxu0 0.0
        %4366 = vmatpush2.msra.mxu0 0.0
        %4367 = vmatprep.subr.mxu0 0.0
        %4368 = vmatpush2.msra.mxu0 0.0
        %4369 = vmatprep.subr.mxu0 0.0
        %4370 = vmatpush2.msra.mxu0 0.0
        %4371 = vmatprep.subr.mxu0 0.0
        %4372 = vmatpush2.msra.mxu0 0.0
        %4373 = vmatprep.subr.mxu0 0.0
        %4374 = vmatpush2.msra.mxu0 0.0
        %4375 = vmatprep.subr.mxu0 0.0
        %4376 = vmatpush2.msra.mxu0 0.0
        %4377 = vmatprep.subr.mxu0 0.0
        %4378 = vmatpush2.msra.mxu0 0.0
        %4379 = vmatprep.subr.mxu0 0.0
        %4380 = vmatpush2.msra.mxu0 0.0
        %4381 = vmatprep.subr.mxu0 0.0
        %4382 = vmatpush2.msra.mxu0 0.0
        %4383 = vmatprep.subr.mxu0 0.0
        %4384 = vmatpush2.msra.mxu0 0.0
        %4385 = vmatprep.subr.mxu0 0.0
        %4386 = vmatpush2.msra.mxu0 0.0
        %4387 = vmatprep.mubr.f32.mxu0 0.0
        %4388 = vmatmul.mubr.f32.gmra.mxu0 %v4318
        %v4389 = vpop.f32.mrf.mxu0
        %v4390 = vadd.f32 0.0, %v4389
        %v4391 = vpop.f32.mrf.mxu0
        %4392 = vdwg.mxu0
        %v4393 = vadd.f32 %v4310, %v4390
        %s4394 = scalar_lea.vmem %s7, 600
        %v4395 = vld [vmem:[%s4394] sm:$0xff]
        %v4396 = vld [vmem:[%s4394 + $0x8] sm:$0xff]
        %v4397 = vld [vmem:[%s4394 + $0x10] sm:$0xff]
        %v4398 = vld [vmem:[%s4394 + $0x18] sm:$0xff]
        %v4399 = vld [vmem:[%s4394 + $0x20] sm:$0xf]
        %v4400 = vrot.slane %v3147, 7
        %v4401 = vsel %vm3163, %v4400, 0
        %v4404 = vsel %vm3166, %v4399, 0
        %4406 = vmatprep.subr.mxu0 0.0
        %4407 = vmatpush1.msra.mxu0 0.0
        %4408 = vmatprep.subr.mxu0 0.0
        %4409 = vmatpush1.msra.mxu0 0.0
        %4410 = vmatprep.subr.mxu0 0.0
        %4411 = vmatpush1.msra.mxu0 0.0
        %4412 = vmatprep.subr.mxu0 0.0
        %4413 = vmatpush1.msra.mxu0 0.0
        %4414 = vmatprep.subr.mxu0 0.0
        %4415 = vmatpush1.msra.mxu0 0.0
        %4416 = vmatprep.subr.mxu0 0.0
        %4417 = vmatpush1.msra.mxu0 0.0
        %4418 = vmatprep.subr.mxu0 0.0
        %4419 = vmatpush1.msra.mxu0 0.0
        %4420 = vmatprep.subr.mxu0 0.0
        %4421 = vmatpush1.msra.mxu0 0.0
        %4422 = vmatprep.subr.mxu0 0.0
        %4423 = vmatpush1.msra.mxu0 0.0
        %4424 = vmatprep.subr.mxu0 0.0
        %4425 = vmatpush1.msra.mxu0 0.0
        %4426 = vmatprep.subr.mxu0 0.0
        %4427 = vmatpush1.msra.mxu0 0.0
        %4428 = vmatprep.subr.mxu0 0.0
        %4429 = vmatpush1.msra.mxu0 %v4404
        %4430 = vmatprep.subr.mxu0 0.0
        %4431 = vmatpush1.msra.mxu0 %v4398
        %4432 = vmatprep.subr.mxu0 0.0
        %4433 = vmatpush1.msra.mxu0 %v4397
        %4434 = vmatprep.subr.mxu0 0.0
        %4435 = vmatpush1.msra.mxu0 %v4396
        %4436 = vmatprep.subr.mxu0 0.0
        %4437 = vmatpush1.msra.mxu0 %v4395
        %4438 = vmatprep.subr.mxu0 0.0
        %4439 = vmatpush2.msra.mxu0 0.0
        %4440 = vmatprep.subr.mxu0 0.0
        %4441 = vmatpush2.msra.mxu0 0.0
        %4442 = vmatprep.subr.mxu0 0.0
        %4443 = vmatpush2.msra.mxu0 0.0
        %4444 = vmatprep.subr.mxu0 0.0
        %4445 = vmatpush2.msra.mxu0 0.0
        %4446 = vmatprep.subr.mxu0 0.0
        %4447 = vmatpush2.msra.mxu0 0.0
        %4448 = vmatprep.subr.mxu0 0.0
        %4449 = vmatpush2.msra.mxu0 0.0
        %4450 = vmatprep.subr.mxu0 0.0
        %4451 = vmatpush2.msra.mxu0 0.0
        %4452 = vmatprep.subr.mxu0 0.0
        %4453 = vmatpush2.msra.mxu0 0.0
        %4454 = vmatprep.subr.mxu0 0.0
        %4455 = vmatpush2.msra.mxu0 0.0
        %4456 = vmatprep.subr.mxu0 0.0
        %4457 = vmatpush2.msra.mxu0 0.0
        %4458 = vmatprep.subr.mxu0 0.0
        %4459 = vmatpush2.msra.mxu0 0.0
        %4460 = vmatprep.subr.mxu0 0.0
        %4461 = vmatpush2.msra.mxu0 0.0
        %4462 = vmatprep.subr.mxu0 0.0
        %4463 = vmatpush2.msra.mxu0 0.0
        %4464 = vmatprep.subr.mxu0 0.0
        %4465 = vmatpush2.msra.mxu0 0.0
        %4466 = vmatprep.subr.mxu0 0.0
        %4467 = vmatpush2.msra.mxu0 0.0
        %4468 = vmatprep.subr.mxu0 0.0
        %4469 = vmatpush2.msra.mxu0 0.0
        %4470 = vmatprep.mubr.f32.mxu0 0.0
        %4471 = vmatmul.mubr.f32.gmra.mxu0 %v4401
        %v4472 = vpop.f32.mrf.mxu0
        %v4473 = vadd.f32 0.0, %v4472
        %v4474 = vpop.f32.mrf.mxu0
        %4475 = vdwg.mxu0
        %v4476 = vadd.f32 %v4393, %v4473
        %v4477 = vld [vmem:[%s8] sm:$0x1]
        %v4478 = vadd.f32 %v4476, %v4477
        %v4479 = vmax.f32 %v4478, 0.0
        %v4480 = vld [vmem:[%s9] sm:$0xff]
        %v4481 = vld [vmem:[%s9 + $0x8] sm:$0xff]
        %v4482 = vld [vmem:[%s9 + $0x10] sm:$0xff]
        %v4483 = vld [vmem:[%s9 + $0x18] sm:$0xff]
        %v4484 = vld [vmem:[%s9 + $0x20] sm:$0xff]
        %v4485 = vld [vmem:[%s9 + $0x28] sm:$0xff]
        %v4486 = vld [vmem:[%s9 + $0x30] sm:$0xff]
        %v4487 = vld [vmem:[%s9 + $0x38] sm:$0xff]
        %v4488 = vld [vmem:[%s9 + $0x40] sm:$0xff]
        %v4489 = vld [vmem:[%s9 + $0x48] sm:$0xff]
        %v4490 = vld [vmem:[%s9 + $0x50] sm:$0xff]
        %v4491 = vld [vmem:[%s9 + $0x58] sm:$0xff]
        %v4492 = vld [vmem:[%s9 + $0x60] sm:$0xff]
        %v4493 = vld [vmem:[%s9 + $0x68] sm:$0xff]
        %v4494 = vld [vmem:[%s9 + $0x70] sm:$0xff]
        %v4495 = vld [vmem:[%s9 + $0x78] sm:$0xff]
        %v4496 = vld [vmem:[%s10] sm:$0x1]
        %4497 = vmatprep.subr.mxu0 0.0
        %4498 = vmatpush1.msra.mxu0 %v4495
        %4499 = vmatprep.subr.mxu0 0.0
        %4500 = vmatpush1.msra.mxu0 %v4494
        %4501 = vmatprep.subr.mxu0 0.0
        %4502 = vmatpush1.msra.mxu0 %v4493
        %4503 = vmatprep.subr.mxu0 0.0
        %4504 = vmatpush1.msra.mxu0 %v4492
        %4505 = vmatprep.subr.mxu0 0.0
        %4506 = vmatpush1.msra.mxu0 %v4491
        %4507 = vmatprep.subr.mxu0 0.0
        %4508 = vmatpush1.msra.mxu0 %v4490
        %4509 = vmatprep.subr.mxu0 0.0
        %4510 = vmatpush1.msra.mxu0 %v4489
        %4511 = vmatprep.subr.mxu0 0.0
        %4512 = vmatpush1.msra.mxu0 %v4488
        %4513 = vmatprep.subr.mxu0 0.0
        %4514 = vmatpush1.msra.mxu0 %v4487
        %4515 = vmatprep.subr.mxu0 0.0
        %4516 = vmatpush1.msra.mxu0 %v4486
        %4517 = vmatprep.subr.mxu0 0.0
        %4518 = vmatpush1.msra.mxu0 %v4485
        %4519 = vmatprep.subr.mxu0 0.0
        %4520 = vmatpush1.msra.mxu0 %v4484
        %4521 = vmatprep.subr.mxu0 0.0
        %4522 = vmatpush1.msra.mxu0 %v4483
        %4523 = vmatprep.subr.mxu0 0.0
        %4524 = vmatpush1.msra.mxu0 %v4482
        %4525 = vmatprep.subr.mxu0 0.0
        %4526 = vmatpush1.msra.mxu0 %v4481
        %4527 = vmatprep.subr.mxu0 0.0
        %4528 = vmatpush1.msra.mxu0 %v4480
        %4529 = vmatprep.subr.mxu0 0.0
        %4530 = vmatpush2.msra.mxu0 0.0
        %4531 = vmatprep.subr.mxu0 0.0
        %4532 = vmatpush2.msra.mxu0 0.0
        %4533 = vmatprep.subr.mxu0 0.0
        %4534 = vmatpush2.msra.mxu0 0.0
        %4535 = vmatprep.subr.mxu0 0.0
        %4536 = vmatpush2.msra.mxu0 0.0
        %4537 = vmatprep.subr.mxu0 0.0
        %4538 = vmatpush2.msra.mxu0 0.0
        %4539 = vmatprep.subr.mxu0 0.0
        %4540 = vmatpush2.msra.mxu0 0.0
        %4541 = vmatprep.subr.mxu0 0.0
        %4542 = vmatpush2.msra.mxu0 0.0
        %4543 = vmatprep.subr.mxu0 0.0
        %4544 = vmatpush2.msra.mxu0 0.0
        %4545 = vmatprep.subr.mxu0 0.0
        %4546 = vmatpush2.msra.mxu0 0.0
        %4547 = vmatprep.subr.mxu0 0.0
        %4548 = vmatpush2.msra.mxu0 0.0
        %4549 = vmatprep.subr.mxu0 0.0
        %4550 = vmatpush2.msra.mxu0 0.0
        %4551 = vmatprep.subr.mxu0 0.0
        %4552 = vmatpush2.msra.mxu0 0.0
        %4553 = vmatprep.subr.mxu0 0.0
        %4554 = vmatpush2.msra.mxu0 0.0
        %4555 = vmatprep.subr.mxu0 0.0
        %4556 = vmatpush2.msra.mxu0 0.0
        %4557 = vmatprep.subr.mxu0 0.0
        %4558 = vmatpush2.msra.mxu0 0.0
        %4559 = vmatprep.subr.mxu0 0.0
        %4560 = vmatpush2.msra.mxu0 0.0
        %4561 = vmatprep.mubr.f32.mxu0 0.0
        %4562 = vmatmul.mubr.f32.gmra.mxu0 %v4479
        %v4563 = vpop.f32.mrf.mxu0
        %v4564 = vadd.f32 %v4496, %v4563
        %v4565 = vpop.f32.mrf.mxu0
        %4566 = vdwg.mxu0
        %v4567 = vmax.f32 %v4564, 0.0
        %v4568 = vld [vmem:[%s11] sm:$0xff]
        %v4569 = vld [vmem:[%s11 + $0x8] sm:$0xff]
        %v4570 = vld [vmem:[%s11 + $0x10] sm:$0xff]
        %v4571 = vld [vmem:[%s11 + $0x18] sm:$0xff]
        %v4572 = vld [vmem:[%s11 + $0x20] sm:$0xff]
        %v4573 = vld [vmem:[%s11 + $0x28] sm:$0xff]
        %v4574 = vld [vmem:[%s11 + $0x30] sm:$0xff]
        %v4575 = vld [vmem:[%s11 + $0x38] sm:$0xff]
        %v4576 = vld [vmem:[%s11 + $0x40] sm:$0xff]
        %v4577 = vld [vmem:[%s11 + $0x48] sm:$0xff]
        %v4578 = vld [vmem:[%s11 + $0x50] sm:$0xff]
        %v4579 = vld [vmem:[%s11 + $0x58] sm:$0xff]
        %v4580 = vld [vmem:[%s11 + $0x60] sm:$0xff]
        %v4581 = vld [vmem:[%s11 + $0x68] sm:$0xff]
        %v4582 = vld [vmem:[%s11 + $0x70] sm:$0xff]
        %v4583 = vld [vmem:[%s11 + $0x78] sm:$0xff]
        %v4584 = vld [vmem:[%s12] sm:$0x1]
        %4585 = vmatprep.subr.mxu0 0.0
        %4586 = vmatpush1.msra.mxu0 %v4583
        %4587 = vmatprep.subr.mxu0 0.0
        %4588 = vmatpush1.msra.mxu0 %v4582
        %4589 = vmatprep.subr.mxu0 0.0
        %4590 = vmatpush1.msra.mxu0 %v4581
        %4591 = vmatprep.subr.mxu0 0.0
        %4592 = vmatpush1.msra.mxu0 %v4580
        %4593 = vmatprep.subr.mxu0 0.0
        %4594 = vmatpush1.msra.mxu0 %v4579
        %4595 = vmatprep.subr.mxu0 0.0
        %4596 = vmatpush1.msra.mxu0 %v4578
        %4597 = vmatprep.subr.mxu0 0.0
        %4598 = vmatpush1.msra.mxu0 %v4577
        %4599 = vmatprep.subr.mxu0 0.0
        %4600 = vmatpush1.msra.mxu0 %v4576
        %4601 = vmatprep.subr.mxu0 0.0
        %4602 = vmatpush1.msra.mxu0 %v4575
        %4603 = vmatprep.subr.mxu0 0.0
        %4604 = vmatpush1.msra.mxu0 %v4574
        %4605 = vmatprep.subr.mxu0 0.0
        %4606 = vmatpush1.msra.mxu0 %v4573
        %4607 = vmatprep.subr.mxu0 0.0
        %4608 = vmatpush1.msra.mxu0 %v4572
        %4609 = vmatprep.subr.mxu0 0.0
        %4610 = vmatpush1.msra.mxu0 %v4571
        %4611 = vmatprep.subr.mxu0 0.0
        %4612 = vmatpush1.msra.mxu0 %v4570
        %4613 = vmatprep.subr.mxu0 0.0
        %4614 = vmatpush1.msra.mxu0 %v4569
        %4615 = vmatprep.subr.mxu0 0.0
        %4616 = vmatpush1.msra.mxu0 %v4568
        %4617 = vmatprep.subr.mxu0 0.0
        %4618 = vmatpush2.msra.mxu0 0.0
        %4619 = vmatprep.subr.mxu0 0.0
        %4620 = vmatpush2.msra.mxu0 0.0
        %4621 = vmatprep.subr.mxu0 0.0
        %4622 = vmatpush2.msra.mxu0 0.0
        %4623 = vmatprep.subr.mxu0 0.0
        %4624 = vmatpush2.msra.mxu0 0.0
        %4625 = vmatprep.subr.mxu0 0.0
        %4626 = vmatpush2.msra.mxu0 0.0
        %4627 = vmatprep.subr.mxu0 0.0
        %4628 = vmatpush2.msra.mxu0 0.0
        %4629 = vmatprep.subr.mxu0 0.0
        %4630 = vmatpush2.msra.mxu0 0.0
        %4631 = vmatprep.subr.mxu0 0.0
        %4632 = vmatpush2.msra.mxu0 0.0
        %4633 = vmatprep.subr.mxu0 0.0
        %4634 = vmatpush2.msra.mxu0 0.0
        %4635 = vmatprep.subr.mxu0 0.0
        %4636 = vmatpush2.msra.mxu0 0.0
        %4637 = vmatprep.subr.mxu0 0.0
        %4638 = vmatpush2.msra.mxu0 0.0
        %4639 = vmatprep.subr.mxu0 0.0
        %4640 = vmatpush2.msra.mxu0 0.0
        %4641 = vmatprep.subr.mxu0 0.0
        %4642 = vmatpush2.msra.mxu0 0.0
        %4643 = vmatprep.subr.mxu0 0.0
        %4644 = vmatpush2.msra.mxu0 0.0
        %4645 = vmatprep.subr.mxu0 0.0
        %4646 = vmatpush2.msra.mxu0 0.0
        %4647 = vmatprep.subr.mxu0 0.0
        %4648 = vmatpush2.msra.mxu0 0.0
        %4649 = vmatprep.mubr.f32.mxu0 0.0
        %4650 = vmatmul.mubr.f32.gmra.mxu0 %v4567
        %v4651 = vpop.f32.mrf.mxu0
        %v4652 = vadd.f32 %v4584, %v4651
        %v4653 = vpop.f32.mrf.mxu0
        %4654 = vdwg.mxu0
        %4655 = vst [vmem:[%s430] sm:$0x1] %v4652
        %s4656 = sand.u32 %s313, 1
        %s4657 = scalar_lea.sflag [#allocation3], %s4656
        %s4658 = sand.u32 %s313, 1
        %s4659 = scalar_lea.vmem [#allocation2], %s4658
        // Predicated region
        $region73: #{net_forward.1} parent=71 // pred_check
          %p4660 = pneg %p323
        $region74: #{net_forward.1} parent=71 // pred_check_branch
          %4662 = sbr.rel (%p4660) target = $region76
        $region75: #{net_forward.1} parent=71 // pred_region
          %s4664 = ssub.s32 16, 16
          %4665 = vsyncadd %s4657, %s4664
          %s4666 = smul.addr %s27, 16
          %s4667 = scalar_lea.hbm %s13, %s4666
          %s4669 = sshll.u32 %s4659, 4
          %s4670 = int_to_ptr.vmem [resolvable:$true] %s4669
          %4672 = dma.vmem_to_hbm [thread:$0]  %s4670, 16, %s4667, %s4657
        $region76: #{net_forward.1} parent=71 // pred_fallthru
          _
      $region72: #{net_forward.1} parent=5 // pred_fallthru
        _
      %p4673 = scmp.le.s32.totalorder 2, %s22
      // Predicated region
      $region77: #{net_forward.1} parent=5 // pred_check
        %p4674 = pneg %p4673
      $region78: #{net_forward.1} parent=5 // pred_check_branch
        %4676 = sbr.rel (%p4674) target = $region80
      $region79: #{net_forward.1} parent=5 // pred_region
        %s4677 = ssub.s32 %s22, 2
        // Predicated region
        $region81: #{net_forward.1} parent=79 // pred_check
          %p4678 = pneg %p329
        $region82: #{net_forward.1} parent=79 // pred_check_branch
          %4680 = sbr.rel (%p4678) target = $region84
        $region83: #{net_forward.1} parent=79 // pred_region
          %s4681 = sand.u32 %s314, 1
          %s4682 = scalar_lea.sflag [#allocation3], %s4681
          %s4683 = sand.u32 %s314, 1
          %s4684 = scalar_lea.vmem [#allocation2], %s4683
          %4685 = dma.done %s4682, 16
        $region84: #{net_forward.1} parent=79 // pred_fallthru
          _
      $region80: #{net_forward.1} parent=5 // pred_fallthru
        _
    $region6: #{net_forward.1} parent=1 // loop_footer
      %s26 = sadd.s32 1, %s22
    $region7: #{net_forward.1} parent=1 // loop_footer_branch
      %21 = sbr.rel target = $region3
    $region8: #{net_forward.1} parent=1 // loop_exit
      _
    %4686 = vsyncpa [#allocation3], 1
    %s4687 = scalar_lea.sflag [#allocation3], 1
    %4688 = vsyncpa %s4687, 1

</llo_original>
